<compile_context>
chip_gen: v6e
topology: v6e:2x2x1
jax: 0.10.0
libtpu: 0.0.40
codegen_flags: <defaults>
</compile_context>

<pallas_src>
import numpy as np
import jax
import jax.numpy as jnp
from jax import lax
from jax.experimental import pallas as pl
from jax.experimental.pallas import tpu as pltpu


# ----------------------------------------------------------------------------
# small helpers
# ----------------------------------------------------------------------------
def _physical_vmem_bytes():
    try:
        return int(pltpu.get_tpu_info().vmem_capacity_bytes)
    except Exception:
        return 64 * 1024 * 1024


def _vmem_limit(entries, scratch_bytes=0):
    """Per-call scoped-VMEM limit derived from the actual buffer sizes."""
    need = scratch_bytes
    for shape, dtype in entries:
        need += int(np.prod(shape)) * jnp.dtype(dtype).itemsize
    cap = (_physical_vmem_bytes() * 3) // 4        # headroom on v7x's 64 MiB
    return int(min(cap, max(16 * 1024 * 1024, 4 * need)))


def _row_start(t, b):
    r = t * b
    if b % 8 == 0:
        r = pl.multiple_of(r, 8)
    return r


# ----------------------------------------------------------------------------
# Kernel 1: bidirectional encoder LSTM, fwd and bwd fused into one serial loop
# ----------------------------------------------------------------------------
def _encoder_kernel(xflat_ref, lens_ref, wi_ref, wh_ref, b_ref,
                    out_f_ref, out_b_ref, hN_ref, cN_ref, gxf_ref, gxb_ref):
    T, B, H = out_f_ref.shape
    H4 = 4 * H

    # Hoisted input-gate matmul (bf16 x bf16 -> f32), both directions at once,
    # bias folded in; the recurrence only does the block-diagonal h @ W_hh.
    gx = (jnp.dot(xflat_ref[...], wi_ref[...], preferred_element_type=jnp.float32)
          + b_ref[...])                                   # (T*B, 8H)
    gxf_ref[...] = gx[:, :H4]
    gxb_ref[...] = gx[:, H4:]

    wh = wh_ref[...]          # (2H, 8H) block-diagonal [fwd | bwd]
    lens = lens_ref[...]      # (B, 1) int32, hoisted once (no per-step mask loads)

    def cell(g, c):
        i = jax.nn.sigmoid(g[:, 0:H])
        f = jax.nn.sigmoid(g[:, H:2 * H])
        gg = jnp.tanh(g[:, 2 * H:3 * H])
        o = jax.nn.sigmoid(g[:, 3 * H:4 * H])
        c_new = f * c + i * gg
        return o * jnp.tanh(c_new), c_new

    z = jnp.zeros((B, H), jnp.float32)

    # Fused recurrence: fwd step t=s and bwd step t=T-1-s share one MXU issue;
    # halves the number of serial iterations (2T -> T).
    def body(s, carry):
        h_f, c_f, h_b, c_b = carry
        t_b = T - 1 - s
        gx_f = gxf_ref[pl.ds(_row_start(s, B), B), :]
        gx_b = gxb_ref[pl.ds(_row_start(t_b, B), B), :]
        g = (jnp.concatenate([gx_f, gx_b], axis=1)
             + jnp.dot(jnp.concatenate([h_f, h_b], axis=1), wh,
                       preferred_element_type=jnp.float32))          # (B, 8H)
        hf_n, cf_n = cell(g[:, :H4], c_f)
        hb_n, cb_n = cell(g[:, H4:], c_b)
        m_f = (lens > s).astype(jnp.float32)          # 1 while t < src_len
        m_b = (lens > t_b).astype(jnp.float32)
        h_f = h_f + m_f * (hf_n - h_f)                # freeze state past sentence end
        c_f = c_f + m_f * (cf_n - c_f)
        h_b = h_b + m_b * (hb_n - h_b)
        c_b = c_b + m_b * (cb_n - c_b)
        out_f_ref[s] = m_f * h_f                      # pad_packed_sequence zero-pads tail
        out_b_ref[t_b] = m_b * h_b
        return h_f, c_f, h_b, c_b

    unroll = True if T <= 16 else 2                   # partial unroll at production lengths
    h_f, c_f, h_b, c_b = lax.fori_loop(0, T, body, (z, z, z, z), unroll=unroll)
    hN_ref[0] = h_f
    hN_ref[1] = h_b
    cN_ref[0] = c_f
    cN_ref[1] = c_b


def encoder_lstm(x_flat, lens, wi_enc, wh_blk, b_enc):
    TB, _ = x_flat.shape
    B = lens.shape[0]
    T = TB // B
    H = wh_blk.shape[0] // 2
    vmem = pl.BlockSpec(memory_space=pltpu.MemorySpace.VMEM)
    scratch = 2 * TB * 4 * H * 4
    limit = _vmem_limit([(x_flat.shape, x_flat.dtype), (wi_enc.shape, wi_enc.dtype),
                         (wh_blk.shape, wh_blk.dtype), ((T, B, H), jnp.float32),
                         ((T, B, H), jnp.float32)], scratch_bytes=scratch)
    return pl.pallas_call(
        _encoder_kernel,
        out_shape=(jax.ShapeDtypeStruct((T, B, H), jnp.float32),
                   jax.ShapeDtypeStruct((T, B, H), jnp.float32),
                   jax.ShapeDtypeStruct((2, B, H), jnp.float32),
                   jax.ShapeDtypeStruct((2, B, H), jnp.float32)),
        in_specs=[vmem] * 5,
        out_specs=(vmem, vmem, vmem, vmem),
        scratch_shapes=[pltpu.VMEM((TB, 4 * H), jnp.float32),
                        pltpu.VMEM((TB, 4 * H), jnp.float32)],
        compiler_params=pltpu.CompilerParams(vmem_limit_bytes=limit),
    )(x_flat, lens, wi_enc, wh_blk, b_enc)


# ----------------------------------------------------------------------------
# Kernel 2: decoder init-projections + attention LSTMCell over target time
# ----------------------------------------------------------------------------
def _decoder_kernel(yflat_ref, outf_ref, outb_ref, hN_ref, cN_ref,
                    wattf_ref, wattb_ref, wiy_ref, bd_ref,
                    woh_ref, whp_ref, wcp_ref, wcomb_ref,
                    out_ref, gy_ref, ehp_ref):
    Td, B, H = out_ref.shape
    S = outf_ref.shape[0]

    # Hoisted Y input-gate matmul (bf16 x bf16 -> f32), bias folded in.
    gy_ref[...] = (jnp.dot(yflat_ref[...], wiy_ref[...],
                           preferred_element_type=jnp.float32) + bd_ref[...])

    # att_projection(enc_hiddens): one flattened matmul per direction (no concat).
    outf = outf_ref[...]
    outb = outb_ref[...]
    ehp_val = (
        jnp.dot(outf.reshape(S * B, H).astype(jnp.bfloat16), wattf_ref[...],
                preferred_element_type=jnp.float32)
        + jnp.dot(outb.reshape(S * B, H).astype(jnp.bfloat16), wattb_ref[...],
                  preferred_element_type=jnp.float32)
    ).reshape(S, B, H)
    ehp_ref[...] = ehp_val

    # Hold the encoder tensors in vregs only when they are small; otherwise
    # re-read them from VMEM each step to stay inside the vreg budget.
    hoist = (S * B * H * 4) <= (48 * 1024)

    woh = woh_ref[...]        # (2H, 4H) fused [W_io ; W_hh]
    wcomb = wcomb_ref[...]    # (3H, H)  fused [W_ch ; W_ca_fwd ; W_ca_bwd]

    # dec_init_state = projections of the concatenated final encoder states.
    h2 = jnp.concatenate([hN_ref[0], hN_ref[1]], axis=1)
    c2 = jnp.concatenate([cN_ref[0], cN_ref[1]], axis=1)
    h0 = jnp.dot(h2, whp_ref[...], preferred_element_type=jnp.float32)
    c0 = jnp.dot(c2, wcp_ref[...], preferred_element_type=jnp.float32)
    o0 = jnp.zeros((B, H), jnp.float32)

    def body(t, carry):
        h, c, o_prev = carry
        # LSTMCell on cat([Y_t, o_prev]); the Y_t part is already in gy, and
        # [o_prev | h] is fused into one MXU issue.
        g = (gy_ref[pl.ds(_row_start(t, B), B), :]
             + jnp.dot(jnp.concatenate([o_prev, h], axis=1), woh,
                       preferred_element_type=jnp.float32))
        i = jax.nn.sigmoid(g[:, 0:H])
        f = jax.nn.sigmoid(g[:, H:2 * H])
        gg = jnp.tanh(g[:, 2 * H:3 * H])
        og = jax.nn.sigmoid(g[:, 3 * H:4 * H])
        c_new = f * c + i * gg
        h_new = og * jnp.tanh(c_new)

        # attention.  NOTE: the reference Decoder.step never applies enc_masks,
        # so attention is intentionally unmasked here as well (verified in spec).
        ehp = ehp_val if hoist else ehp_ref[...]
        enc_f = outf if hoist else outf_ref[...]
        enc_b = outb if hoist else outb_ref[...]
        e_t = jnp.sum(ehp * h_new[None, :, :], axis=-1)              # (S, B)
        e_t = e_t - jnp.max(e_t, axis=0, keepdims=True)
        p = jnp.exp(e_t)
        inv = pl.reciprocal(jnp.sum(p, axis=0, keepdims=True), approx=False)
        alpha = (p * inv)[:, :, None]                                # softmax over src
        a_f = jnp.sum(alpha * enc_f, axis=0)                         # (B, H)
        a_b = jnp.sum(alpha * enc_b, axis=0)

        # combined_output_projection(cat([dec_hidden, a_t])) as one fused matmul.
        v_t = jnp.dot(jnp.concatenate([h_new, a_f, a_b], axis=1), wcomb,
                      preferred_element_type=jnp.float32)
        o_t = jnp.tanh(v_t)                      # dropout == identity (eval mode)
        out_ref[t] = o_t.astype(out_ref.dtype)
        return h_new, c_new, o_t

    unroll = True if Td <= 16 else 2
    lax.fori_loop(0, Td, body, (h0, c0, o0), unroll=unroll)


def decoder_loop(y_flat, out_f, out_b, hN, cN, p):
    TdB = y_flat.shape[0]
    S, B, H = out_f.shape
    Td = TdB // B
    vmem = pl.BlockSpec(memory_space=pltpu.MemorySpace.VMEM)
    scratch = TdB * 4 * H * 4 + S * B * H * 4
    limit = _vmem_limit([(y_flat.shape, y_flat.dtype), (out_f.shape, out_f.dtype),
                         (out_b.shape, out_b.dtype), ((Td, B, H), jnp.bfloat16)],
                        scratch_bytes=scratch)
    return pl.pallas_call(
        _decoder_kernel,
        out_shape=jax.ShapeDtypeStruct((Td, B, H), jnp.bfloat16),
        in_specs=[vmem] * 13,
        out_specs=vmem,
        scratch_shapes=[pltpu.VMEM((TdB, 4 * H), jnp.float32),
                        pltpu.VMEM((S, B, H), jnp.float32)],
        compiler_params=pltpu.CompilerParams(vmem_limit_bytes=limit),
    )(y_flat, out_f, out_b, hN, cN,
      p['watt_f'], p['watt_b'], p['wiy'], p['bd'],
      p['woh'], p['whp'], p['wcp'], p['wcomb'])


# ----------------------------------------------------------------------------
# Kernel 3: V-tiled vocab projection + online LSE + gold gather + masked sum
# ----------------------------------------------------------------------------
def _score_kernel(oflat_ref, wv_ref, gold_ref, tmask_ref, out_ref,
                  m_scr, s_scr, g_scr):
    j = pl.program_id(0)
    nj = pl.num_programs(0)
    TdB = oflat_ref.shape[0]
    tv = wv_ref.shape[1]
    B = out_ref.shape[0]

    @pl.when(j == 0)
    def _():
        m_scr[...] = jnp.full_like(m_scr, -jnp.inf)
        s_scr[...] = jnp.zeros_like(s_scr)
        g_scr[...] = jnp.zeros_like(g_scr)
        out_ref[...] = jnp.zeros_like(out_ref)

    # V-tile of the vocab projection: (TdB, H) x (H, tv), bf16 operands, f32 acc.
    logits = jnp.dot(oflat_ref[...], wv_ref[...], preferred_element_type=jnp.float32)

    # online log-sum-exp accumulator across V tiles
    m_prev = m_scr[...]
    m_new = jnp.maximum(m_prev, jnp.max(logits, axis=-1, keepdims=True))
    s_scr[...] = (s_scr[...] * jnp.exp(m_prev - m_new)
                  + jnp.sum(jnp.exp(logits - m_new), axis=-1, keepdims=True))
    m_scr[...] = m_new

    # gold logit gather via iota compare directly on logits (no (TdB,V) logp).
    vocab_ids = lax.broadcasted_iota(jnp.int32, logits.shape, 1) + j * tv
    g_scr[...] += jnp.sum(jnp.where(vocab_ids == gold_ref[...], logits, 0.0),
                          axis=-1, keepdims=True)

    @pl.when(j == nj - 1)
    def _():
        gold_lp = (g_scr[...] - (m_scr[...] + jnp.log(s_scr[...]))) * tmask_ref[...]
        # per-sentence sum over time as a tiny matmul (rows are ordered t*B + b)
        sel = (lax.broadcasted_iota(jnp.int32, (B, TdB), 1) % B
               == lax.broadcasted_iota(jnp.int32, (B, TdB), 0)).astype(jnp.float32)
        out_ref[...] = jnp.dot(sel, gold_lp, preferred_element_type=jnp.float32)


def _pick_vtile(v):
    for tv in (2048, 1024, 512, 256, 128):
        if v % tv == 0:
            return tv
    return v   # TODO(synk): pad V to a multiple of 128 for irregular vocab sizes.


def score_targets(o_flat, wv, gold_flat, tmask_flat, batch):
    TdB, H = o_flat.shape
    V = wv.shape[1]
    tv = _pick_vtile(V)
    nv = V // tv
    limit = _vmem_limit([(o_flat.shape, o_flat.dtype), ((H, tv), wv.dtype),
                         (gold_flat.shape, gold_flat.dtype),
                         (tmask_flat.shape, tmask_flat.dtype),
                         ((batch, 1), jnp.float32)],
                        scratch_bytes=3 * TdB * 4)
    grid_spec = pltpu.PrefetchScalarGridSpec(
        num_scalar_prefetch=0,
        grid=(nv,),
        in_specs=[pl.BlockSpec((TdB, H), lambda j: (0, 0)),
                  pl.BlockSpec((H, tv), lambda j: (0, j)),
                  pl.BlockSpec((TdB, 1), lambda j: (0, 0)),
                  pl.BlockSpec((TdB, 1), lambda j: (0, 0))],
        out_specs=pl.BlockSpec((batch, 1), lambda j: (0, 0)),
        scratch_shapes=[pltpu.VMEM((TdB, 1), jnp.float32),
                        pltpu.VMEM((TdB, 1), jnp.float32),
                        pltpu.VMEM((TdB, 1), jnp.float32)])
    return pl.pallas_call(
        _score_kernel,
        out_shape=jax.ShapeDtypeStruct((batch, 1), jnp.float32),
        grid_spec=grid_spec,
        compiler_params=pltpu.CompilerParams(
            dimension_semantics=("arbitrary",), vmem_limit_bytes=limit),
    )(o_flat, wv, gold_flat, tmask_flat)


# ----------------------------------------------------------------------------
# Parameter initialization (PyTorch-shaped, then pre-transposed / fused / cast)
# ----------------------------------------------------------------------------
def init_params(key, src_vocab_size, tgt_vocab_size, embed, hidden, pad_idx=0):
    ks = iter(jax.random.split(key, 32))

    def rnd(shape, scale=0.1):
        return (scale * jax.random.normal(next(ks), shape)).astype(jnp.float32)

    H, E = hidden, embed
    bf16 = jnp.bfloat16
    src_emb = rnd((src_vocab_size, E)).at[pad_idx].set(0.0)     # padding_idx row zeroed
    tgt_emb = rnd((tgt_vocab_size, E)).at[pad_idx].set(0.0)

    # encoder bi-LSTM (PyTorch layout W_ih:(4H,in), W_hh:(4H,H), b:(4H,))
    w_ih_f, w_hh_f = rnd((4 * H, E)), rnd((4 * H, H))
    b_f = rnd((4 * H,)) + rnd((4 * H,))
    w_ih_b, w_hh_b = rnd((4 * H, E)), rnd((4 * H, H))
    b_b = rnd((4 * H,)) + rnd((4 * H,))
    # projections (Linear, bias=False): W:(out,in)
    w_hproj, w_cproj = rnd((H, 2 * H)), rnd((H, 2 * H))
    w_att = rnd((H, 2 * H))
    # decoder LSTMCell on input size E+H
    w_ih_d, w_hh_d = rnd((4 * H, E + H)), rnd((4 * H, H))
    b_d = rnd((4 * H,)) + rnd((4 * H,))
    w_comb = rnd((H, 3 * H))
    w_vocab = rnd((tgt_vocab_size, H))

    zero = jnp.zeros((H, 4 * H), jnp.float32)
    wh_blk = jnp.concatenate(
        [jnp.concatenate([w_hh_f.T, zero], axis=1),
         jnp.concatenate([zero, w_hh_b.T], axis=1)], axis=0)    # (2H, 8H) block-diag

    watt = w_att.T                                              # (2H, H)

    return dict(
        src_emb=src_emb, tgt_emb=tgt_emb,
        # encoder: fused bf16 input-gate weight (E, 8H) = [fwd | bwd], f32 fused bias
        wi_enc=jnp.concatenate([w_ih_f.T, w_ih_b.T], axis=1).astype(bf16),
        b_enc=jnp.concatenate([b_f, b_b])[None, :],
        wh_blk=wh_blk,
        # dec-init projections on cat([h_fwd, h_bwd]) (one tiny matmul, kept f32)
        whp=w_hproj.T, wcp=w_cproj.T,
        # attention projection split fwd/bwd (avoids a (S*B, 2H) concat), bf16
        watt_f=watt[:H].astype(bf16), watt_b=watt[H:].astype(bf16),
        # decoder LSTMCell: Y part of W_ih (bf16, hoisted) and fused [W_io ; W_hh]
        wiy=w_ih_d[:, :E].T.astype(bf16), bd=b_d[None, :],
        woh=jnp.concatenate([w_ih_d[:, E:].T, w_hh_d.T], axis=0),   # (2H, 4H)
        # combined-output projection on cat([dec_hidden, a_fwd, a_bwd])
        wcomb=w_comb.T,                                             # (3H, H)
        # vocab projection, bf16 (streamed in V tiles by the score kernel)
        wv=w_vocab.T.astype(bf16),
    )


# ----------------------------------------------------------------------------
# Full NMT.forward (glue around the three kernels)
# ----------------------------------------------------------------------------
def nmt_forward(params, source_padded, source_lengths, target_padded, pad_idx=0):
    T, B0 = source_padded.shape
    E = params['src_emb'].shape[1]
    H = params['whp'].shape[1]

    # pad batch to a multiple of 8 (sublane tile); padded columns have length 0 /
    # all-<pad> targets and are sliced off at the end.
    B = ((B0 + 7) // 8) * 8
    padB = B - B0
    if padB:
        source_padded = jnp.pad(source_padded, ((0, 0), (0, padB)), constant_values=pad_idx)
        target_padded = jnp.pad(target_padded, ((0, 0), (0, padB)), constant_values=pad_idx)
    lens = jnp.asarray(list(source_lengths) + [0] * padB, jnp.int32).reshape(B, 1)

    # ---- encode ----
    X = params['src_emb'][source_padded].astype(jnp.bfloat16)        # (T, B, E)
    out_f, out_b, hN, cN = encoder_lstm(
        X.reshape(T * B, E), lens,
        params['wi_enc'], params['wh_blk'], params['b_enc'])
    # generate_sent_masks() output is never used inside Decoder.step in the
    # reference, so attention stays unmasked downstream too.

    # ---- decode ----
    Yin = params['tgt_emb'][target_padded[:-1]].astype(jnp.bfloat16)  # (Td, B, E)
    Td = Yin.shape[0]
    combined = decoder_loop(Yin.reshape(Td * B, E), out_f, out_b, hN, cN, params)

    # ---- score ----
    gold = target_padded[1:]                                          # (Td, B)
    tmask = (gold != pad_idx).astype(jnp.float32)
    scores = score_targets(combined.reshape(Td * B, H), params['wv'],
                           gold.reshape(Td * B, 1).astype(jnp.int32),
                           tmask.reshape(Td * B, 1), B)
    return scores[:B0, 0]                                             # (B0,)


# ----------------------------------------------------------------------------
# Pure-JAX reference (mirrors the PyTorch math, same bf16 weight quantization)
# ----------------------------------------------------------------------------
def nmt_forward_ref(params, source_padded, source_lengths, target_padded, hidden, pad_idx=0):
    f32, bf16 = jnp.float32, jnp.bfloat16
    H = hidden
    T, B = source_padded.shape
    X = params['src_emb'][source_padded]
    lens = jnp.asarray(source_lengths)

    def bdot(a, w):
        return jnp.dot(a.astype(bf16), w, preferred_element_type=f32)

    gx_all = (bdot(X.reshape(T * B, -1), params['wi_enc'])
              + params['b_enc']).reshape(T, B, 8 * H)
    whf = params['wh_blk'][:H, :4 * H]
    whb = params['wh_blk'][H:, 4 * H:]

    def cell(gpre, h, c, wh):
        g = gpre + h @ wh
        i = jax.nn.sigmoid(g[:, :H]); f = jax.nn.sigmoid(g[:, H:2 * H])
        gg = jnp.tanh(g[:, 2 * H:3 * H]); o = jax.nn.sigmoid(g[:, 3 * H:])
        c2 = f * c + i * gg
        return o * jnp.tanh(c2), c2

    h = jnp.zeros((B, H)); c = jnp.zeros((B, H)); outs_f = []
    for t in range(T):
        m = (t < lens).astype(f32)[:, None]
        hn, cn = cell(gx_all[t, :, :4 * H], h, c, whf)
        h = h + m * (hn - h); c = c + m * (cn - c)
        outs_f.append(m * h)
    hf, cf = h, c
    h = jnp.zeros((B, H)); c = jnp.zeros((B, H)); outs_b = [None] * T
    for t in range(T - 1, -1, -1):
        m = (t < lens).astype(f32)[:, None]
        hn, cn = cell(gx_all[t, :, 4 * H:], h, c, whb)
        h = h + m * (hn - h); c = c + m * (cn - c)
        outs_b[t] = m * h
    hb, cb = h, c

    out_f = jnp.stack(outs_f); out_b = jnp.stack(outs_b)
    h0 = jnp.concatenate([hf, hb], 1) @ params['whp']
    c0 = jnp.concatenate([cf, cb], 1) @ params['wcp']
    ehp = (bdot(out_f.reshape(T * B, H), params['watt_f'])
           + bdot(out_b.reshape(T * B, H), params['watt_b'])).reshape(T, B, H)

    Y = params['tgt_emb'][target_padded[:-1]]
    Td = Y.shape[0]
    gy_all = (bdot(Y.reshape(Td * B, -1), params['wiy'])
              + params['bd']).reshape(Td, B, 4 * H)
    hD, cD, o_prev, outs = h0, c0, jnp.zeros((B, H)), []
    for t in range(Td):
        g = gy_all[t] + jnp.concatenate([o_prev, hD], 1) @ params['woh']
        i = jax.nn.sigmoid(g[:, :H]); f = jax.nn.sigmoid(g[:, H:2 * H])
        gg = jnp.tanh(g[:, 2 * H:3 * H]); og = jax.nn.sigmoid(g[:, 3 * H:])
        cD = f * cD + i * gg; hD = og * jnp.tanh(cD)
        e_t = jnp.einsum('sbh,bh->sb', ehp, hD)
        alpha = jax.nn.softmax(e_t, axis=0)
        a_f = jnp.einsum('sb,sbh->bh', alpha, out_f)
        a_b = jnp.einsum('sb,sbh->bh', alpha, out_b)
        o_t = jnp.tanh(jnp.concatenate([hD, a_f, a_b], 1) @ params['wcomb'])
        outs.append(o_t); o_prev = o_t
    O = jnp.stack(outs)

    logits = bdot(O.reshape(Td * B, H), params['wv']).reshape(Td, B, -1)
    logp = jax.nn.log_softmax(logits, axis=-1)
    gold = target_padded[1:]
    tm = (gold != pad_idx).astype(f32)
    return (jnp.take_along_axis(logp, gold[..., None], axis=-1)[..., 0] * tm).sum(axis=0)


# ----------------------------------------------------------------------------
if __name__ == "__main__":
    EMBED, HIDDEN = 32, 32
    SRC_V, TGT_V = 48, 64
    B, SRC_LEN, TGT_LEN = 4, 10, 9
    PAD, BOS, EOS = 0, 1, 2

    key = jax.random.PRNGKey(0)
    pkey, skey, tkey = jax.random.split(key, 3)
    params = init_params(pkey, SRC_V, TGT_V, EMBED, HIDDEN, pad_idx=PAD)

    # source sentences, sorted longest->shortest (pack_padded_sequence precondition)
    source_lengths = [10, 8, 7, 5]
    src = jax.random.randint(skey, (SRC_LEN, B), 3, SRC_V)
    valid = jnp.arange(SRC_LEN)[:, None] < jnp.asarray(source_lengths)[None, :]
    source_padded = jnp.where(valid, src, PAD).astype(jnp.int32)

    # target sentences wrapped by <s> ... </s>, zero-padded
    tgt_lens = jnp.asarray([9, 8, 7, 6])[None, :]
    tgt_body = jax.random.randint(tkey, (TGT_LEN, B), 3, TGT_V)
    rows = jnp.arange(TGT_LEN)[:, None]
    target_padded = jnp.where(rows == 0, BOS,
                       jnp.where(rows == tgt_lens - 1, EOS,
                         jnp.where(rows < tgt_lens - 1, tgt_body, PAD))).astype(jnp.int32)

    scores = nmt_forward(params, source_padded, source_lengths, target_padded, pad_idx=PAD)
    scores = jax.block_until_ready(scores)

    ref = nmt_forward_ref(params, source_padded, source_lengths, target_padded,
                          HIDDEN, pad_idx=PAD)
    np.testing.assert_allclose(np.asarray(scores), np.asarray(ref), rtol=1e-2, atol=1e-1)

    # TODO(synk): train-mode stochastic dropout and the string-vocab to_input_tensor /
    # beam_search / greedy decoding paths are outside the kernels (eval forward only).
    print("KERNEL_OK")
</pallas_src>

<mosaic_0001>
module attributes {stable_mosaic.version = 11 : i64} {
  func.func @_encoder_kernel(%arg0: memref<80x32xbf16, #tpu.memory_space<vmem>>, %arg1: memref<8x1xi32, #tpu.memory_space<vmem>>, %arg2: memref<32x256xbf16, #tpu.memory_space<vmem>>, %arg3: memref<64x256xf32, #tpu.memory_space<vmem>>, %arg4: memref<1x256xf32, #tpu.memory_space<vmem>>, %arg5: memref<10x8x32xf32, #tpu.memory_space<vmem>>, %arg6: memref<10x8x32xf32, #tpu.memory_space<vmem>>, %arg7: memref<2x8x32xf32, #tpu.memory_space<vmem>>, %arg8: memref<2x8x32xf32, #tpu.memory_space<vmem>>, %arg9: memref<80x128xf32, #tpu.memory_space<vmem>>, %arg10: memref<80x128xf32, #tpu.memory_space<vmem>>) attributes {dimension_semantics = [], scalar_prefetch = 0 : i64, scratch_operands = 2 : i64, tpu.core_type = #tpu.core_type<tc>} {
    %c0 = arith.constant 0 : index
    %c0_0 = arith.constant 0 : index
    %0 = vector.load %arg0[%c0, %c0_0] : memref<80x32xbf16, #tpu.memory_space<vmem>>, vector<80x32xbf16>
    %c0_1 = arith.constant 0 : index
    %c0_2 = arith.constant 0 : index
    %1 = vector.load %arg2[%c0_1, %c0_2] : memref<32x256xbf16, #tpu.memory_space<vmem>>, vector<32x256xbf16>
    %cst = arith.constant dense<0.000000e+00> : vector<80x256xf32>
    %2 = tpu.matmul %0, %1, %cst {dimension_numbers = #tpu.dot_dimension_numbers<[1], [0], [0], [1], [0, 0, 1, 1], [], []>} : vector<80x32xbf16>, vector<32x256xbf16>, vector<80x256xf32> -> vector<80x256xf32>
    %c0_3 = arith.constant 0 : index
    %c0_4 = arith.constant 0 : index
    %3 = vector.load %arg4[%c0_3, %c0_4] : memref<1x256xf32, #tpu.memory_space<vmem>>, vector<1x256xf32>
    %4 = vector.broadcast %3 : vector<1x256xf32> to vector<80x256xf32>
    %5 = arith.addf %2, %4 : vector<80x256xf32>
    %6 = vector.extract_strided_slice %5 {offsets = [0, 0], sizes = [80, 128], strides = [1, 1]} : vector<80x256xf32> to vector<80x128xf32>
    %c0_5 = arith.constant 0 : index
    %c0_6 = arith.constant 0 : index
    %7 = vector.load %arg9[%c0_5, %c0_6] : memref<80x128xf32, #tpu.memory_space<vmem>>, vector<80x128xf32>
    tpu.vector_store %arg9[%c0_5, %c0_6], %6 {strides = array<i32>} : memref<80x128xf32, #tpu.memory_space<vmem>>, vector<80x128xf32>,
    %8 = vector.extract_strided_slice %5 {offsets = [0, 128], sizes = [80, 128], strides = [1, 1]} : vector<80x256xf32> to vector<80x128xf32>
    %c0_7 = arith.constant 0 : index
    %c0_8 = arith.constant 0 : index
    %9 = vector.load %arg10[%c0_7, %c0_8] : memref<80x128xf32, #tpu.memory_space<vmem>>, vector<80x128xf32>
    tpu.vector_store %arg10[%c0_7, %c0_8], %8 {strides = array<i32>} : memref<80x128xf32, #tpu.memory_space<vmem>>, vector<80x128xf32>,
    %c0_9 = arith.constant 0 : index
    %c0_10 = arith.constant 0 : index
    %10 = vector.load %arg3[%c0_9, %c0_10] : memref<64x256xf32, #tpu.memory_space<vmem>>, vector<64x256xf32>
    %c0_11 = arith.constant 0 : index
    %c0_12 = arith.constant 0 : index
    %11 = vector.load %arg1[%c0_11, %c0_12] : memref<8x1xi32, #tpu.memory_space<vmem>>, vector<8x1xi32>
    %cst_13 = arith.constant 0.000000e+00 : f32
    %12 = vector.broadcast %cst_13 : f32 to vector<8x32xf32>
    %c0_i32 = arith.constant 0 : i32
    %c9_i32 = arith.constant 9 : i32
    %13 = arith.subi %c9_i32, %c0_i32 : i32
    %c8_i32 = arith.constant 8 : i32
    %14 = arith.muli %c0_i32, %c8_i32 : i32
    %15 = tpu.assume_multiple %14, 8 : i32
    %16 = arith.index_cast %15 : i32 to index
    %c0_14 = arith.constant 0 : index
    %17 = vector.load %arg9[%16, %c0_14] : memref<80x128xf32, #tpu.memory_space<vmem>>, vector<8x128xf32>
    %c8_i32_15 = arith.constant 8 : i32
    %18 = arith.muli %13, %c8_i32_15 : i32
    %19 = tpu.assume_multiple %18, 8 : i32
    %20 = arith.index_cast %19 : i32 to index
    %c0_16 = arith.constant 0 : index
    %21 = vector.load %arg10[%20, %c0_16] : memref<80x128xf32, #tpu.memory_space<vmem>>, vector<8x128xf32>
    %22 = tpu.concatenate %17, %21 in 1 : vector<8x128xf32>, vector<8x128xf32> -> vector<8x256xf32>
    %23 = tpu.concatenate %12, %12 in 1 : vector<8x32xf32>, vector<8x32xf32> -> vector<8x64xf32>
    %cst_17 = arith.constant dense<0.000000e+00> : vector<8x256xf32>
    %24 = tpu.matmul %23, %10, %cst_17 {dimension_numbers = #tpu.dot_dimension_numbers<[1], [0], [0], [1], [0, 0, 1, 1], [], []>} : vector<8x64xf32>, vector<64x256xf32>, vector<8x256xf32> -> vector<8x256xf32>
    %25 = arith.addf %22, %24 : vector<8x256xf32>
    %26 = vector.extract_strided_slice %25 {offsets = [0, 0], sizes = [8, 128], strides = [1, 1]} : vector<8x256xf32> to vector<8x128xf32>
    %27 = vector.extract_strided_slice %26 {offsets = [0, 0], sizes = [8, 32], strides = [1, 1]} : vector<8x128xf32> to vector<8x32xf32>
    %28 = arith.negf %27 : vector<8x32xf32>
    %29 = math.exp %28 : vector<8x32xf32>
    %cst_18 = arith.constant 1.000000e+00 : f32
    %30 = vector.broadcast %cst_18 : f32 to vector<8x32xf32>
    %31 = arith.addf %30, %29 : vector<8x32xf32>
    %32 = arith.divf %30, %31 : vector<8x32xf32>
    %33 = vector.extract_strided_slice %26 {offsets = [0, 32], sizes = [8, 32], strides = [1, 1]} : vector<8x128xf32> to vector<8x32xf32>
    %34 = arith.negf %33 : vector<8x32xf32>
    %35 = math.exp %34 : vector<8x32xf32>
    %cst_19 = arith.constant 1.000000e+00 : f32
    %36 = vector.broadcast %cst_19 : f32 to vector<8x32xf32>
    %37 = arith.addf %36, %35 : vector<8x32xf32>
    %38 = arith.divf %36, %37 : vector<8x32xf32>
    %39 = vector.extract_strided_slice %26 {offsets = [0, 64], sizes = [8, 32], strides = [1, 1]} : vector<8x128xf32> to vector<8x32xf32>
    %40 = math.tanh %39 : vector<8x32xf32>
    %41 = vector.extract_strided_slice %26 {offsets = [0, 96], sizes = [8, 32], strides = [1, 1]} : vector<8x128xf32> to vector<8x32xf32>
    %42 = arith.negf %41 : vector<8x32xf32>
    %43 = math.exp %42 : vector<8x32xf32>
    %cst_20 = arith.constant 1.000000e+00 : f32
    %44 = vector.broadcast %cst_20 : f32 to vector<8x32xf32>
    %45 = arith.addf %44, %43 : vector<8x32xf32>
    %46 = arith.divf %44, %45 : vector<8x32xf32>
    %47 = arith.mulf %38, %12 : vector<8x32xf32>
    %48 = arith.mulf %32, %40 : vector<8x32xf32>
    %49 = arith.addf %47, %48 : vector<8x32xf32>
    %50 = math.tanh %49 : vector<8x32xf32>
    %51 = arith.mulf %46, %50 : vector<8x32xf32>
    %52 = vector.extract_strided_slice %25 {offsets = [0, 128], sizes = [8, 128], strides = [1, 1]} : vector<8x256xf32> to vector<8x128xf32>
    %53 = vector.extract_strided_slice %52 {offsets = [0, 0], sizes = [8, 32], strides = [1, 1]} : vector<8x128xf32> to vector<8x32xf32>
    %54 = arith.negf %53 : vector<8x32xf32>
    %55 = math.exp %54 : vector<8x32xf32>
    %cst_21 = arith.constant 1.000000e+00 : f32
    %56 = vector.broadcast %cst_21 : f32 to vector<8x32xf32>
    %57 = arith.addf %56, %55 : vector<8x32xf32>
    %58 = arith.divf %56, %57 : vector<8x32xf32>
    %59 = vector.extract_strided_slice %52 {offsets = [0, 32], sizes = [8, 32], strides = [1, 1]} : vector<8x128xf32> to vector<8x32xf32>
    %60 = arith.negf %59 : vector<8x32xf32>
    %61 = math.exp %60 : vector<8x32xf32>
    %cst_22 = arith.constant 1.000000e+00 : f32
    %62 = vector.broadcast %cst_22 : f32 to vector<8x32xf32>
    %63 = arith.addf %62, %61 : vector<8x32xf32>
    %64 = arith.divf %62, %63 : vector<8x32xf32>
    %65 = vector.extract_strided_slice %52 {offsets = [0, 64], sizes = [8, 32], strides = [1, 1]} : vector<8x128xf32> to vector<8x32xf32>
    %66 = math.tanh %65 : vector<8x32xf32>
    %67 = vector.extract_strided_slice %52 {offsets = [0, 96], sizes = [8, 32], strides = [1, 1]} : vector<8x128xf32> to vector<8x32xf32>
    %68 = arith.negf %67 : vector<8x32xf32>
    %69 = math.exp %68 : vector<8x32xf32>
    %cst_23 = arith.constant 1.000000e+00 : f32
    %70 = vector.broadcast %cst_23 : f32 to vector<8x32xf32>
    %71 = arith.addf %70, %69 : vector<8x32xf32>
    %72 = arith.divf %70, %71 : vector<8x32xf32>
    %73 = arith.mulf %64, %12 : vector<8x32xf32>
    %74 = arith.mulf %58, %66 : vector<8x32xf32>
    %75 = arith.addf %73, %74 : vector<8x32xf32>
    %76 = math.tanh %75 : vector<8x32xf32>
    %77 = arith.mulf %72, %76 : vector<8x32xf32>
    %78 = vector.broadcast %c0_i32 : i32 to vector<8x1xi32>
    %79 = arith.cmpi sgt, %11, %78 : vector<8x1xi32>
    %80 = arith.extui %79 : vector<8x1xi1> to vector<8x1xi32>
    %81 = arith.sitofp %80 : vector<8x1xi32> to vector<8x1xf32>
    %82 = vector.broadcast %13 : i32 to vector<8x1xi32>
    %83 = arith.cmpi sgt, %11, %82 : vector<8x1xi32>
    %84 = arith.extui %83 : vector<8x1xi1> to vector<8x1xi32>
    %85 = arith.sitofp %84 : vector<8x1xi32> to vector<8x1xf32>
    %86 = arith.subf %51, %12 : vector<8x32xf32>
    %87 = vector.broadcast %81 : vector<8x1xf32> to vector<8x32xf32>
    %88 = arith.mulf %87, %86 : vector<8x32xf32>
    %89 = arith.addf %12, %88 : vector<8x32xf32>
    %90 = arith.subf %49, %12 : vector<8x32xf32>
    %91 = vector.broadcast %81 : vector<8x1xf32> to vector<8x32xf32>
    %92 = arith.mulf %91, %90 : vector<8x32xf32>
    %93 = arith.addf %12, %92 : vector<8x32xf32>
    %94 = arith.subf %77, %12 : vector<8x32xf32>
    %95 = vector.broadcast %85 : vector<8x1xf32> to vector<8x32xf32>
    %96 = arith.mulf %95, %94 : vector<8x32xf32>
    %97 = arith.addf %12, %96 : vector<8x32xf32>
    %98 = arith.subf %75, %12 : vector<8x32xf32>
    %99 = vector.broadcast %85 : vector<8x1xf32> to vector<8x32xf32>
    %100 = arith.mulf %99, %98 : vector<8x32xf32>
    %101 = arith.addf %12, %100 : vector<8x32xf32>
    %102 = vector.broadcast %81 : vector<8x1xf32> to vector<8x32xf32>
    %103 = arith.mulf %102, %89 : vector<8x32xf32>
    %104 = arith.index_cast %c0_i32 : i32 to index
    %c0_24 = arith.constant 0 : index
    %c0_25 = arith.constant 0 : index
    %105 = vector.load %arg5[%104, %c0_24, %c0_25] : memref<10x8x32xf32, #tpu.memory_space<vmem>>, vector<1x8x32xf32>
    %106 = vector.shape_cast %105 : vector<1x8x32xf32> to vector<8x32xf32>
    %107 = vector.shape_cast %103 : vector<8x32xf32> to vector<1x8x32xf32>
    tpu.vector_store %arg5[%104, %c0_24, %c0_25], %107 {strides = array<i32>} : memref<10x8x32xf32, #tpu.memory_space<vmem>>, vector<1x8x32xf32>,
    %108 = vector.broadcast %85 : vector<8x1xf32> to vector<8x32xf32>
    %109 = arith.mulf %108, %97 : vector<8x32xf32>
    %110 = arith.index_cast %13 : i32 to index
    %c0_26 = arith.constant 0 : index
    %c0_27 = arith.constant 0 : index
    %111 = vector.load %arg6[%110, %c0_26, %c0_27] : memref<10x8x32xf32, #tpu.memory_space<vmem>>, vector<1x8x32xf32>
    %112 = vector.shape_cast %111 : vector<1x8x32xf32> to vector<8x32xf32>
    %113 = vector.shape_cast %109 : vector<8x32xf32> to vector<1x8x32xf32>
    tpu.vector_store %arg6[%110, %c0_26, %c0_27], %113 {strides = array<i32>} : memref<10x8x32xf32, #tpu.memory_space<vmem>>, vector<1x8x32xf32>,
    %c1_i32 = arith.constant 1 : i32
    %c9_i32_28 = arith.constant 9 : i32
    %114 = arith.subi %c9_i32_28, %c1_i32 : i32
    %c8_i32_29 = arith.constant 8 : i32
    %115 = arith.muli %c1_i32, %c8_i32_29 : i32
    %116 = tpu.assume_multiple %115, 8 : i32
    %117 = arith.index_cast %116 : i32 to index
    %c0_30 = arith.constant 0 : index
    %118 = vector.load %arg9[%117, %c0_30] : memref<80x128xf32, #tpu.memory_space<vmem>>, vector<8x128xf32>
    %c8_i32_31 = arith.constant 8 : i32
    %119 = arith.muli %114, %c8_i32_31 : i32
    %120 = tpu.assume_multiple %119, 8 : i32
    %121 = arith.index_cast %120 : i32 to index
    %c0_32 = arith.constant 0 : index
    %122 = vector.load %arg10[%121, %c0_32] : memref<80x128xf32, #tpu.memory_space<vmem>>, vector<8x128xf32>
    %123 = tpu.concatenate %118, %122 in 1 : vector<8x128xf32>, vector<8x128xf32> -> vector<8x256xf32>
    %124 = tpu.concatenate %89, %97 in 1 : vector<8x32xf32>, vector<8x32xf32> -> vector<8x64xf32>
    %cst_33 = arith.constant dense<0.000000e+00> : vector<8x256xf32>
    %125 = tpu.matmul %124, %10, %cst_33 {dimension_numbers = #tpu.dot_dimension_numbers<[1], [0], [0], [1], [0, 0, 1, 1], [], []>} : vector<8x64xf32>, vector<64x256xf32>, vector<8x256xf32> -> vector<8x256xf32>
    %126 = arith.addf %123, %125 : vector<8x256xf32>
    %127 = vector.extract_strided_slice %126 {offsets = [0, 0], sizes = [8, 128], strides = [1, 1]} : vector<8x256xf32> to vector<8x128xf32>
    %128 = vector.extract_strided_slice %127 {offsets = [0, 0], sizes = [8, 32], strides = [1, 1]} : vector<8x128xf32> to vector<8x32xf32>
    %129 = arith.negf %128 : vector<8x32xf32>
    %130 = math.exp %129 : vector<8x32xf32>
    %cst_34 = arith.constant 1.000000e+00 : f32
    %131 = vector.broadcast %cst_34 : f32 to vector<8x32xf32>
    %132 = arith.addf %131, %130 : vector<8x32xf32>
    %133 = arith.divf %131, %132 : vector<8x32xf32>
    %134 = vector.extract_strided_slice %127 {offsets = [0, 32], sizes = [8, 32], strides = [1, 1]} : vector<8x128xf32> to vector<8x32xf32>
    %135 = arith.negf %134 : vector<8x32xf32>
    %136 = math.exp %135 : vector<8x32xf32>
    %cst_35 = arith.constant 1.000000e+00 : f32
    %137 = vector.broadcast %cst_35 : f32 to vector<8x32xf32>
    %138 = arith.addf %137, %136 : vector<8x32xf32>
    %139 = arith.divf %137, %138 : vector<8x32xf32>
    %140 = vector.extract_strided_slice %127 {offsets = [0, 64], sizes = [8, 32], strides = [1, 1]} : vector<8x128xf32> to vector<8x32xf32>
    %141 = math.tanh %140 : vector<8x32xf32>
    %142 = vector.extract_strided_slice %127 {offsets = [0, 96], sizes = [8, 32], strides = [1, 1]} : vector<8x128xf32> to vector<8x32xf32>
    %143 = arith.negf %142 : vector<8x32xf32>
    %144 = math.exp %143 : vector<8x32xf32>
    %cst_36 = arith.constant 1.000000e+00 : f32
    %145 = vector.broadcast %cst_36 : f32 to vector<8x32xf32>
    %146 = arith.addf %145, %144 : vector<8x32xf32>
    %147 = arith.divf %145, %146 : vector<8x32xf32>
    %148 = arith.mulf %139, %93 : vector<8x32xf32>
    %149 = arith.mulf %133, %141 : vector<8x32xf32>
    %150 = arith.addf %148, %149 : vector<8x32xf32>
    %151 = math.tanh %150 : vector<8x32xf32>
    %152 = arith.mulf %147, %151 : vector<8x32xf32>
    %153 = vector.extract_strided_slice %126 {offsets = [0, 128], sizes = [8, 128], strides = [1, 1]} : vector<8x256xf32> to vector<8x128xf32>
    %154 = vector.extract_strided_slice %153 {offsets = [0, 0], sizes = [8, 32], strides = [1, 1]} : vector<8x128xf32> to vector<8x32xf32>
    %155 = arith.negf %154 : vector<8x32xf32>
    %156 = math.exp %155 : vector<8x32xf32>
    %cst_37 = arith.constant 1.000000e+00 : f32
    %157 = vector.broadcast %cst_37 : f32 to vector<8x32xf32>
    %158 = arith.addf %157, %156 : vector<8x32xf32>
    %159 = arith.divf %157, %158 : vector<8x32xf32>
    %160 = vector.extract_strided_slice %153 {offsets = [0, 32], sizes = [8, 32], strides = [1, 1]} : vector<8x128xf32> to vector<8x32xf32>
    %161 = arith.negf %160 : vector<8x32xf32>
    %162 = math.exp %161 : vector<8x32xf32>
    %cst_38 = arith.constant 1.000000e+00 : f32
    %163 = vector.broadcast %cst_38 : f32 to vector<8x32xf32>
    %164 = arith.addf %163, %162 : vector<8x32xf32>
    %165 = arith.divf %163, %164 : vector<8x32xf32>
    %166 = vector.extract_strided_slice %153 {offsets = [0, 64], sizes = [8, 32], strides = [1, 1]} : vector<8x128xf32> to vector<8x32xf32>
    %167 = math.tanh %166 : vector<8x32xf32>
    %168 = vector.extract_strided_slice %153 {offsets = [0, 96], sizes = [8, 32], strides = [1, 1]} : vector<8x128xf32> to vector<8x32xf32>
    %169 = arith.negf %168 : vector<8x32xf32>
    %170 = math.exp %169 : vector<8x32xf32>
    %cst_39 = arith.constant 1.000000e+00 : f32
    %171 = vector.broadcast %cst_39 : f32 to vector<8x32xf32>
    %172 = arith.addf %171, %170 : vector<8x32xf32>
    %173 = arith.divf %171, %172 : vector<8x32xf32>
    %174 = arith.mulf %165, %101 : vector<8x32xf32>
    %175 = arith.mulf %159, %167 : vector<8x32xf32>
    %176 = arith.addf %174, %175 : vector<8x32xf32>
    %177 = math.tanh %176 : vector<8x32xf32>
    %178 = arith.mulf %173, %177 : vector<8x32xf32>
    %179 = vector.broadcast %c1_i32 : i32 to vector<8x1xi32>
    %180 = arith.cmpi sgt, %11, %179 : vector<8x1xi32>
    %181 = arith.extui %180 : vector<8x1xi1> to vector<8x1xi32>
    %182 = arith.sitofp %181 : vector<8x1xi32> to vector<8x1xf32>
    %183 = vector.broadcast %114 : i32 to vector<8x1xi32>
    %184 = arith.cmpi sgt, %11, %183 : vector<8x1xi32>
    %185 = arith.extui %184 : vector<8x1xi1> to vector<8x1xi32>
    %186 = arith.sitofp %185 : vector<8x1xi32> to vector<8x1xf32>
    %187 = arith.subf %152, %89 : vector<8x32xf32>
    %188 = vector.broadcast %182 : vector<8x1xf32> to vector<8x32xf32>
    %189 = arith.mulf %188, %187 : vector<8x32xf32>
    %190 = arith.addf %89, %189 : vector<8x32xf32>
    %191 = arith.subf %150, %93 : vector<8x32xf32>
    %192 = vector.broadcast %182 : vector<8x1xf32> to vector<8x32xf32>
    %193 = arith.mulf %192, %191 : vector<8x32xf32>
    %194 = arith.addf %93, %193 : vector<8x32xf32>
    %195 = arith.subf %178, %97 : vector<8x32xf32>
    %196 = vector.broadcast %186 : vector<8x1xf32> to vector<8x32xf32>
    %197 = arith.mulf %196, %195 : vector<8x32xf32>
    %198 = arith.addf %97, %197 : vector<8x32xf32>
    %199 = arith.subf %176, %101 : vector<8x32xf32>
    %200 = vector.broadcast %186 : vector<8x1xf32> to vector<8x32xf32>
    %201 = arith.mulf %200, %199 : vector<8x32xf32>
    %202 = arith.addf %101, %201 : vector<8x32xf32>
    %203 = vector.broadcast %182 : vector<8x1xf32> to vector<8x32xf32>
    %204 = arith.mulf %203, %190 : vector<8x32xf32>
    %205 = arith.index_cast %c1_i32 : i32 to index
    %c0_40 = arith.constant 0 : index
    %c0_41 = arith.constant 0 : index
    %206 = vector.load %arg5[%205, %c0_40, %c0_41] : memref<10x8x32xf32, #tpu.memory_space<vmem>>, vector<1x8x32xf32>
    %207 = vector.shape_cast %206 : vector<1x8x32xf32> to vector<8x32xf32>
    %208 = vector.shape_cast %204 : vector<8x32xf32> to vector<1x8x32xf32>
    tpu.vector_store %arg5[%205, %c0_40, %c0_41], %208 {strides = array<i32>} : memref<10x8x32xf32, #tpu.memory_space<vmem>>, vector<1x8x32xf32>,
    %209 = vector.broadcast %186 : vector<8x1xf32> to vector<8x32xf32>
    %210 = arith.mulf %209, %198 : vector<8x32xf32>
    %211 = arith.index_cast %114 : i32 to index
    %c0_42 = arith.constant 0 : index
    %c0_43 = arith.constant 0 : index
    %212 = vector.load %arg6[%211, %c0_42, %c0_43] : memref<10x8x32xf32, #tpu.memory_space<vmem>>, vector<1x8x32xf32>
    %213 = vector.shape_cast %212 : vector<1x8x32xf32> to vector<8x32xf32>
    %214 = vector.shape_cast %210 : vector<8x32xf32> to vector<1x8x32xf32>
    tpu.vector_store %arg6[%211, %c0_42, %c0_43], %214 {strides = array<i32>} : memref<10x8x32xf32, #tpu.memory_space<vmem>>, vector<1x8x32xf32>,
    %c2_i32 = arith.constant 2 : i32
    %c9_i32_44 = arith.constant 9 : i32
    %215 = arith.subi %c9_i32_44, %c2_i32 : i32
    %c8_i32_45 = arith.constant 8 : i32
    %216 = arith.muli %c2_i32, %c8_i32_45 : i32
    %217 = tpu.assume_multiple %216, 8 : i32
    %218 = arith.index_cast %217 : i32 to index
    %c0_46 = arith.constant 0 : index
    %219 = vector.load %arg9[%218, %c0_46] : memref<80x128xf32, #tpu.memory_space<vmem>>, vector<8x128xf32>
    %c8_i32_47 = arith.constant 8 : i32
    %220 = arith.muli %215, %c8_i32_47 : i32
    %221 = tpu.assume_multiple %220, 8 : i32
    %222 = arith.index_cast %221 : i32 to index
    %c0_48 = arith.constant 0 : index
    %223 = vector.load %arg10[%222, %c0_48] : memref<80x128xf32, #tpu.memory_space<vmem>>, vector<8x128xf32>
    %224 = tpu.concatenate %219, %223 in 1 : vector<8x128xf32>, vector<8x128xf32> -> vector<8x256xf32>
    %225 = tpu.concatenate %190, %198 in 1 : vector<8x32xf32>, vector<8x32xf32> -> vector<8x64xf32>
    %cst_49 = arith.constant dense<0.000000e+00> : vector<8x256xf32>
    %226 = tpu.matmul %225, %10, %cst_49 {dimension_numbers = #tpu.dot_dimension_numbers<[1], [0], [0], [1], [0, 0, 1, 1], [], []>} : vector<8x64xf32>, vector<64x256xf32>, vector<8x256xf32> -> vector<8x256xf32>
    %227 = arith.addf %224, %226 : vector<8x256xf32>
    %228 = vector.extract_strided_slice %227 {offsets = [0, 0], sizes = [8, 128], strides = [1, 1]} : vector<8x256xf32> to vector<8x128xf32>
    %229 = vector.extract_strided_slice %228 {offsets = [0, 0], sizes = [8, 32], strides = [1, 1]} : vector<8x128xf32> to vector<8x32xf32>
    %230 = arith.negf %229 : vector<8x32xf32>
    %231 = math.exp %230 : vector<8x32xf32>
    %cst_50 = arith.constant 1.000000e+00 : f32
    %232 = vector.broadcast %cst_50 : f32 to vector<8x32xf32>
    %233 = arith.addf %232, %231 : vector<8x32xf32>
    %234 = arith.divf %232, %233 : vector<8x32xf32>
    %235 = vector.extract_strided_slice %228 {offsets = [0, 32], sizes = [8, 32], strides = [1, 1]} : vector<8x128xf32> to vector<8x32xf32>
    %236 = arith.negf %235 : vector<8x32xf32>
    %237 = math.exp %236 : vector<8x32xf32>
    %cst_51 = arith.constant 1.000000e+00 : f32
    %238 = vector.broadcast %cst_51 : f32 to vector<8x32xf32>
    %239 = arith.addf %238, %237 : vector<8x32xf32>
    %240 = arith.divf %238, %239 : vector<8x32xf32>
    %241 = vector.extract_strided_slice %228 {offsets = [0, 64], sizes = [8, 32], strides = [1, 1]} : vector<8x128xf32> to vector<8x32xf32>
    %242 = math.tanh %241 : vector<8x32xf32>
    %243 = vector.extract_strided_slice %228 {offsets = [0, 96], sizes = [8, 32], strides = [1, 1]} : vector<8x128xf32> to vector<8x32xf32>
    %244 = arith.negf %243 : vector<8x32xf32>
    %245 = math.exp %244 : vector<8x32xf32>
    %cst_52 = arith.constant 1.000000e+00 : f32
    %246 = vector.broadcast %cst_52 : f32 to vector<8x32xf32>
    %247 = arith.addf %246, %245 : vector<8x32xf32>
    %248 = arith.divf %246, %247 : vector<8x32xf32>
    %249 = arith.mulf %240, %194 : vector<8x32xf32>
    %250 = arith.mulf %234, %242 : vector<8x32xf32>
    %251 = arith.addf %249, %250 : vector<8x32xf32>
    %252 = math.tanh %251 : vector<8x32xf32>
    %253 = arith.mulf %248, %252 : vector<8x32xf32>
    %254 = vector.extract_strided_slice %227 {offsets = [0, 128], sizes = [8, 128], strides = [1, 1]} : vector<8x256xf32> to vector<8x128xf32>
    %255 = vector.extract_strided_slice %254 {offsets = [0, 0], sizes = [8, 32], strides = [1, 1]} : vector<8x128xf32> to vector<8x32xf32>
    %256 = arith.negf %255 : vector<8x32xf32>
    %257 = math.exp %256 : vector<8x32xf32>
    %cst_53 = arith.constant 1.000000e+00 : f32
    %258 = vector.broadcast %cst_53 : f32 to vector<8x32xf32>
    %259 = arith.addf %258, %257 : vector<8x32xf32>
    %260 = arith.divf %258, %259 : vector<8x32xf32>
    %261 = vector.extract_strided_slice %254 {offsets = [0, 32], sizes = [8, 32], strides = [1, 1]} : vector<8x128xf32> to vector<8x32xf32>
    %262 = arith.negf %261 : vector<8x32xf32>
    %263 = math.exp %262 : vector<8x32xf32>
    %cst_54 = arith.constant 1.000000e+00 : f32
    %264 = vector.broadcast %cst_54 : f32 to vector<8x32xf32>
    %265 = arith.addf %264, %263 : vector<8x32xf32>
    %266 = arith.divf %264, %265 : vector<8x32xf32>
    %267 = vector.extract_strided_slice %254 {offsets = [0, 64], sizes = [8, 32], strides = [1, 1]} : vector<8x128xf32> to vector<8x32xf32>
    %268 = math.tanh %267 : vector<8x32xf32>
    %269 = vector.extract_strided_slice %254 {offsets = [0, 96], sizes = [8, 32], strides = [1, 1]} : vector<8x128xf32> to vector<8x32xf32>
    %270 = arith.negf %269 : vector<8x32xf32>
    %271 = math.exp %270 : vector<8x32xf32>
    %cst_55 = arith.constant 1.000000e+00 : f32
    %272 = vector.broadcast %cst_55 : f32 to vector<8x32xf32>
    %273 = arith.addf %272, %271 : vector<8x32xf32>
    %274 = arith.divf %272, %273 : vector<8x32xf32>
    %275 = arith.mulf %266, %202 : vector<8x32xf32>
    %276 = arith.mulf %260, %268 : vector<8x32xf32>
    %277 = arith.addf %275, %276 : vector<8x32xf32>
    %278 = math.tanh %277 : vector<8x32xf32>
    %279 = arith.mulf %274, %278 : vector<8x32xf32>
    %280 = vector.broadcast %c2_i32 : i32 to vector<8x1xi32>
    %281 = arith.cmpi sgt, %11, %280 : vector<8x1xi32>
    %282 = arith.extui %281 : vector<8x1xi1> to vector<8x1xi32>
    %283 = arith.sitofp %282 : vector<8x1xi32> to vector<8x1xf32>
    %284 = vector.broadcast %215 : i32 to vector<8x1xi32>
    %285 = arith.cmpi sgt, %11, %284 : vector<8x1xi32>
    %286 = arith.extui %285 : vector<8x1xi1> to vector<8x1xi32>
    %287 = arith.sitofp %286 : vector<8x1xi32> to vector<8x1xf32>
    %288 = arith.subf %253, %190 : vector<8x32xf32>
    %289 = vector.broadcast %283 : vector<8x1xf32> to vector<8x32xf32>
    %290 = arith.mulf %289, %288 : vector<8x32xf32>
    %291 = arith.addf %190, %290 : vector<8x32xf32>
    %292 = arith.subf %251, %194 : vector<8x32xf32>
    %293 = vector.broadcast %283 : vector<8x1xf32> to vector<8x32xf32>
    %294 = arith.mulf %293, %292 : vector<8x32xf32>
    %295 = arith.addf %194, %294 : vector<8x32xf32>
    %296 = arith.subf %279, %198 : vector<8x32xf32>
    %297 = vector.broadcast %287 : vector<8x1xf32> to vector<8x32xf32>
    %298 = arith.mulf %297, %296 : vector<8x32xf32>
    %299 = arith.addf %198, %298 : vector<8x32xf32>
    %300 = arith.subf %277, %202 : vector<8x32xf32>
    %301 = vector.broadcast %287 : vector<8x1xf32> to vector<8x32xf32>
    %302 = arith.mulf %301, %300 : vector<8x32xf32>
    %303 = arith.addf %202, %302 : vector<8x32xf32>
    %304 = vector.broadcast %283 : vector<8x1xf32> to vector<8x32xf32>
    %305 = arith.mulf %304, %291 : vector<8x32xf32>
    %306 = arith.index_cast %c2_i32 : i32 to index
    %c0_56 = arith.constant 0 : index
    %c0_57 = arith.constant 0 : index
    %307 = vector.load %arg5[%306, %c0_56, %c0_57] : memref<10x8x32xf32, #tpu.memory_space<vmem>>, vector<1x8x32xf32>
    %308 = vector.shape_cast %307 : vector<1x8x32xf32> to vector<8x32xf32>
    %309 = vector.shape_cast %305 : vector<8x32xf32> to vector<1x8x32xf32>
    tpu.vector_store %arg5[%306, %c0_56, %c0_57], %309 {strides = array<i32>} : memref<10x8x32xf32, #tpu.memory_space<vmem>>, vector<1x8x32xf32>,
    %310 = vector.broadcast %287 : vector<8x1xf32> to vector<8x32xf32>
    %311 = arith.mulf %310, %299 : vector<8x32xf32>
    %312 = arith.index_cast %215 : i32 to index
    %c0_58 = arith.constant 0 : index
    %c0_59 = arith.constant 0 : index
    %313 = vector.load %arg6[%312, %c0_58, %c0_59] : memref<10x8x32xf32, #tpu.memory_space<vmem>>, vector<1x8x32xf32>
    %314 = vector.shape_cast %313 : vector<1x8x32xf32> to vector<8x32xf32>
    %315 = vector.shape_cast %311 : vector<8x32xf32> to vector<1x8x32xf32>
    tpu.vector_store %arg6[%312, %c0_58, %c0_59], %315 {strides = array<i32>} : memref<10x8x32xf32, #tpu.memory_space<vmem>>, vector<1x8x32xf32>,
    %c3_i32 = arith.constant 3 : i32
    %c9_i32_60 = arith.constant 9 : i32
    %316 = arith.subi %c9_i32_60, %c3_i32 : i32
    %c8_i32_61 = arith.constant 8 : i32
    %317 = arith.muli %c3_i32, %c8_i32_61 : i32
    %318 = tpu.assume_multiple %317, 8 : i32
    %319 = arith.index_cast %318 : i32 to index
    %c0_62 = arith.constant 0 : index
    %320 = vector.load %arg9[%319, %c0_62] : memref<80x128xf32, #tpu.memory_space<vmem>>, vector<8x128xf32>
    %c8_i32_63 = arith.constant 8 : i32
    %321 = arith.muli %316, %c8_i32_63 : i32
    %322 = tpu.assume_multiple %321, 8 : i32
    %323 = arith.index_cast %322 : i32 to index
    %c0_64 = arith.constant 0 : index
    %324 = vector.load %arg10[%323, %c0_64] : memref<80x128xf32, #tpu.memory_space<vmem>>, vector<8x128xf32>
    %325 = tpu.concatenate %320, %324 in 1 : vector<8x128xf32>, vector<8x128xf32> -> vector<8x256xf32>
    %326 = tpu.concatenate %291, %299 in 1 : vector<8x32xf32>, vector<8x32xf32> -> vector<8x64xf32>
    %cst_65 = arith.constant dense<0.000000e+00> : vector<8x256xf32>
    %327 = tpu.matmul %326, %10, %cst_65 {dimension_numbers = #tpu.dot_dimension_numbers<[1], [0], [0], [1], [0, 0, 1, 1], [], []>} : vector<8x64xf32>, vector<64x256xf32>, vector<8x256xf32> -> vector<8x256xf32>
    %328 = arith.addf %325, %327 : vector<8x256xf32>
    %329 = vector.extract_strided_slice %328 {offsets = [0, 0], sizes = [8, 128], strides = [1, 1]} : vector<8x256xf32> to vector<8x128xf32>
    %330 = vector.extract_strided_slice %329 {offsets = [0, 0], sizes = [8, 32], strides = [1, 1]} : vector<8x128xf32> to vector<8x32xf32>
    %331 = arith.negf %330 : vector<8x32xf32>
    %332 = math.exp %331 : vector<8x32xf32>
    %cst_66 = arith.constant 1.000000e+00 : f32
    %333 = vector.broadcast %cst_66 : f32 to vector<8x32xf32>
    %334 = arith.addf %333, %332 : vector<8x32xf32>
    %335 = arith.divf %333, %334 : vector<8x32xf32>
    %336 = vector.extract_strided_slice %329 {offsets = [0, 32], sizes = [8, 32], strides = [1, 1]} : vector<8x128xf32> to vector<8x32xf32>
    %337 = arith.negf %336 : vector<8x32xf32>
    %338 = math.exp %337 : vector<8x32xf32>
    %cst_67 = arith.constant 1.000000e+00 : f32
    %339 = vector.broadcast %cst_67 : f32 to vector<8x32xf32>
    %340 = arith.addf %339, %338 : vector<8x32xf32>
    %341 = arith.divf %339, %340 : vector<8x32xf32>
    %342 = vector.extract_strided_slice %329 {offsets = [0, 64], sizes = [8, 32], strides = [1, 1]} : vector<8x128xf32> to vector<8x32xf32>
    %343 = math.tanh %342 : vector<8x32xf32>
    %344 = vector.extract_strided_slice %329 {offsets = [0, 96], sizes = [8, 32], strides = [1, 1]} : vector<8x128xf32> to vector<8x32xf32>
    %345 = arith.negf %344 : vector<8x32xf32>
    %346 = math.exp %345 : vector<8x32xf32>
    %cst_68 = arith.constant 1.000000e+00 : f32
    %347 = vector.broadcast %cst_68 : f32 to vector<8x32xf32>
    %348 = arith.addf %347, %346 : vector<8x32xf32>
    %349 = arith.divf %347, %348 : vector<8x32xf32>
    %350 = arith.mulf %341, %295 : vector<8x32xf32>
    %351 = arith.mulf %335, %343 : vector<8x32xf32>
    %352 = arith.addf %350, %351 : vector<8x32xf32>
    %353 = math.tanh %352 : vector<8x32xf32>
    %354 = arith.mulf %349, %353 : vector<8x32xf32>
    %355 = vector.extract_strided_slice %328 {offsets = [0, 128], sizes = [8, 128], strides = [1, 1]} : vector<8x256xf32> to vector<8x128xf32>
    %356 = vector.extract_strided_slice %355 {offsets = [0, 0], sizes = [8, 32], strides = [1, 1]} : vector<8x128xf32> to vector<8x32xf32>
    %357 = arith.negf %356 : vector<8x32xf32>
    %358 = math.exp %357 : vector<8x32xf32>
    %cst_69 = arith.constant 1.000000e+00 : f32
    %359 = vector.broadcast %cst_69 : f32 to vector<8x32xf32>
    %360 = arith.addf %359, %358 : vector<8x32xf32>
    %361 = arith.divf %359, %360 : vector<8x32xf32>
    %362 = vector.extract_strided_slice %355 {offsets = [0, 32], sizes = [8, 32], strides = [1, 1]} : vector<8x128xf32> to vector<8x32xf32>
    %363 = arith.negf %362 : vector<8x32xf32>
    %364 = math.exp %363 : vector<8x32xf32>
    %cst_70 = arith.constant 1.000000e+00 : f32
    %365 = vector.broadcast %cst_70 : f32 to vector<8x32xf32>
    %366 = arith.addf %365, %364 : vector<8x32xf32>
    %367 = arith.divf %365, %366 : vector<8x32xf32>
    %368 = vector.extract_strided_slice %355 {offsets = [0, 64], sizes = [8, 32], strides = [1, 1]} : vector<8x128xf32> to vector<8x32xf32>
    %369 = math.tanh %368 : vector<8x32xf32>
    %370 = vector.extract_strided_slice %355 {offsets = [0, 96], sizes = [8, 32], strides = [1, 1]} : vector<8x128xf32> to vector<8x32xf32>
    %371 = arith.negf %370 : vector<8x32xf32>
    %372 = math.exp %371 : vector<8x32xf32>
    %cst_71 = arith.constant 1.000000e+00 : f32
    %373 = vector.broadcast %cst_71 : f32 to vector<8x32xf32>
    %374 = arith.addf %373, %372 : vector<8x32xf32>
    %375 = arith.divf %373, %374 : vector<8x32xf32>
    %376 = arith.mulf %367, %303 : vector<8x32xf32>
    %377 = arith.mulf %361, %369 : vector<8x32xf32>
    %378 = arith.addf %376, %377 : vector<8x32xf32>
    %379 = math.tanh %378 : vector<8x32xf32>
    %380 = arith.mulf %375, %379 : vector<8x32xf32>
    %381 = vector.broadcast %c3_i32 : i32 to vector<8x1xi32>
    %382 = arith.cmpi sgt, %11, %381 : vector<8x1xi32>
    %383 = arith.extui %382 : vector<8x1xi1> to vector<8x1xi32>
    %384 = arith.sitofp %383 : vector<8x1xi32> to vector<8x1xf32>
    %385 = vector.broadcast %316 : i32 to vector<8x1xi32>
    %386 = arith.cmpi sgt, %11, %385 : vector<8x1xi32>
    %387 = arith.extui %386 : vector<8x1xi1> to vector<8x1xi32>
    %388 = arith.sitofp %387 : vector<8x1xi32> to vector<8x1xf32>
    %389 = arith.subf %354, %291 : vector<8x32xf32>
    %390 = vector.broadcast %384 : vector<8x1xf32> to vector<8x32xf32>
    %391 = arith.mulf %390, %389 : vector<8x32xf32>
    %392 = arith.addf %291, %391 : vector<8x32xf32>
    %393 = arith.subf %352, %295 : vector<8x32xf32>
    %394 = vector.broadcast %384 : vector<8x1xf32> to vector<8x32xf32>
    %395 = arith.mulf %394, %393 : vector<8x32xf32>
    %396 = arith.addf %295, %395 : vector<8x32xf32>
    %397 = arith.subf %380, %299 : vector<8x32xf32>
    %398 = vector.broadcast %388 : vector<8x1xf32> to vector<8x32xf32>
    %399 = arith.mulf %398, %397 : vector<8x32xf32>
    %400 = arith.addf %299, %399 : vector<8x32xf32>
    %401 = arith.subf %378, %303 : vector<8x32xf32>
    %402 = vector.broadcast %388 : vector<8x1xf32> to vector<8x32xf32>
    %403 = arith.mulf %402, %401 : vector<8x32xf32>
    %404 = arith.addf %303, %403 : vector<8x32xf32>
    %405 = vector.broadcast %384 : vector<8x1xf32> to vector<8x32xf32>
    %406 = arith.mulf %405, %392 : vector<8x32xf32>
    %407 = arith.index_cast %c3_i32 : i32 to index
    %c0_72 = arith.constant 0 : index
    %c0_73 = arith.constant 0 : index
    %408 = vector.load %arg5[%407, %c0_72, %c0_73] : memref<10x8x32xf32, #tpu.memory_space<vmem>>, vector<1x8x32xf32>
    %409 = vector.shape_cast %408 : vector<1x8x32xf32> to vector<8x32xf32>
    %410 = vector.shape_cast %406 : vector<8x32xf32> to vector<1x8x32xf32>
    tpu.vector_store %arg5[%407, %c0_72, %c0_73], %410 {strides = array<i32>} : memref<10x8x32xf32, #tpu.memory_space<vmem>>, vector<1x8x32xf32>,
    %411 = vector.broadcast %388 : vector<8x1xf32> to vector<8x32xf32>
    %412 = arith.mulf %411, %400 : vector<8x32xf32>
    %413 = arith.index_cast %316 : i32 to index
    %c0_74 = arith.constant 0 : index
    %c0_75 = arith.constant 0 : index
    %414 = vector.load %arg6[%413, %c0_74, %c0_75] : memref<10x8x32xf32, #tpu.memory_space<vmem>>, vector<1x8x32xf32>
    %415 = vector.shape_cast %414 : vector<1x8x32xf32> to vector<8x32xf32>
    %416 = vector.shape_cast %412 : vector<8x32xf32> to vector<1x8x32xf32>
    tpu.vector_store %arg6[%413, %c0_74, %c0_75], %416 {strides = array<i32>} : memref<10x8x32xf32, #tpu.memory_space<vmem>>, vector<1x8x32xf32>,
    %c4_i32 = arith.constant 4 : i32
    %c9_i32_76 = arith.constant 9 : i32
    %417 = arith.subi %c9_i32_76, %c4_i32 : i32
    %c8_i32_77 = arith.constant 8 : i32
    %418 = arith.muli %c4_i32, %c8_i32_77 : i32
    %419 = tpu.assume_multiple %418, 8 : i32
    %420 = arith.index_cast %419 : i32 to index
    %c0_78 = arith.constant 0 : index
    %421 = vector.load %arg9[%420, %c0_78] : memref<80x128xf32, #tpu.memory_space<vmem>>, vector<8x128xf32>
    %c8_i32_79 = arith.constant 8 : i32
    %422 = arith.muli %417, %c8_i32_79 : i32
    %423 = tpu.assume_multiple %422, 8 : i32
    %424 = arith.index_cast %423 : i32 to index
    %c0_80 = arith.constant 0 : index
    %425 = vector.load %arg10[%424, %c0_80] : memref<80x128xf32, #tpu.memory_space<vmem>>, vector<8x128xf32>
    %426 = tpu.concatenate %421, %425 in 1 : vector<8x128xf32>, vector<8x128xf32> -> vector<8x256xf32>
    %427 = tpu.concatenate %392, %400 in 1 : vector<8x32xf32>, vector<8x32xf32> -> vector<8x64xf32>
    %cst_81 = arith.constant dense<0.000000e+00> : vector<8x256xf32>
    %428 = tpu.matmul %427, %10, %cst_81 {dimension_numbers = #tpu.dot_dimension_numbers<[1], [0], [0], [1], [0, 0, 1, 1], [], []>} : vector<8x64xf32>, vector<64x256xf32>, vector<8x256xf32> -> vector<8x256xf32>
    %429 = arith.addf %426, %428 : vector<8x256xf32>
    %430 = vector.extract_strided_slice %429 {offsets = [0, 0], sizes = [8, 128], strides = [1, 1]} : vector<8x256xf32> to vector<8x128xf32>
    %431 = vector.extract_strided_slice %430 {offsets = [0, 0], sizes = [8, 32], strides = [1, 1]} : vector<8x128xf32> to vector<8x32xf32>
    %432 = arith.negf %431 : vector<8x32xf32>
    %433 = math.exp %432 : vector<8x32xf32>
    %cst_82 = arith.constant 1.000000e+00 : f32
    %434 = vector.broadcast %cst_82 : f32 to vector<8x32xf32>
    %435 = arith.addf %434, %433 : vector<8x32xf32>
    %436 = arith.divf %434, %435 : vector<8x32xf32>
    %437 = vector.extract_strided_slice %430 {offsets = [0, 32], sizes = [8, 32], strides = [1, 1]} : vector<8x128xf32> to vector<8x32xf32>
    %438 = arith.negf %437 : vector<8x32xf32>
    %439 = math.exp %438 : vector<8x32xf32>
    %cst_83 = arith.constant 1.000000e+00 : f32
    %440 = vector.broadcast %cst_83 : f32 to vector<8x32xf32>
    %441 = arith.addf %440, %439 : vector<8x32xf32>
    %442 = arith.divf %440, %441 : vector<8x32xf32>
    %443 = vector.extract_strided_slice %430 {offsets = [0, 64], sizes = [8, 32], strides = [1, 1]} : vector<8x128xf32> to vector<8x32xf32>
    %444 = math.tanh %443 : vector<8x32xf32>
    %445 = vector.extract_strided_slice %430 {offsets = [0, 96], sizes = [8, 32], strides = [1, 1]} : vector<8x128xf32> to vector<8x32xf32>
    %446 = arith.negf %445 : vector<8x32xf32>
    %447 = math.exp %446 : vector<8x32xf32>
    %cst_84 = arith.constant 1.000000e+00 : f32
    %448 = vector.broadcast %cst_84 : f32 to vector<8x32xf32>
    %449 = arith.addf %448, %447 : vector<8x32xf32>
    %450 = arith.divf %448, %449 : vector<8x32xf32>
    %451 = arith.mulf %442, %396 : vector<8x32xf32>
    %452 = arith.mulf %436, %444 : vector<8x32xf32>
    %453 = arith.addf %451, %452 : vector<8x32xf32>
    %454 = math.tanh %453 : vector<8x32xf32>
    %455 = arith.mulf %450, %454 : vector<8x32xf32>
    %456 = vector.extract_strided_slice %429 {offsets = [0, 128], sizes = [8, 128], strides = [1, 1]} : vector<8x256xf32> to vector<8x128xf32>
    %457 = vector.extract_strided_slice %456 {offsets = [0, 0], sizes = [8, 32], strides = [1, 1]} : vector<8x128xf32> to vector<8x32xf32>
    %458 = arith.negf %457 : vector<8x32xf32>
    %459 = math.exp %458 : vector<8x32xf32>
    %cst_85 = arith.constant 1.000000e+00 : f32
    %460 = vector.broadcast %cst_85 : f32 to vector<8x32xf32>
    %461 = arith.addf %460, %459 : vector<8x32xf32>
    %462 = arith.divf %460, %461 : vector<8x32xf32>
    %463 = vector.extract_strided_slice %456 {offsets = [0, 32], sizes = [8, 32], strides = [1, 1]} : vector<8x128xf32> to vector<8x32xf32>
    %464 = arith.negf %463 : vector<8x32xf32>
    %465 = math.exp %464 : vector<8x32xf32>
    %cst_86 = arith.constant 1.000000e+00 : f32
    %466 = vector.broadcast %cst_86 : f32 to vector<8x32xf32>
    %467 = arith.addf %466, %465 : vector<8x32xf32>
    %468 = arith.divf %466, %467 : vector<8x32xf32>
    %469 = vector.extract_strided_slice %456 {offsets = [0, 64], sizes = [8, 32], strides = [1, 1]} : vector<8x128xf32> to vector<8x32xf32>
    %470 = math.tanh %469 : vector<8x32xf32>
    %471 = vector.extract_strided_slice %456 {offsets = [0, 96], sizes = [8, 32], strides = [1, 1]} : vector<8x128xf32> to vector<8x32xf32>
    %472 = arith.negf %471 : vector<8x32xf32>
    %473 = math.exp %472 : vector<8x32xf32>
    %cst_87 = arith.constant 1.000000e+00 : f32
    %474 = vector.broadcast %cst_87 : f32 to vector<8x32xf32>
    %475 = arith.addf %474, %473 : vector<8x32xf32>
    %476 = arith.divf %474, %475 : vector<8x32xf32>
    %477 = arith.mulf %468, %404 : vector<8x32xf32>
    %478 = arith.mulf %462, %470 : vector<8x32xf32>
    %479 = arith.addf %477, %478 : vector<8x32xf32>
    %480 = math.tanh %479 : vector<8x32xf32>
    %481 = arith.mulf %476, %480 : vector<8x32xf32>
    %482 = vector.broadcast %c4_i32 : i32 to vector<8x1xi32>
    %483 = arith.cmpi sgt, %11, %482 : vector<8x1xi32>
    %484 = arith.extui %483 : vector<8x1xi1> to vector<8x1xi32>
    %485 = arith.sitofp %484 : vector<8x1xi32> to vector<8x1xf32>
    %486 = vector.broadcast %417 : i32 to vector<8x1xi32>
    %487 = arith.cmpi sgt, %11, %486 : vector<8x1xi32>
    %488 = arith.extui %487 : vector<8x1xi1> to vector<8x1xi32>
    %489 = arith.sitofp %488 : vector<8x1xi32> to vector<8x1xf32>
    %490 = arith.subf %455, %392 : vector<8x32xf32>
    %491 = vector.broadcast %485 : vector<8x1xf32> to vector<8x32xf32>
    %492 = arith.mulf %491, %490 : vector<8x32xf32>
    %493 = arith.addf %392, %492 : vector<8x32xf32>
    %494 = arith.subf %453, %396 : vector<8x32xf32>
    %495 = vector.broadcast %485 : vector<8x1xf32> to vector<8x32xf32>
    %496 = arith.mulf %495, %494 : vector<8x32xf32>
    %497 = arith.addf %396, %496 : vector<8x32xf32>
    %498 = arith.subf %481, %400 : vector<8x32xf32>
    %499 = vector.broadcast %489 : vector<8x1xf32> to vector<8x32xf32>
    %500 = arith.mulf %499, %498 : vector<8x32xf32>
    %501 = arith.addf %400, %500 : vector<8x32xf32>
    %502 = arith.subf %479, %404 : vector<8x32xf32>
    %503 = vector.broadcast %489 : vector<8x1xf32> to vector<8x32xf32>
    %504 = arith.mulf %503, %502 : vector<8x32xf32>
    %505 = arith.addf %404, %504 : vector<8x32xf32>
    %506 = vector.broadcast %485 : vector<8x1xf32> to vector<8x32xf32>
    %507 = arith.mulf %506, %493 : vector<8x32xf32>
    %508 = arith.index_cast %c4_i32 : i32 to index
    %c0_88 = arith.constant 0 : index
    %c0_89 = arith.constant 0 : index
    %509 = vector.load %arg5[%508, %c0_88, %c0_89] : memref<10x8x32xf32, #tpu.memory_space<vmem>>, vector<1x8x32xf32>
    %510 = vector.shape_cast %509 : vector<1x8x32xf32> to vector<8x32xf32>
    %511 = vector.shape_cast %507 : vector<8x32xf32> to vector<1x8x32xf32>
    tpu.vector_store %arg5[%508, %c0_88, %c0_89], %511 {strides = array<i32>} : memref<10x8x32xf32, #tpu.memory_space<vmem>>, vector<1x8x32xf32>,
    %512 = vector.broadcast %489 : vector<8x1xf32> to vector<8x32xf32>
    %513 = arith.mulf %512, %501 : vector<8x32xf32>
    %514 = arith.index_cast %417 : i32 to index
    %c0_90 = arith.constant 0 : index
    %c0_91 = arith.constant 0 : index
    %515 = vector.load %arg6[%514, %c0_90, %c0_91] : memref<10x8x32xf32, #tpu.memory_space<vmem>>, vector<1x8x32xf32>
    %516 = vector.shape_cast %515 : vector<1x8x32xf32> to vector<8x32xf32>
    %517 = vector.shape_cast %513 : vector<8x32xf32> to vector<1x8x32xf32>
    tpu.vector_store %arg6[%514, %c0_90, %c0_91], %517 {strides = array<i32>} : memref<10x8x32xf32, #tpu.memory_space<vmem>>, vector<1x8x32xf32>,
    %c5_i32 = arith.constant 5 : i32
    %c9_i32_92 = arith.constant 9 : i32
    %518 = arith.subi %c9_i32_92, %c5_i32 : i32
    %c8_i32_93 = arith.constant 8 : i32
    %519 = arith.muli %c5_i32, %c8_i32_93 : i32
    %520 = tpu.assume_multiple %519, 8 : i32
    %521 = arith.index_cast %520 : i32 to index
    %c0_94 = arith.constant 0 : index
    %522 = vector.load %arg9[%521, %c0_94] : memref<80x128xf32, #tpu.memory_space<vmem>>, vector<8x128xf32>
    %c8_i32_95 = arith.constant 8 : i32
    %523 = arith.muli %518, %c8_i32_95 : i32
    %524 = tpu.assume_multiple %523, 8 : i32
    %525 = arith.index_cast %524 : i32 to index
    %c0_96 = arith.constant 0 : index
    %526 = vector.load %arg10[%525, %c0_96] : memref<80x128xf32, #tpu.memory_space<vmem>>, vector<8x128xf32>
    %527 = tpu.concatenate %522, %526 in 1 : vector<8x128xf32>, vector<8x128xf32> -> vector<8x256xf32>
    %528 = tpu.concatenate %493, %501 in 1 : vector<8x32xf32>, vector<8x32xf32> -> vector<8x64xf32>
    %cst_97 = arith.constant dense<0.000000e+00> : vector<8x256xf32>
    %529 = tpu.matmul %528, %10, %cst_97 {dimension_numbers = #tpu.dot_dimension_numbers<[1], [0], [0], [1], [0, 0, 1, 1], [], []>} : vector<8x64xf32>, vector<64x256xf32>, vector<8x256xf32> -> vector<8x256xf32>
    %530 = arith.addf %527, %529 : vector<8x256xf32>
    %531 = vector.extract_strided_slice %530 {offsets = [0, 0], sizes = [8, 128], strides = [1, 1]} : vector<8x256xf32> to vector<8x128xf32>
    %532 = vector.extract_strided_slice %531 {offsets = [0, 0], sizes = [8, 32], strides = [1, 1]} : vector<8x128xf32> to vector<8x32xf32>
    %533 = arith.negf %532 : vector<8x32xf32>
    %534 = math.exp %533 : vector<8x32xf32>
    %cst_98 = arith.constant 1.000000e+00 : f32
    %535 = vector.broadcast %cst_98 : f32 to vector<8x32xf32>
    %536 = arith.addf %535, %534 : vector<8x32xf32>
    %537 = arith.divf %535, %536 : vector<8x32xf32>
    %538 = vector.extract_strided_slice %531 {offsets = [0, 32], sizes = [8, 32], strides = [1, 1]} : vector<8x128xf32> to vector<8x32xf32>
    %539 = arith.negf %538 : vector<8x32xf32>
    %540 = math.exp %539 : vector<8x32xf32>
    %cst_99 = arith.constant 1.000000e+00 : f32
    %541 = vector.broadcast %cst_99 : f32 to vector<8x32xf32>
    %542 = arith.addf %541, %540 : vector<8x32xf32>
    %543 = arith.divf %541, %542 : vector<8x32xf32>
    %544 = vector.extract_strided_slice %531 {offsets = [0, 64], sizes = [8, 32], strides = [1, 1]} : vector<8x128xf32> to vector<8x32xf32>
    %545 = math.tanh %544 : vector<8x32xf32>
    %546 = vector.extract_strided_slice %531 {offsets = [0, 96], sizes = [8, 32], strides = [1, 1]} : vector<8x128xf32> to vector<8x32xf32>
    %547 = arith.negf %546 : vector<8x32xf32>
    %548 = math.exp %547 : vector<8x32xf32>
    %cst_100 = arith.constant 1.000000e+00 : f32
    %549 = vector.broadcast %cst_100 : f32 to vector<8x32xf32>
    %550 = arith.addf %549, %548 : vector<8x32xf32>
    %551 = arith.divf %549, %550 : vector<8x32xf32>
    %552 = arith.mulf %543, %497 : vector<8x32xf32>
    %553 = arith.mulf %537, %545 : vector<8x32xf32>
    %554 = arith.addf %552, %553 : vector<8x32xf32>
    %555 = math.tanh %554 : vector<8x32xf32>
    %556 = arith.mulf %551, %555 : vector<8x32xf32>
    %557 = vector.extract_strided_slice %530 {offsets = [0, 128], sizes = [8, 128], strides = [1, 1]} : vector<8x256xf32> to vector<8x128xf32>
    %558 = vector.extract_strided_slice %557 {offsets = [0, 0], sizes = [8, 32], strides = [1, 1]} : vector<8x128xf32> to vector<8x32xf32>
    %559 = arith.negf %558 : vector<8x32xf32>
    %560 = math.exp %559 : vector<8x32xf32>
    %cst_101 = arith.constant 1.000000e+00 : f32
    %561 = vector.broadcast %cst_101 : f32 to vector<8x32xf32>
    %562 = arith.addf %561, %560 : vector<8x32xf32>
    %563 = arith.divf %561, %562 : vector<8x32xf32>
    %564 = vector.extract_strided_slice %557 {offsets = [0, 32], sizes = [8, 32], strides = [1, 1]} : vector<8x128xf32> to vector<8x32xf32>
    %565 = arith.negf %564 : vector<8x32xf32>
    %566 = math.exp %565 : vector<8x32xf32>
    %cst_102 = arith.constant 1.000000e+00 : f32
    %567 = vector.broadcast %cst_102 : f32 to vector<8x32xf32>
    %568 = arith.addf %567, %566 : vector<8x32xf32>
    %569 = arith.divf %567, %568 : vector<8x32xf32>
    %570 = vector.extract_strided_slice %557 {offsets = [0, 64], sizes = [8, 32], strides = [1, 1]} : vector<8x128xf32> to vector<8x32xf32>
    %571 = math.tanh %570 : vector<8x32xf32>
    %572 = vector.extract_strided_slice %557 {offsets = [0, 96], sizes = [8, 32], strides = [1, 1]} : vector<8x128xf32> to vector<8x32xf32>
    %573 = arith.negf %572 : vector<8x32xf32>
    %574 = math.exp %573 : vector<8x32xf32>
    %cst_103 = arith.constant 1.000000e+00 : f32
    %575 = vector.broadcast %cst_103 : f32 to vector<8x32xf32>
    %576 = arith.addf %575, %574 : vector<8x32xf32>
    %577 = arith.divf %575, %576 : vector<8x32xf32>
    %578 = arith.mulf %569, %505 : vector<8x32xf32>
    %579 = arith.mulf %563, %571 : vector<8x32xf32>
    %580 = arith.addf %578, %579 : vector<8x32xf32>
    %581 = math.tanh %580 : vector<8x32xf32>
    %582 = arith.mulf %577, %581 : vector<8x32xf32>
    %583 = vector.broadcast %c5_i32 : i32 to vector<8x1xi32>
    %584 = arith.cmpi sgt, %11, %583 : vector<8x1xi32>
    %585 = arith.extui %584 : vector<8x1xi1> to vector<8x1xi32>
    %586 = arith.sitofp %585 : vector<8x1xi32> to vector<8x1xf32>
    %587 = vector.broadcast %518 : i32 to vector<8x1xi32>
    %588 = arith.cmpi sgt, %11, %587 : vector<8x1xi32>
    %589 = arith.extui %588 : vector<8x1xi1> to vector<8x1xi32>
    %590 = arith.sitofp %589 : vector<8x1xi32> to vector<8x1xf32>
    %591 = arith.subf %556, %493 : vector<8x32xf32>
    %592 = vector.broadcast %586 : vector<8x1xf32> to vector<8x32xf32>
    %593 = arith.mulf %592, %591 : vector<8x32xf32>
    %594 = arith.addf %493, %593 : vector<8x32xf32>
    %595 = arith.subf %554, %497 : vector<8x32xf32>
    %596 = vector.broadcast %586 : vector<8x1xf32> to vector<8x32xf32>
    %597 = arith.mulf %596, %595 : vector<8x32xf32>
    %598 = arith.addf %497, %597 : vector<8x32xf32>
    %599 = arith.subf %582, %501 : vector<8x32xf32>
    %600 = vector.broadcast %590 : vector<8x1xf32> to vector<8x32xf32>
    %601 = arith.mulf %600, %599 : vector<8x32xf32>
    %602 = arith.addf %501, %601 : vector<8x32xf32>
    %603 = arith.subf %580, %505 : vector<8x32xf32>
    %604 = vector.broadcast %590 : vector<8x1xf32> to vector<8x32xf32>
    %605 = arith.mulf %604, %603 : vector<8x32xf32>
    %606 = arith.addf %505, %605 : vector<8x32xf32>
    %607 = vector.broadcast %586 : vector<8x1xf32> to vector<8x32xf32>
    %608 = arith.mulf %607, %594 : vector<8x32xf32>
    %609 = arith.index_cast %c5_i32 : i32 to index
    %c0_104 = arith.constant 0 : index
    %c0_105 = arith.constant 0 : index
    %610 = vector.load %arg5[%609, %c0_104, %c0_105] : memref<10x8x32xf32, #tpu.memory_space<vmem>>, vector<1x8x32xf32>
    %611 = vector.shape_cast %610 : vector<1x8x32xf32> to vector<8x32xf32>
    %612 = vector.shape_cast %608 : vector<8x32xf32> to vector<1x8x32xf32>
    tpu.vector_store %arg5[%609, %c0_104, %c0_105], %612 {strides = array<i32>} : memref<10x8x32xf32, #tpu.memory_space<vmem>>, vector<1x8x32xf32>,
    %613 = vector.broadcast %590 : vector<8x1xf32> to vector<8x32xf32>
    %614 = arith.mulf %613, %602 : vector<8x32xf32>
    %615 = arith.index_cast %518 : i32 to index
    %c0_106 = arith.constant 0 : index
    %c0_107 = arith.constant 0 : index
    %616 = vector.load %arg6[%615, %c0_106, %c0_107] : memref<10x8x32xf32, #tpu.memory_space<vmem>>, vector<1x8x32xf32>
    %617 = vector.shape_cast %616 : vector<1x8x32xf32> to vector<8x32xf32>
    %618 = vector.shape_cast %614 : vector<8x32xf32> to vector<1x8x32xf32>
    tpu.vector_store %arg6[%615, %c0_106, %c0_107], %618 {strides = array<i32>} : memref<10x8x32xf32, #tpu.memory_space<vmem>>, vector<1x8x32xf32>,
    %c6_i32 = arith.constant 6 : i32
    %c9_i32_108 = arith.constant 9 : i32
    %619 = arith.subi %c9_i32_108, %c6_i32 : i32
    %c8_i32_109 = arith.constant 8 : i32
    %620 = arith.muli %c6_i32, %c8_i32_109 : i32
    %621 = tpu.assume_multiple %620, 8 : i32
    %622 = arith.index_cast %621 : i32 to index
    %c0_110 = arith.constant 0 : index
    %623 = vector.load %arg9[%622, %c0_110] : memref<80x128xf32, #tpu.memory_space<vmem>>, vector<8x128xf32>
    %c8_i32_111 = arith.constant 8 : i32
    %624 = arith.muli %619, %c8_i32_111 : i32
    %625 = tpu.assume_multiple %624, 8 : i32
    %626 = arith.index_cast %625 : i32 to index
    %c0_112 = arith.constant 0 : index
    %627 = vector.load %arg10[%626, %c0_112] : memref<80x128xf32, #tpu.memory_space<vmem>>, vector<8x128xf32>
    %628 = tpu.concatenate %623, %627 in 1 : vector<8x128xf32>, vector<8x128xf32> -> vector<8x256xf32>
    %629 = tpu.concatenate %594, %602 in 1 : vector<8x32xf32>, vector<8x32xf32> -> vector<8x64xf32>
    %cst_113 = arith.constant dense<0.000000e+00> : vector<8x256xf32>
    %630 = tpu.matmul %629, %10, %cst_113 {dimension_numbers = #tpu.dot_dimension_numbers<[1], [0], [0], [1], [0, 0, 1, 1], [], []>} : vector<8x64xf32>, vector<64x256xf32>, vector<8x256xf32> -> vector<8x256xf32>
    %631 = arith.addf %628, %630 : vector<8x256xf32>
    %632 = vector.extract_strided_slice %631 {offsets = [0, 0], sizes = [8, 128], strides = [1, 1]} : vector<8x256xf32> to vector<8x128xf32>
    %633 = vector.extract_strided_slice %632 {offsets = [0, 0], sizes = [8, 32], strides = [1, 1]} : vector<8x128xf32> to vector<8x32xf32>
    %634 = arith.negf %633 : vector<8x32xf32>
    %635 = math.exp %634 : vector<8x32xf32>
    %cst_114 = arith.constant 1.000000e+00 : f32
    %636 = vector.broadcast %cst_114 : f32 to vector<8x32xf32>
    %637 = arith.addf %636, %635 : vector<8x32xf32>
    %638 = arith.divf %636, %637 : vector<8x32xf32>
    %639 = vector.extract_strided_slice %632 {offsets = [0, 32], sizes = [8, 32], strides = [1, 1]} : vector<8x128xf32> to vector<8x32xf32>
    %640 = arith.negf %639 : vector<8x32xf32>
    %641 = math.exp %640 : vector<8x32xf32>
    %cst_115 = arith.constant 1.000000e+00 : f32
    %642 = vector.broadcast %cst_115 : f32 to vector<8x32xf32>
    %643 = arith.addf %642, %641 : vector<8x32xf32>
    %644 = arith.divf %642, %643 : vector<8x32xf32>
    %645 = vector.extract_strided_slice %632 {offsets = [0, 64], sizes = [8, 32], strides = [1, 1]} : vector<8x128xf32> to vector<8x32xf32>
    %646 = math.tanh %645 : vector<8x32xf32>
    %647 = vector.extract_strided_slice %632 {offsets = [0, 96], sizes = [8, 32], strides = [1, 1]} : vector<8x128xf32> to vector<8x32xf32>
    %648 = arith.negf %647 : vector<8x32xf32>
    %649 = math.exp %648 : vector<8x32xf32>
    %cst_116 = arith.constant 1.000000e+00 : f32
    %650 = vector.broadcast %cst_116 : f32 to vector<8x32xf32>
    %651 = arith.addf %650, %649 : vector<8x32xf32>
    %652 = arith.divf %650, %651 : vector<8x32xf32>
    %653 = arith.mulf %644, %598 : vector<8x32xf32>
    %654 = arith.mulf %638, %646 : vector<8x32xf32>
    %655 = arith.addf %653, %654 : vector<8x32xf32>
    %656 = math.tanh %655 : vector<8x32xf32>
    %657 = arith.mulf %652, %656 : vector<8x32xf32>
    %658 = vector.extract_strided_slice %631 {offsets = [0, 128], sizes = [8, 128], strides = [1, 1]} : vector<8x256xf32> to vector<8x128xf32>
    %659 = vector.extract_strided_slice %658 {offsets = [0, 0], sizes = [8, 32], strides = [1, 1]} : vector<8x128xf32> to vector<8x32xf32>
    %660 = arith.negf %659 : vector<8x32xf32>
    %661 = math.exp %660 : vector<8x32xf32>
    %cst_117 = arith.constant 1.000000e+00 : f32
    %662 = vector.broadcast %cst_117 : f32 to vector<8x32xf32>
    %663 = arith.addf %662, %661 : vector<8x32xf32>
    %664 = arith.divf %662, %663 : vector<8x32xf32>
    %665 = vector.extract_strided_slice %658 {offsets = [0, 32], sizes = [8, 32], strides = [1, 1]} : vector<8x128xf32> to vector<8x32xf32>
    %666 = arith.negf %665 : vector<8x32xf32>
    %667 = math.exp %666 : vector<8x32xf32>
    %cst_118 = arith.constant 1.000000e+00 : f32
    %668 = vector.broadcast %cst_118 : f32 to vector<8x32xf32>
    %669 = arith.addf %668, %667 : vector<8x32xf32>
    %670 = arith.divf %668, %669 : vector<8x32xf32>
    %671 = vector.extract_strided_slice %658 {offsets = [0, 64], sizes = [8, 32], strides = [1, 1]} : vector<8x128xf32> to vector<8x32xf32>
    %672 = math.tanh %671 : vector<8x32xf32>
    %673 = vector.extract_strided_slice %658 {offsets = [0, 96], sizes = [8, 32], strides = [1, 1]} : vector<8x128xf32> to vector<8x32xf32>
    %674 = arith.negf %673 : vector<8x32xf32>
    %675 = math.exp %674 : vector<8x32xf32>
    %cst_119 = arith.constant 1.000000e+00 : f32
    %676 = vector.broadcast %cst_119 : f32 to vector<8x32xf32>
    %677 = arith.addf %676, %675 : vector<8x32xf32>
    %678 = arith.divf %676, %677 : vector<8x32xf32>
    %679 = arith.mulf %670, %606 : vector<8x32xf32>
    %680 = arith.mulf %664, %672 : vector<8x32xf32>
    %681 = arith.addf %679, %680 : vector<8x32xf32>
    %682 = math.tanh %681 : vector<8x32xf32>
    %683 = arith.mulf %678, %682 : vector<8x32xf32>
    %684 = vector.broadcast %c6_i32 : i32 to vector<8x1xi32>
    %685 = arith.cmpi sgt, %11, %684 : vector<8x1xi32>
    %686 = arith.extui %685 : vector<8x1xi1> to vector<8x1xi32>
    %687 = arith.sitofp %686 : vector<8x1xi32> to vector<8x1xf32>
    %688 = vector.broadcast %619 : i32 to vector<8x1xi32>
    %689 = arith.cmpi sgt, %11, %688 : vector<8x1xi32>
    %690 = arith.extui %689 : vector<8x1xi1> to vector<8x1xi32>
    %691 = arith.sitofp %690 : vector<8x1xi32> to vector<8x1xf32>
    %692 = arith.subf %657, %594 : vector<8x32xf32>
    %693 = vector.broadcast %687 : vector<8x1xf32> to vector<8x32xf32>
    %694 = arith.mulf %693, %692 : vector<8x32xf32>
    %695 = arith.addf %594, %694 : vector<8x32xf32>
    %696 = arith.subf %655, %598 : vector<8x32xf32>
    %697 = vector.broadcast %687 : vector<8x1xf32> to vector<8x32xf32>
    %698 = arith.mulf %697, %696 : vector<8x32xf32>
    %699 = arith.addf %598, %698 : vector<8x32xf32>
    %700 = arith.subf %683, %602 : vector<8x32xf32>
    %701 = vector.broadcast %691 : vector<8x1xf32> to vector<8x32xf32>
    %702 = arith.mulf %701, %700 : vector<8x32xf32>
    %703 = arith.addf %602, %702 : vector<8x32xf32>
    %704 = arith.subf %681, %606 : vector<8x32xf32>
    %705 = vector.broadcast %691 : vector<8x1xf32> to vector<8x32xf32>
    %706 = arith.mulf %705, %704 : vector<8x32xf32>
    %707 = arith.addf %606, %706 : vector<8x32xf32>
    %708 = vector.broadcast %687 : vector<8x1xf32> to vector<8x32xf32>
    %709 = arith.mulf %708, %695 : vector<8x32xf32>
    %710 = arith.index_cast %c6_i32 : i32 to index
    %c0_120 = arith.constant 0 : index
    %c0_121 = arith.constant 0 : index
    %711 = vector.load %arg5[%710, %c0_120, %c0_121] : memref<10x8x32xf32, #tpu.memory_space<vmem>>, vector<1x8x32xf32>
    %712 = vector.shape_cast %711 : vector<1x8x32xf32> to vector<8x32xf32>
    %713 = vector.shape_cast %709 : vector<8x32xf32> to vector<1x8x32xf32>
    tpu.vector_store %arg5[%710, %c0_120, %c0_121], %713 {strides = array<i32>} : memref<10x8x32xf32, #tpu.memory_space<vmem>>, vector<1x8x32xf32>,
    %714 = vector.broadcast %691 : vector<8x1xf32> to vector<8x32xf32>
    %715 = arith.mulf %714, %703 : vector<8x32xf32>
    %716 = arith.index_cast %619 : i32 to index
    %c0_122 = arith.constant 0 : index
    %c0_123 = arith.constant 0 : index
    %717 = vector.load %arg6[%716, %c0_122, %c0_123] : memref<10x8x32xf32, #tpu.memory_space<vmem>>, vector<1x8x32xf32>
    %718 = vector.shape_cast %717 : vector<1x8x32xf32> to vector<8x32xf32>
    %719 = vector.shape_cast %715 : vector<8x32xf32> to vector<1x8x32xf32>
    tpu.vector_store %arg6[%716, %c0_122, %c0_123], %719 {strides = array<i32>} : memref<10x8x32xf32, #tpu.memory_space<vmem>>, vector<1x8x32xf32>,
    %c7_i32 = arith.constant 7 : i32
    %c9_i32_124 = arith.constant 9 : i32
    %720 = arith.subi %c9_i32_124, %c7_i32 : i32
    %c8_i32_125 = arith.constant 8 : i32
    %721 = arith.muli %c7_i32, %c8_i32_125 : i32
    %722 = tpu.assume_multiple %721, 8 : i32
    %723 = arith.index_cast %722 : i32 to index
    %c0_126 = arith.constant 0 : index
    %724 = vector.load %arg9[%723, %c0_126] : memref<80x128xf32, #tpu.memory_space<vmem>>, vector<8x128xf32>
    %c8_i32_127 = arith.constant 8 : i32
    %725 = arith.muli %720, %c8_i32_127 : i32
    %726 = tpu.assume_multiple %725, 8 : i32
    %727 = arith.index_cast %726 : i32 to index
    %c0_128 = arith.constant 0 : index
    %728 = vector.load %arg10[%727, %c0_128] : memref<80x128xf32, #tpu.memory_space<vmem>>, vector<8x128xf32>
    %729 = tpu.concatenate %724, %728 in 1 : vector<8x128xf32>, vector<8x128xf32> -> vector<8x256xf32>
    %730 = tpu.concatenate %695, %703 in 1 : vector<8x32xf32>, vector<8x32xf32> -> vector<8x64xf32>
    %cst_129 = arith.constant dense<0.000000e+00> : vector<8x256xf32>
    %731 = tpu.matmul %730, %10, %cst_129 {dimension_numbers = #tpu.dot_dimension_numbers<[1], [0], [0], [1], [0, 0, 1, 1], [], []>} : vector<8x64xf32>, vector<64x256xf32>, vector<8x256xf32> -> vector<8x256xf32>
    %732 = arith.addf %729, %731 : vector<8x256xf32>
    %733 = vector.extract_strided_slice %732 {offsets = [0, 0], sizes = [8, 128], strides = [1, 1]} : vector<8x256xf32> to vector<8x128xf32>
    %734 = vector.extract_strided_slice %733 {offsets = [0, 0], sizes = [8, 32], strides = [1, 1]} : vector<8x128xf32> to vector<8x32xf32>
    %735 = arith.negf %734 : vector<8x32xf32>
    %736 = math.exp %735 : vector<8x32xf32>
    %cst_130 = arith.constant 1.000000e+00 : f32
    %737 = vector.broadcast %cst_130 : f32 to vector<8x32xf32>
    %738 = arith.addf %737, %736 : vector<8x32xf32>
    %739 = arith.divf %737, %738 : vector<8x32xf32>
    %740 = vector.extract_strided_slice %733 {offsets = [0, 32], sizes = [8, 32], strides = [1, 1]} : vector<8x128xf32> to vector<8x32xf32>
    %741 = arith.negf %740 : vector<8x32xf32>
    %742 = math.exp %741 : vector<8x32xf32>
    %cst_131 = arith.constant 1.000000e+00 : f32
    %743 = vector.broadcast %cst_131 : f32 to vector<8x32xf32>
    %744 = arith.addf %743, %742 : vector<8x32xf32>
    %745 = arith.divf %743, %744 : vector<8x32xf32>
    %746 = vector.extract_strided_slice %733 {offsets = [0, 64], sizes = [8, 32], strides = [1, 1]} : vector<8x128xf32> to vector<8x32xf32>
    %747 = math.tanh %746 : vector<8x32xf32>
    %748 = vector.extract_strided_slice %733 {offsets = [0, 96], sizes = [8, 32], strides = [1, 1]} : vector<8x128xf32> to vector<8x32xf32>
    %749 = arith.negf %748 : vector<8x32xf32>
    %750 = math.exp %749 : vector<8x32xf32>
    %cst_132 = arith.constant 1.000000e+00 : f32
    %751 = vector.broadcast %cst_132 : f32 to vector<8x32xf32>
    %752 = arith.addf %751, %750 : vector<8x32xf32>
    %753 = arith.divf %751, %752 : vector<8x32xf32>
    %754 = arith.mulf %745, %699 : vector<8x32xf32>
    %755 = arith.mulf %739, %747 : vector<8x32xf32>
    %756 = arith.addf %754, %755 : vector<8x32xf32>
    %757 = math.tanh %756 : vector<8x32xf32>
    %758 = arith.mulf %753, %757 : vector<8x32xf32>
    %759 = vector.extract_strided_slice %732 {offsets = [0, 128], sizes = [8, 128], strides = [1, 1]} : vector<8x256xf32> to vector<8x128xf32>
    %760 = vector.extract_strided_slice %759 {offsets = [0, 0], sizes = [8, 32], strides = [1, 1]} : vector<8x128xf32> to vector<8x32xf32>
    %761 = arith.negf %760 : vector<8x32xf32>
    %762 = math.exp %761 : vector<8x32xf32>
    %cst_133 = arith.constant 1.000000e+00 : f32
    %763 = vector.broadcast %cst_133 : f32 to vector<8x32xf32>
    %764 = arith.addf %763, %762 : vector<8x32xf32>
    %765 = arith.divf %763, %764 : vector<8x32xf32>
    %766 = vector.extract_strided_slice %759 {offsets = [0, 32], sizes = [8, 32], strides = [1, 1]} : vector<8x128xf32> to vector<8x32xf32>
    %767 = arith.negf %766 : vector<8x32xf32>
    %768 = math.exp %767 : vector<8x32xf32>
    %cst_134 = arith.constant 1.000000e+00 : f32
    %769 = vector.broadcast %cst_134 : f32 to vector<8x32xf32>
    %770 = arith.addf %769, %768 : vector<8x32xf32>
    %771 = arith.divf %769, %770 : vector<8x32xf32>
    %772 = vector.extract_strided_slice %759 {offsets = [0, 64], sizes = [8, 32], strides = [1, 1]} : vector<8x128xf32> to vector<8x32xf32>
    %773 = math.tanh %772 : vector<8x32xf32>
    %774 = vector.extract_strided_slice %759 {offsets = [0, 96], sizes = [8, 32], strides = [1, 1]} : vector<8x128xf32> to vector<8x32xf32>
    %775 = arith.negf %774 : vector<8x32xf32>
    %776 = math.exp %775 : vector<8x32xf32>
    %cst_135 = arith.constant 1.000000e+00 : f32
    %777 = vector.broadcast %cst_135 : f32 to vector<8x32xf32>
    %778 = arith.addf %777, %776 : vector<8x32xf32>
    %779 = arith.divf %777, %778 : vector<8x32xf32>
    %780 = arith.mulf %771, %707 : vector<8x32xf32>
    %781 = arith.mulf %765, %773 : vector<8x32xf32>
    %782 = arith.addf %780, %781 : vector<8x32xf32>
    %783 = math.tanh %782 : vector<8x32xf32>
    %784 = arith.mulf %779, %783 : vector<8x32xf32>
    %785 = vector.broadcast %c7_i32 : i32 to vector<8x1xi32>
    %786 = arith.cmpi sgt, %11, %785 : vector<8x1xi32>
    %787 = arith.extui %786 : vector<8x1xi1> to vector<8x1xi32>
    %788 = arith.sitofp %787 : vector<8x1xi32> to vector<8x1xf32>
    %789 = vector.broadcast %720 : i32 to vector<8x1xi32>
    %790 = arith.cmpi sgt, %11, %789 : vector<8x1xi32>
    %791 = arith.extui %790 : vector<8x1xi1> to vector<8x1xi32>
    %792 = arith.sitofp %791 : vector<8x1xi32> to vector<8x1xf32>
    %793 = arith.subf %758, %695 : vector<8x32xf32>
    %794 = vector.broadcast %788 : vector<8x1xf32> to vector<8x32xf32>
    %795 = arith.mulf %794, %793 : vector<8x32xf32>
    %796 = arith.addf %695, %795 : vector<8x32xf32>
    %797 = arith.subf %756, %699 : vector<8x32xf32>
    %798 = vector.broadcast %788 : vector<8x1xf32> to vector<8x32xf32>
    %799 = arith.mulf %798, %797 : vector<8x32xf32>
    %800 = arith.addf %699, %799 : vector<8x32xf32>
    %801 = arith.subf %784, %703 : vector<8x32xf32>
    %802 = vector.broadcast %792 : vector<8x1xf32> to vector<8x32xf32>
    %803 = arith.mulf %802, %801 : vector<8x32xf32>
    %804 = arith.addf %703, %803 : vector<8x32xf32>
    %805 = arith.subf %782, %707 : vector<8x32xf32>
    %806 = vector.broadcast %792 : vector<8x1xf32> to vector<8x32xf32>
    %807 = arith.mulf %806, %805 : vector<8x32xf32>
    %808 = arith.addf %707, %807 : vector<8x32xf32>
    %809 = vector.broadcast %788 : vector<8x1xf32> to vector<8x32xf32>
    %810 = arith.mulf %809, %796 : vector<8x32xf32>
    %811 = arith.index_cast %c7_i32 : i32 to index
    %c0_136 = arith.constant 0 : index
    %c0_137 = arith.constant 0 : index
    %812 = vector.load %arg5[%811, %c0_136, %c0_137] : memref<10x8x32xf32, #tpu.memory_space<vmem>>, vector<1x8x32xf32>
    %813 = vector.shape_cast %812 : vector<1x8x32xf32> to vector<8x32xf32>
    %814 = vector.shape_cast %810 : vector<8x32xf32> to vector<1x8x32xf32>
    tpu.vector_store %arg5[%811, %c0_136, %c0_137], %814 {strides = array<i32>} : memref<10x8x32xf32, #tpu.memory_space<vmem>>, vector<1x8x32xf32>,
    %815 = vector.broadcast %792 : vector<8x1xf32> to vector<8x32xf32>
    %816 = arith.mulf %815, %804 : vector<8x32xf32>
    %817 = arith.index_cast %720 : i32 to index
    %c0_138 = arith.constant 0 : index
    %c0_139 = arith.constant 0 : index
    %818 = vector.load %arg6[%817, %c0_138, %c0_139] : memref<10x8x32xf32, #tpu.memory_space<vmem>>, vector<1x8x32xf32>
    %819 = vector.shape_cast %818 : vector<1x8x32xf32> to vector<8x32xf32>
    %820 = vector.shape_cast %816 : vector<8x32xf32> to vector<1x8x32xf32>
    tpu.vector_store %arg6[%817, %c0_138, %c0_139], %820 {strides = array<i32>} : memref<10x8x32xf32, #tpu.memory_space<vmem>>, vector<1x8x32xf32>,
    %c8_i32_140 = arith.constant 8 : i32
    %c9_i32_141 = arith.constant 9 : i32
    %821 = arith.subi %c9_i32_141, %c8_i32_140 : i32
    %c8_i32_142 = arith.constant 8 : i32
    %822 = arith.muli %c8_i32_140, %c8_i32_142 : i32
    %823 = tpu.assume_multiple %822, 8 : i32
    %824 = arith.index_cast %823 : i32 to index
    %c0_143 = arith.constant 0 : index
    %825 = vector.load %arg9[%824, %c0_143] : memref<80x128xf32, #tpu.memory_space<vmem>>, vector<8x128xf32>
    %c8_i32_144 = arith.constant 8 : i32
    %826 = arith.muli %821, %c8_i32_144 : i32
    %827 = tpu.assume_multiple %826, 8 : i32
    %828 = arith.index_cast %827 : i32 to index
    %c0_145 = arith.constant 0 : index
    %829 = vector.load %arg10[%828, %c0_145] : memref<80x128xf32, #tpu.memory_space<vmem>>, vector<8x128xf32>
    %830 = tpu.concatenate %825, %829 in 1 : vector<8x128xf32>, vector<8x128xf32> -> vector<8x256xf32>
    %831 = tpu.concatenate %796, %804 in 1 : vector<8x32xf32>, vector<8x32xf32> -> vector<8x64xf32>
    %cst_146 = arith.constant dense<0.000000e+00> : vector<8x256xf32>
    %832 = tpu.matmul %831, %10, %cst_146 {dimension_numbers = #tpu.dot_dimension_numbers<[1], [0], [0], [1], [0, 0, 1, 1], [], []>} : vector<8x64xf32>, vector<64x256xf32>, vector<8x256xf32> -> vector<8x256xf32>
    %833 = arith.addf %830, %832 : vector<8x256xf32>
    %834 = vector.extract_strided_slice %833 {offsets = [0, 0], sizes = [8, 128], strides = [1, 1]} : vector<8x256xf32> to vector<8x128xf32>
    %835 = vector.extract_strided_slice %834 {offsets = [0, 0], sizes = [8, 32], strides = [1, 1]} : vector<8x128xf32> to vector<8x32xf32>
    %836 = arith.negf %835 : vector<8x32xf32>
    %837 = math.exp %836 : vector<8x32xf32>
    %cst_147 = arith.constant 1.000000e+00 : f32
    %838 = vector.broadcast %cst_147 : f32 to vector<8x32xf32>
    %839 = arith.addf %838, %837 : vector<8x32xf32>
    %840 = arith.divf %838, %839 : vector<8x32xf32>
    %841 = vector.extract_strided_slice %834 {offsets = [0, 32], sizes = [8, 32], strides = [1, 1]} : vector<8x128xf32> to vector<8x32xf32>
    %842 = arith.negf %841 : vector<8x32xf32>
    %843 = math.exp %842 : vector<8x32xf32>
    %cst_148 = arith.constant 1.000000e+00 : f32
    %844 = vector.broadcast %cst_148 : f32 to vector<8x32xf32>
    %845 = arith.addf %844, %843 : vector<8x32xf32>
    %846 = arith.divf %844, %845 : vector<8x32xf32>
    %847 = vector.extract_strided_slice %834 {offsets = [0, 64], sizes = [8, 32], strides = [1, 1]} : vector<8x128xf32> to vector<8x32xf32>
    %848 = math.tanh %847 : vector<8x32xf32>
    %849 = vector.extract_strided_slice %834 {offsets = [0, 96], sizes = [8, 32], strides = [1, 1]} : vector<8x128xf32> to vector<8x32xf32>
    %850 = arith.negf %849 : vector<8x32xf32>
    %851 = math.exp %850 : vector<8x32xf32>
    %cst_149 = arith.constant 1.000000e+00 : f32
    %852 = vector.broadcast %cst_149 : f32 to vector<8x32xf32>
    %853 = arith.addf %852, %851 : vector<8x32xf32>
    %854 = arith.divf %852, %853 : vector<8x32xf32>
    %855 = arith.mulf %846, %800 : vector<8x32xf32>
    %856 = arith.mulf %840, %848 : vector<8x32xf32>
    %857 = arith.addf %855, %856 : vector<8x32xf32>
    %858 = math.tanh %857 : vector<8x32xf32>
    %859 = arith.mulf %854, %858 : vector<8x32xf32>
    %860 = vector.extract_strided_slice %833 {offsets = [0, 128], sizes = [8, 128], strides = [1, 1]} : vector<8x256xf32> to vector<8x128xf32>
    %861 = vector.extract_strided_slice %860 {offsets = [0, 0], sizes = [8, 32], strides = [1, 1]} : vector<8x128xf32> to vector<8x32xf32>
    %862 = arith.negf %861 : vector<8x32xf32>
    %863 = math.exp %862 : vector<8x32xf32>
    %cst_150 = arith.constant 1.000000e+00 : f32
    %864 = vector.broadcast %cst_150 : f32 to vector<8x32xf32>
    %865 = arith.addf %864, %863 : vector<8x32xf32>
    %866 = arith.divf %864, %865 : vector<8x32xf32>
    %867 = vector.extract_strided_slice %860 {offsets = [0, 32], sizes = [8, 32], strides = [1, 1]} : vector<8x128xf32> to vector<8x32xf32>
    %868 = arith.negf %867 : vector<8x32xf32>
    %869 = math.exp %868 : vector<8x32xf32>
    %cst_151 = arith.constant 1.000000e+00 : f32
    %870 = vector.broadcast %cst_151 : f32 to vector<8x32xf32>
    %871 = arith.addf %870, %869 : vector<8x32xf32>
    %872 = arith.divf %870, %871 : vector<8x32xf32>
    %873 = vector.extract_strided_slice %860 {offsets = [0, 64], sizes = [8, 32], strides = [1, 1]} : vector<8x128xf32> to vector<8x32xf32>
    %874 = math.tanh %873 : vector<8x32xf32>
    %875 = vector.extract_strided_slice %860 {offsets = [0, 96], sizes = [8, 32], strides = [1, 1]} : vector<8x128xf32> to vector<8x32xf32>
    %876 = arith.negf %875 : vector<8x32xf32>
    %877 = math.exp %876 : vector<8x32xf32>
    %cst_152 = arith.constant 1.000000e+00 : f32
    %878 = vector.broadcast %cst_152 : f32 to vector<8x32xf32>
    %879 = arith.addf %878, %877 : vector<8x32xf32>
    %880 = arith.divf %878, %879 : vector<8x32xf32>
    %881 = arith.mulf %872, %808 : vector<8x32xf32>
    %882 = arith.mulf %866, %874 : vector<8x32xf32>
    %883 = arith.addf %881, %882 : vector<8x32xf32>
    %884 = math.tanh %883 : vector<8x32xf32>
    %885 = arith.mulf %880, %884 : vector<8x32xf32>
    %886 = vector.broadcast %c8_i32_140 : i32 to vector<8x1xi32>
    %887 = arith.cmpi sgt, %11, %886 : vector<8x1xi32>
    %888 = arith.extui %887 : vector<8x1xi1> to vector<8x1xi32>
    %889 = arith.sitofp %888 : vector<8x1xi32> to vector<8x1xf32>
    %890 = vector.broadcast %821 : i32 to vector<8x1xi32>
    %891 = arith.cmpi sgt, %11, %890 : vector<8x1xi32>
    %892 = arith.extui %891 : vector<8x1xi1> to vector<8x1xi32>
    %893 = arith.sitofp %892 : vector<8x1xi32> to vector<8x1xf32>
    %894 = arith.subf %859, %796 : vector<8x32xf32>
    %895 = vector.broadcast %889 : vector<8x1xf32> to vector<8x32xf32>
    %896 = arith.mulf %895, %894 : vector<8x32xf32>
    %897 = arith.addf %796, %896 : vector<8x32xf32>
    %898 = arith.subf %857, %800 : vector<8x32xf32>
    %899 = vector.broadcast %889 : vector<8x1xf32> to vector<8x32xf32>
    %900 = arith.mulf %899, %898 : vector<8x32xf32>
    %901 = arith.addf %800, %900 : vector<8x32xf32>
    %902 = arith.subf %885, %804 : vector<8x32xf32>
    %903 = vector.broadcast %893 : vector<8x1xf32> to vector<8x32xf32>
    %904 = arith.mulf %903, %902 : vector<8x32xf32>
    %905 = arith.addf %804, %904 : vector<8x32xf32>
    %906 = arith.subf %883, %808 : vector<8x32xf32>
    %907 = vector.broadcast %893 : vector<8x1xf32> to vector<8x32xf32>
    %908 = arith.mulf %907, %906 : vector<8x32xf32>
    %909 = arith.addf %808, %908 : vector<8x32xf32>
    %910 = vector.broadcast %889 : vector<8x1xf32> to vector<8x32xf32>
    %911 = arith.mulf %910, %897 : vector<8x32xf32>
    %912 = arith.index_cast %c8_i32_140 : i32 to index
    %c0_153 = arith.constant 0 : index
    %c0_154 = arith.constant 0 : index
    %913 = vector.load %arg5[%912, %c0_153, %c0_154] : memref<10x8x32xf32, #tpu.memory_space<vmem>>, vector<1x8x32xf32>
    %914 = vector.shape_cast %913 : vector<1x8x32xf32> to vector<8x32xf32>
    %915 = vector.shape_cast %911 : vector<8x32xf32> to vector<1x8x32xf32>
    tpu.vector_store %arg5[%912, %c0_153, %c0_154], %915 {strides = array<i32>} : memref<10x8x32xf32, #tpu.memory_space<vmem>>, vector<1x8x32xf32>,
    %916 = vector.broadcast %893 : vector<8x1xf32> to vector<8x32xf32>
    %917 = arith.mulf %916, %905 : vector<8x32xf32>
    %918 = arith.index_cast %821 : i32 to index
    %c0_155 = arith.constant 0 : index
    %c0_156 = arith.constant 0 : index
    %919 = vector.load %arg6[%918, %c0_155, %c0_156] : memref<10x8x32xf32, #tpu.memory_space<vmem>>, vector<1x8x32xf32>
    %920 = vector.shape_cast %919 : vector<1x8x32xf32> to vector<8x32xf32>
    %921 = vector.shape_cast %917 : vector<8x32xf32> to vector<1x8x32xf32>
    tpu.vector_store %arg6[%918, %c0_155, %c0_156], %921 {strides = array<i32>} : memref<10x8x32xf32, #tpu.memory_space<vmem>>, vector<1x8x32xf32>,
    %c9_i32_157 = arith.constant 9 : i32
    %c9_i32_158 = arith.constant 9 : i32
    %922 = arith.subi %c9_i32_158, %c9_i32_157 : i32
    %c8_i32_159 = arith.constant 8 : i32
    %923 = arith.muli %c9_i32_157, %c8_i32_159 : i32
    %924 = tpu.assume_multiple %923, 8 : i32
    %925 = arith.index_cast %924 : i32 to index
    %c0_160 = arith.constant 0 : index
    %926 = vector.load %arg9[%925, %c0_160] : memref<80x128xf32, #tpu.memory_space<vmem>>, vector<8x128xf32>
    %c8_i32_161 = arith.constant 8 : i32
    %927 = arith.muli %922, %c8_i32_161 : i32
    %928 = tpu.assume_multiple %927, 8 : i32
    %929 = arith.index_cast %928 : i32 to index
    %c0_162 = arith.constant 0 : index
    %930 = vector.load %arg10[%929, %c0_162] : memref<80x128xf32, #tpu.memory_space<vmem>>, vector<8x128xf32>
    %931 = tpu.concatenate %926, %930 in 1 : vector<8x128xf32>, vector<8x128xf32> -> vector<8x256xf32>
    %932 = tpu.concatenate %897, %905 in 1 : vector<8x32xf32>, vector<8x32xf32> -> vector<8x64xf32>
    %cst_163 = arith.constant dense<0.000000e+00> : vector<8x256xf32>
    %933 = tpu.matmul %932, %10, %cst_163 {dimension_numbers = #tpu.dot_dimension_numbers<[1], [0], [0], [1], [0, 0, 1, 1], [], []>} : vector<8x64xf32>, vector<64x256xf32>, vector<8x256xf32> -> vector<8x256xf32>
    %934 = arith.addf %931, %933 : vector<8x256xf32>
    %935 = vector.extract_strided_slice %934 {offsets = [0, 0], sizes = [8, 128], strides = [1, 1]} : vector<8x256xf32> to vector<8x128xf32>
    %936 = vector.extract_strided_slice %935 {offsets = [0, 0], sizes = [8, 32], strides = [1, 1]} : vector<8x128xf32> to vector<8x32xf32>
    %937 = arith.negf %936 : vector<8x32xf32>
    %938 = math.exp %937 : vector<8x32xf32>
    %cst_164 = arith.constant 1.000000e+00 : f32
    %939 = vector.broadcast %cst_164 : f32 to vector<8x32xf32>
    %940 = arith.addf %939, %938 : vector<8x32xf32>
    %941 = arith.divf %939, %940 : vector<8x32xf32>
    %942 = vector.extract_strided_slice %935 {offsets = [0, 32], sizes = [8, 32], strides = [1, 1]} : vector<8x128xf32> to vector<8x32xf32>
    %943 = arith.negf %942 : vector<8x32xf32>
    %944 = math.exp %943 : vector<8x32xf32>
    %cst_165 = arith.constant 1.000000e+00 : f32
    %945 = vector.broadcast %cst_165 : f32 to vector<8x32xf32>
    %946 = arith.addf %945, %944 : vector<8x32xf32>
    %947 = arith.divf %945, %946 : vector<8x32xf32>
    %948 = vector.extract_strided_slice %935 {offsets = [0, 64], sizes = [8, 32], strides = [1, 1]} : vector<8x128xf32> to vector<8x32xf32>
    %949 = math.tanh %948 : vector<8x32xf32>
    %950 = vector.extract_strided_slice %935 {offsets = [0, 96], sizes = [8, 32], strides = [1, 1]} : vector<8x128xf32> to vector<8x32xf32>
    %951 = arith.negf %950 : vector<8x32xf32>
    %952 = math.exp %951 : vector<8x32xf32>
    %cst_166 = arith.constant 1.000000e+00 : f32
    %953 = vector.broadcast %cst_166 : f32 to vector<8x32xf32>
    %954 = arith.addf %953, %952 : vector<8x32xf32>
    %955 = arith.divf %953, %954 : vector<8x32xf32>
    %956 = arith.mulf %947, %901 : vector<8x32xf32>
    %957 = arith.mulf %941, %949 : vector<8x32xf32>
    %958 = arith.addf %956, %957 : vector<8x32xf32>
    %959 = math.tanh %958 : vector<8x32xf32>
    %960 = arith.mulf %955, %959 : vector<8x32xf32>
    %961 = vector.extract_strided_slice %934 {offsets = [0, 128], sizes = [8, 128], strides = [1, 1]} : vector<8x256xf32> to vector<8x128xf32>
    %962 = vector.extract_strided_slice %961 {offsets = [0, 0], sizes = [8, 32], strides = [1, 1]} : vector<8x128xf32> to vector<8x32xf32>
    %963 = arith.negf %962 : vector<8x32xf32>
    %964 = math.exp %963 : vector<8x32xf32>
    %cst_167 = arith.constant 1.000000e+00 : f32
    %965 = vector.broadcast %cst_167 : f32 to vector<8x32xf32>
    %966 = arith.addf %965, %964 : vector<8x32xf32>
    %967 = arith.divf %965, %966 : vector<8x32xf32>
    %968 = vector.extract_strided_slice %961 {offsets = [0, 32], sizes = [8, 32], strides = [1, 1]} : vector<8x128xf32> to vector<8x32xf32>
    %969 = arith.negf %968 : vector<8x32xf32>
    %970 = math.exp %969 : vector<8x32xf32>
    %cst_168 = arith.constant 1.000000e+00 : f32
    %971 = vector.broadcast %cst_168 : f32 to vector<8x32xf32>
    %972 = arith.addf %971, %970 : vector<8x32xf32>
    %973 = arith.divf %971, %972 : vector<8x32xf32>
    %974 = vector.extract_strided_slice %961 {offsets = [0, 64], sizes = [8, 32], strides = [1, 1]} : vector<8x128xf32> to vector<8x32xf32>
    %975 = math.tanh %974 : vector<8x32xf32>
    %976 = vector.extract_strided_slice %961 {offsets = [0, 96], sizes = [8, 32], strides = [1, 1]} : vector<8x128xf32> to vector<8x32xf32>
    %977 = arith.negf %976 : vector<8x32xf32>
    %978 = math.exp %977 : vector<8x32xf32>
    %cst_169 = arith.constant 1.000000e+00 : f32
    %979 = vector.broadcast %cst_169 : f32 to vector<8x32xf32>
    %980 = arith.addf %979, %978 : vector<8x32xf32>
    %981 = arith.divf %979, %980 : vector<8x32xf32>
    %982 = arith.mulf %973, %909 : vector<8x32xf32>
    %983 = arith.mulf %967, %975 : vector<8x32xf32>
    %984 = arith.addf %982, %983 : vector<8x32xf32>
    %985 = math.tanh %984 : vector<8x32xf32>
    %986 = arith.mulf %981, %985 : vector<8x32xf32>
    %987 = vector.broadcast %c9_i32_157 : i32 to vector<8x1xi32>
    %988 = arith.cmpi sgt, %11, %987 : vector<8x1xi32>
    %989 = arith.extui %988 : vector<8x1xi1> to vector<8x1xi32>
    %990 = arith.sitofp %989 : vector<8x1xi32> to vector<8x1xf32>
    %991 = vector.broadcast %922 : i32 to vector<8x1xi32>
    %992 = arith.cmpi sgt, %11, %991 : vector<8x1xi32>
    %993 = arith.extui %992 : vector<8x1xi1> to vector<8x1xi32>
    %994 = arith.sitofp %993 : vector<8x1xi32> to vector<8x1xf32>
    %995 = arith.subf %960, %897 : vector<8x32xf32>
    %996 = vector.broadcast %990 : vector<8x1xf32> to vector<8x32xf32>
    %997 = arith.mulf %996, %995 : vector<8x32xf32>
    %998 = arith.addf %897, %997 : vector<8x32xf32>
    %999 = arith.subf %958, %901 : vector<8x32xf32>
    %1000 = vector.broadcast %990 : vector<8x1xf32> to vector<8x32xf32>
    %1001 = arith.mulf %1000, %999 : vector<8x32xf32>
    %1002 = arith.addf %901, %1001 : vector<8x32xf32>
    %1003 = arith.subf %986, %905 : vector<8x32xf32>
    %1004 = vector.broadcast %994 : vector<8x1xf32> to vector<8x32xf32>
    %1005 = arith.mulf %1004, %1003 : vector<8x32xf32>
    %1006 = arith.addf %905, %1005 : vector<8x32xf32>
    %1007 = arith.subf %984, %909 : vector<8x32xf32>
    %1008 = vector.broadcast %994 : vector<8x1xf32> to vector<8x32xf32>
    %1009 = arith.mulf %1008, %1007 : vector<8x32xf32>
    %1010 = arith.addf %909, %1009 : vector<8x32xf32>
    %1011 = vector.broadcast %990 : vector<8x1xf32> to vector<8x32xf32>
    %1012 = arith.mulf %1011, %998 : vector<8x32xf32>
    %1013 = arith.index_cast %c9_i32_157 : i32 to index
    %c0_170 = arith.constant 0 : index
    %c0_171 = arith.constant 0 : index
    %1014 = vector.load %arg5[%1013, %c0_170, %c0_171] : memref<10x8x32xf32, #tpu.memory_space<vmem>>, vector<1x8x32xf32>
    %1015 = vector.shape_cast %1014 : vector<1x8x32xf32> to vector<8x32xf32>
    %1016 = vector.shape_cast %1012 : vector<8x32xf32> to vector<1x8x32xf32>
    tpu.vector_store %arg5[%1013, %c0_170, %c0_171], %1016 {strides = array<i32>} : memref<10x8x32xf32, #tpu.memory_space<vmem>>, vector<1x8x32xf32>,
    %1017 = vector.broadcast %994 : vector<8x1xf32> to vector<8x32xf32>
    %1018 = arith.mulf %1017, %1006 : vector<8x32xf32>
    %1019 = arith.index_cast %922 : i32 to index
    %c0_172 = arith.constant 0 : index
    %c0_173 = arith.constant 0 : index
    %1020 = vector.load %arg6[%1019, %c0_172, %c0_173] : memref<10x8x32xf32, #tpu.memory_space<vmem>>, vector<1x8x32xf32>
    %1021 = vector.shape_cast %1020 : vector<1x8x32xf32> to vector<8x32xf32>
    %1022 = vector.shape_cast %1018 : vector<8x32xf32> to vector<1x8x32xf32>
    tpu.vector_store %arg6[%1019, %c0_172, %c0_173], %1022 {strides = array<i32>} : memref<10x8x32xf32, #tpu.memory_space<vmem>>, vector<1x8x32xf32>,
    %c10_i32 = arith.constant 10 : i32
    %c0_174 = arith.constant 0 : index
    %c0_175 = arith.constant 0 : index
    %c0_176 = arith.constant 0 : index
    %1023 = vector.load %arg7[%c0_174, %c0_175, %c0_176] : memref<2x8x32xf32, #tpu.memory_space<vmem>>, vector<1x8x32xf32>
    %1024 = vector.shape_cast %1023 : vector<1x8x32xf32> to vector<8x32xf32>
    %1025 = vector.shape_cast %998 : vector<8x32xf32> to vector<1x8x32xf32>
    tpu.vector_store %arg7[%c0_174, %c0_175, %c0_176], %1025 {strides = array<i32>} : memref<2x8x32xf32, #tpu.memory_space<vmem>>, vector<1x8x32xf32>,
    %c1 = arith.constant 1 : index
    %c0_177 = arith.constant 0 : index
    %c0_178 = arith.constant 0 : index
    %1026 = vector.load %arg7[%c1, %c0_177, %c0_178] : memref<2x8x32xf32, #tpu.memory_space<vmem>>, vector<1x8x32xf32>
    %1027 = vector.shape_cast %1026 : vector<1x8x32xf32> to vector<8x32xf32>
    %1028 = vector.shape_cast %1006 : vector<8x32xf32> to vector<1x8x32xf32>
    tpu.vector_store %arg7[%c1, %c0_177, %c0_178], %1028 {strides = array<i32>} : memref<2x8x32xf32, #tpu.memory_space<vmem>>, vector<1x8x32xf32>,
    %c0_179 = arith.constant 0 : index
    %c0_180 = arith.constant 0 : index
    %c0_181 = arith.constant 0 : index
    %1029 = vector.load %arg8[%c0_179, %c0_180, %c0_181] : memref<2x8x32xf32, #tpu.memory_space<vmem>>, vector<1x8x32xf32>
    %1030 = vector.shape_cast %1029 : vector<1x8x32xf32> to vector<8x32xf32>
    %1031 = vector.shape_cast %1002 : vector<8x32xf32> to vector<1x8x32xf32>
    tpu.vector_store %arg8[%c0_179, %c0_180, %c0_181], %1031 {strides = array<i32>} : memref<2x8x32xf32, #tpu.memory_space<vmem>>, vector<1x8x32xf32>,
    %c1_182 = arith.constant 1 : index
    %c0_183 = arith.constant 0 : index
    %c0_184 = arith.constant 0 : index
    %1032 = vector.load %arg8[%c1_182, %c0_183, %c0_184] : memref<2x8x32xf32, #tpu.memory_space<vmem>>, vector<1x8x32xf32>
    %1033 = vector.shape_cast %1032 : vector<1x8x32xf32> to vector<8x32xf32>
    %1034 = vector.shape_cast %1010 : vector<8x32xf32> to vector<1x8x32xf32>
    tpu.vector_store %arg8[%c1_182, %c0_183, %c0_184], %1034 {strides = array<i32>} : memref<2x8x32xf32, #tpu.memory_space<vmem>>, vector<1x8x32xf32>,
    return
  }
}

</mosaic_0001>

<llo_original>
// kernel: tpu_custom_call.1
$region0: #{tpu_custom_call.1}
  #allocation0 [shape = 'u32[]', space=smem, size = 0x4, offset = 0x4, fixed_abs, tag = 'smem constant byte address 0x4 - core index']
  #allocation1 [shape = 'u32[144,128]{1,0:T(1,128)}', space=vmem, size = 0x12000, scoped, tag = 'internal scratch']
  #allocation2 [shape = 'f32[80,128]{1,0:T(8,128)}', space=vmem, size = 0xa000, scoped, tag = 'scratch operand']
  #allocation3 [shape = 'f32[80,128]{1,0:T(8,128)}', space=vmem, size = 0xa000, scoped, tag = 'scratch operand']
  %s0 = inlined_call_operand.vmem [shape: bf16[80,32], index: 0, kind: input, shape index: {}]
  %s1 = inlined_call_operand.vmem [shape: s32[8,1], index: 1, kind: input, shape index: {}]
  %s2 = inlined_call_operand.vmem [shape: bf16[32,256], index: 2, kind: input, shape index: {}]
  %s3 = inlined_call_operand.hbm [shape: f32[64,256], index: 3, kind: input, shape index: {}]
  %s4 = inlined_call_operand.vmem [shape: f32[1,256], index: 4, kind: input, shape index: {}]
  %s5 = inlined_call_operand.hbm [shape: f32[10,8,32], index: 5, kind: output, shape index: {0}]
  %s6 = inlined_call_operand.hbm [shape: f32[10,8,32], index: 6, kind: output, shape index: {1}]
  %s7 = inlined_call_operand.hbm [shape: f32[2,8,32], index: 7, kind: output, shape index: {2}]
  %s8 = inlined_call_operand.hbm [shape: f32[2,8,32], index: 8, kind: output, shape index: {3}]
  %9 = xla_tuple %s5, %s6, %s7, %s8
  %s10 = sld [smem:[#allocation0]]
  $region58: #{tpu_custom_call.1} parent=0
    _
  %s12 = ssub.s32 1, %s10
  %s13 = scalar_select 0, %s12, %s10
  $region1: #{tpu_custom_call.1} parent=0
    #allocation4 [shape = 'u8[65536]{0}', space=vmem, size = 0x10000, scoped, tag = 'input window, operand 3, single buffered']
    #allocation5 [shape = 's32[1]{0}', space=sflag, size = 0x4, scoped, tag = 'scoped memory for tpu_custom_call.1']
    #allocation6 [shape = 's32[1]{0}', space=sflag, size = 0x4, scoped, tag = 'scoped memory for tpu_custom_call.1']
    #allocation7 [shape = 'u8[40960]{0}', space=vmem, size = 0xa000, scoped, tag = 'output window, operand 0, single buffered']
    #allocation8 [shape = 'u8[40960]{0}', space=vmem, size = 0xa000, scoped, tag = 'output window, operand 1, single buffered']
    #allocation9 [shape = 's32[1]{0}', space=sflag, size = 0x4, scoped, tag = 'scoped memory for tpu_custom_call.1']
    #allocation10 [shape = 'u8[8192]{0}', space=vmem, size = 0x2000, scoped, tag = 'output window, operand 2, single buffered']
    #allocation11 [shape = 'u8[8192]{0}', space=vmem, size = 0x2000, scoped, tag = 'output window, operand 3, single buffered']
    #allocation12 [shape = 's32[1]{0}', space=sflag, size = 0x4, scoped, tag = 'scoped memory for tpu_custom_call.1']
    %14 = vsyncpa [#allocation5], 0
    %15 = vsyncpa [#allocation6], 0
    %16 = vsyncpa [#allocation9], 0
    %17 = vsyncpa [#allocation12], 0
    // Predicated region
    $region2: #{tpu_custom_call.1} parent=1 // pred_check
      _
    $region3: #{tpu_custom_call.1} parent=1 // pred_check_branch
      %19 = sbr.rel (0) target = $region5
    $region4: #{tpu_custom_call.1} parent=1 // pred_region
      _
    $region5: #{tpu_custom_call.1} parent=1 // pred_fallthru
      _
    // Predicated region
    $region6: #{tpu_custom_call.1} parent=1 // pred_check
      _
    $region7: #{tpu_custom_call.1} parent=1 // pred_check_branch
      %21 = sbr.rel (0) target = $region9
    $region8: #{tpu_custom_call.1} parent=1 // pred_region
      _
    $region9: #{tpu_custom_call.1} parent=1 // pred_fallthru
      _
    // Predicated region
    $region10: #{tpu_custom_call.1} parent=1 // pred_check
      _
    $region11: #{tpu_custom_call.1} parent=1 // pred_check_branch
      %23 = sbr.rel (0) target = $region13
    $region12: #{tpu_custom_call.1} parent=1 // pred_region
      _
    $region13: #{tpu_custom_call.1} parent=1 // pred_fallthru
      _
    // Predicated region
    $region14: #{tpu_custom_call.1} parent=1 // pred_check
      _
    $region15: #{tpu_custom_call.1} parent=1 // pred_check_branch
      %25 = sbr.rel (0) target = $region17
    $region16: #{tpu_custom_call.1} parent=1 // pred_region
      %s27 = ssub.s32 2048, 2048
      %28 = vsyncadd [#allocation5], %s27
      %s29 = sshll.u32 [#allocation4], 4
      %s30 = int_to_ptr.vmem [resolvable:$true] %s29
      %35 = dma.hbm_to_vmem [thread:$0]  %s3, 2048, %s30, [#allocation5], 256, 256, 16
    $region17: #{tpu_custom_call.1} parent=1 // pred_fallthru
      _
    // Predicated region
    $region18: #{tpu_custom_call.1} parent=1 // pred_check
      _
    $region19: #{tpu_custom_call.1} parent=1 // pred_check_branch
      %37 = sbr.rel (0) target = $region21
    $region20: #{tpu_custom_call.1} parent=1 // pred_region
      _
    $region21: #{tpu_custom_call.1} parent=1 // pred_fallthru
      _
    // Predicated region
    $region22: #{tpu_custom_call.1} parent=1 // pred_check
      _
    $region23: #{tpu_custom_call.1} parent=1 // pred_check_branch
      %39 = sbr.rel (0) target = $region25
    $region24: #{tpu_custom_call.1} parent=1 // pred_region
      %40 = dma.done [#allocation5], 2048
    $region25: #{tpu_custom_call.1} parent=1 // pred_fallthru
      _
    %v42 = vld [vmem:[%s0] sm:$0xf]
    %v43 = vld [vmem:[%s0 + $0x4] sm:$0xf]
    %v44 = vld [vmem:[%s0 + $0x8] sm:$0xf]
    %v45 = vld [vmem:[%s0 + $0xc] sm:$0xf]
    %v46 = vld [vmem:[%s0 + $0x10] sm:$0xf]
    %v47 = vld [vmem:[%s0 + $0x14] sm:$0xf]
    %v48 = vld [vmem:[%s0 + $0x18] sm:$0xf]
    %v49 = vld [vmem:[%s0 + $0x1c] sm:$0xf]
    %v50 = vld [vmem:[%s0 + $0x20] sm:$0xf]
    %v51 = vld [vmem:[%s0 + $0x24] sm:$0xf]
    %v52 = vld [vmem:[%s2] sm:$0xff]
    %v53 = vld [vmem:[%s2 + $0x8] sm:$0xff]
    %v54 = vld [vmem:[%s2 + $0x10] sm:$0xff]
    %v55 = vld [vmem:[%s2 + $0x18] sm:$0xff]
    %v56 = vld [vmem:[%s4] sm:$0x3]
    %v58 = vlaneseq
    %v59 = vshrl.u32 %v58, 7
    %v60 = vsub.s32 0, %v59
    %v61 = vrot.slane %v56, %v60
    %v62 = vlaneseq
    %v63 = vshrl.u32 %v62, 7
    %v64 = vsub.s32 1, %v63
    %v65 = vrot.slane %v56, %v64
    %v78 = vunpack.c.l.b16 %v42
    %v79 = vunpack.c.l.b16 %v43
    %v80 = vunpack.c.l.b16 %v44
    %v81 = vunpack.c.l.b16 %v45
    %v82 = vunpack.c.l.b16 %v46
    %v83 = vunpack.c.l.b16 %v47
    %v84 = vunpack.c.l.b16 %v48
    %v85 = vunpack.c.l.b16 %v49
    %v86 = vunpack.c.l.b16 %v50
    %v87 = vunpack.c.l.b16 %v51
    %v88 = vpack.c.b16 %v79, %v78
    %v89 = vpack.c.b16 %v81, %v80
    %v90 = vpack.c.b16 %v83, %v82
    %v91 = vpack.c.b16 %v85, %v84
    %v92 = vpack.c.b16 %v87, %v86
    %v97 = vunpack.c.l.b16 %v52
    %v98 = vunpack.c.h.b16 %v52
    %v99 = vunpack.c.l.b16 %v53
    %v100 = vunpack.c.h.b16 %v53
    %v101 = vunpack.c.l.b16 %v54
    %v102 = vunpack.c.h.b16 %v54
    %v103 = vunpack.c.l.b16 %v55
    %v104 = vunpack.c.h.b16 %v55
    %v105 = vpack.c.b16 %v99, %v97
    %v106 = vpack.c.b16 %v100, %v98
    %v107 = vpack.c.b16 %v103, %v101
    %v108 = vpack.c.b16 %v104, %v102
    %vm113 = vcmask 261120
    %v115 = vsel %vm113, %v88, 0
    %v118 = vsel %vm113, %v89, 0
    %v121 = vsel %vm113, %v90, 0
    %v124 = vsel %vm113, %v91, 0
    %v127 = vsel %vm113, %v92, 0
    %129 = vmatprep.subr.bf16.mxu0 0
    %130 = vmatpush1.bf16.msra.mxu0 0
    %131 = vmatprep.subr.bf16.mxu0 0
    %132 = vmatpush1.bf16.msra.mxu0 0
    %133 = vmatprep.subr.bf16.mxu0 0
    %134 = vmatpush1.bf16.msra.mxu0 0
    %135 = vmatprep.subr.bf16.mxu0 0
    %136 = vmatpush1.bf16.msra.mxu0 0
    %137 = vmatprep.subr.bf16.mxu0 0
    %138 = vmatpush1.bf16.msra.mxu0 0
    %139 = vmatprep.subr.bf16.mxu0 0
    %140 = vmatpush1.bf16.msra.mxu0 0
    %141 = vmatprep.subr.bf16.mxu0 %v108
    %142 = vmatpush1.bf16.msra.mxu0 %v107
    %143 = vmatprep.subr.bf16.mxu0 %v106
    %144 = vmatpush1.bf16.msra.mxu0 %v105
    %145 = vmatprep.subr.bf16.mxu0 0
    %146 = vmatpush2.bf16.msra.mxu0 0
    %147 = vmatprep.subr.bf16.mxu0 0
    %148 = vmatpush2.bf16.msra.mxu0 0
    %149 = vmatprep.subr.bf16.mxu0 0
    %150 = vmatpush2.bf16.msra.mxu0 0
    %151 = vmatprep.subr.bf16.mxu0 0
    %152 = vmatpush2.bf16.msra.mxu0 0
    %153 = vmatprep.subr.bf16.mxu0 0
    %154 = vmatpush2.bf16.msra.mxu0 0
    %155 = vmatprep.subr.bf16.mxu0 0
    %156 = vmatpush2.bf16.msra.mxu0 0
    %157 = vmatprep.subr.bf16.mxu0 0
    %158 = vmatpush2.bf16.msra.mxu0 0
    %159 = vmatprep.subr.bf16.mxu0 0
    %160 = vmatpush2.bf16.msra.mxu0 0
    %161 = vmatprep.mubr.bf16.mxu0 0
    %162 = vmatmul.mubr.bf16.gmra.mxu0 %v115
    %v163 = vpop.f32.mrf.mxu0
    %v164 = vadd.f32 %v61, %v163
    %v165 = vpop.f32.mrf.mxu0
    %v166 = vadd.f32 %v65, %v165
    %v167 = vpop.f32.mrf.mxu0
    %v168 = vadd.f32 %v61, %v167
    %v169 = vpop.f32.mrf.mxu0
    %v170 = vadd.f32 %v65, %v169
    %171 = vmatprep.mubr.bf16.mxu0 0
    %172 = vmatmul.mubr.bf16.gmra.mxu0 %v118
    %v173 = vpop.f32.mrf.mxu0
    %v174 = vadd.f32 %v61, %v173
    %v175 = vpop.f32.mrf.mxu0
    %v176 = vadd.f32 %v65, %v175
    %v177 = vpop.f32.mrf.mxu0
    %v178 = vadd.f32 %v61, %v177
    %v179 = vpop.f32.mrf.mxu0
    %v180 = vadd.f32 %v65, %v179
    %181 = vmatprep.mubr.bf16.mxu0 0
    %182 = vmatmul.mubr.bf16.gmra.mxu0 %v121
    %v183 = vpop.f32.mrf.mxu0
    %v184 = vadd.f32 %v61, %v183
    %v185 = vpop.f32.mrf.mxu0
    %v186 = vadd.f32 %v65, %v185
    %v187 = vpop.f32.mrf.mxu0
    %v188 = vadd.f32 %v61, %v187
    %v189 = vpop.f32.mrf.mxu0
    %v190 = vadd.f32 %v65, %v189
    %191 = vmatprep.mubr.bf16.mxu0 0
    %192 = vmatmul.mubr.bf16.gmra.mxu0 %v124
    %v193 = vpop.f32.mrf.mxu0
    %v194 = vadd.f32 %v61, %v193
    %v195 = vpop.f32.mrf.mxu0
    %v196 = vadd.f32 %v65, %v195
    %v197 = vpop.f32.mrf.mxu0
    %v198 = vadd.f32 %v61, %v197
    %v199 = vpop.f32.mrf.mxu0
    %v200 = vadd.f32 %v65, %v199
    %201 = vmatprep.mubr.bf16.mxu0 0
    %202 = vmatmul.mubr.bf16.gmra.mxu0 %v127
    %v203 = vpop.f32.mrf.mxu0
    %v204 = vadd.f32 %v61, %v203
    %v205 = vpop.f32.mrf.mxu0
    %v206 = vadd.f32 %v65, %v205
    %v207 = vpop.f32.mrf.mxu0
    %v208 = vadd.f32 %v61, %v207
    %v209 = vpop.f32.mrf.mxu0
    %v210 = vadd.f32 %v65, %v209
    %211 = vdwg.mxu0
    %212 = vst [vmem:[#allocation2] sm:$0xff] %v164
    %213 = vst [vmem:[#allocation2 + $0x8] sm:$0xff] %v168
    %214 = vst [vmem:[#allocation2 + $0x10] sm:$0xff] %v174
    %215 = vst [vmem:[#allocation2 + $0x18] sm:$0xff] %v178
    %216 = vst [vmem:[#allocation2 + $0x20] sm:$0xff] %v184
    %217 = vst [vmem:[#allocation2 + $0x28] sm:$0xff] %v188
    %218 = vst [vmem:[#allocation2 + $0x30] sm:$0xff] %v194
    %219 = vst [vmem:[#allocation2 + $0x38] sm:$0xff] %v198
    %220 = vst [vmem:[#allocation2 + $0x40] sm:$0xff] %v204
    %221 = vst [vmem:[#allocation2 + $0x48] sm:$0xff] %v208
    %222 = vst [vmem:[#allocation3] sm:$0xff] %v166
    %223 = vst [vmem:[#allocation3 + $0x8] sm:$0xff] %v170
    %224 = vst [vmem:[#allocation3 + $0x10] sm:$0xff] %v176
    %225 = vst [vmem:[#allocation3 + $0x18] sm:$0xff] %v180
    %226 = vst [vmem:[#allocation3 + $0x20] sm:$0xff] %v186
    %227 = vst [vmem:[#allocation3 + $0x28] sm:$0xff] %v190
    %228 = vst [vmem:[#allocation3 + $0x30] sm:$0xff] %v196
    %229 = vst [vmem:[#allocation3 + $0x38] sm:$0xff] %v200
    %230 = vst [vmem:[#allocation3 + $0x40] sm:$0xff] %v206
    %231 = vst [vmem:[#allocation3 + $0x48] sm:$0xff] %v210
    %v232 = vld [vmem:[#allocation4] sm:$0xff]
    %v233 = vld [vmem:[#allocation4 + $0x8] sm:$0xff]
    %v234 = vld [vmem:[#allocation4 + $0x10] sm:$0xff]
    %v235 = vld [vmem:[#allocation4 + $0x18] sm:$0xff]
    %v236 = vld [vmem:[#allocation4 + $0x20] sm:$0xff]
    %v237 = vld [vmem:[#allocation4 + $0x28] sm:$0xff]
    %v238 = vld [vmem:[#allocation4 + $0x30] sm:$0xff]
    %v239 = vld [vmem:[#allocation4 + $0x38] sm:$0xff]
    %v240 = vld [vmem:[#allocation4 + $0x40] sm:$0xff]
    %v241 = vld [vmem:[#allocation4 + $0x48] sm:$0xff]
    %v242 = vld [vmem:[#allocation4 + $0x50] sm:$0xff]
    %v243 = vld [vmem:[#allocation4 + $0x58] sm:$0xff]
    %v244 = vld [vmem:[#allocation4 + $0x60] sm:$0xff]
    %v245 = vld [vmem:[#allocation4 + $0x68] sm:$0xff]
    %v246 = vld [vmem:[#allocation4 + $0x70] sm:$0xff]
    %v247 = vld [vmem:[#allocation4 + $0x78] sm:$0xff]
    %v248 = vld [vmem:[%s1] sm:$0xff]
    %v249 = vld [vmem:[#allocation2] sm:$0xff]
    %s250 = scalar_lea.vmem [#allocation3], 72
    %v251 = vld [vmem:[%s250] sm:$0xff]
    %vm252 = vcmask 523264
    %v254 = vsel %vm252, 0.0, 0
    %256 = vmatprep.subr.mxu0 0.0
    %257 = vmatpush1.msra.mxu0 0.0
    %258 = vmatprep.subr.mxu0 0.0
    %259 = vmatpush1.msra.mxu0 0.0
    %260 = vmatprep.subr.mxu0 0.0
    %261 = vmatpush1.msra.mxu0 0.0
    %262 = vmatprep.subr.mxu0 0.0
    %263 = vmatpush1.msra.mxu0 0.0
    %264 = vmatprep.subr.mxu0 0.0
    %265 = vmatpush1.msra.mxu0 0.0
    %266 = vmatprep.subr.mxu0 0.0
    %267 = vmatpush1.msra.mxu0 0.0
    %268 = vmatprep.subr.mxu0 0.0
    %269 = vmatpush1.msra.mxu0 0.0
    %270 = vmatprep.subr.mxu0 0.0
    %271 = vmatpush1.msra.mxu0 0.0
    %272 = vmatprep.subr.mxu0 %v247
    %273 = vmatpush1.msra.mxu0 %v246
    %274 = vmatprep.subr.mxu0 %v245
    %275 = vmatpush1.msra.mxu0 %v244
    %276 = vmatprep.subr.mxu0 %v243
    %277 = vmatpush1.msra.mxu0 %v242
    %278 = vmatprep.subr.mxu0 %v241
    %279 = vmatpush1.msra.mxu0 %v240
    %280 = vmatprep.subr.mxu0 %v239
    %281 = vmatpush1.msra.mxu0 %v238
    %282 = vmatprep.subr.mxu0 %v237
    %283 = vmatpush1.msra.mxu0 %v236
    %284 = vmatprep.subr.mxu0 %v235
    %285 = vmatpush1.msra.mxu0 %v234
    %286 = vmatprep.subr.mxu0 %v233
    %287 = vmatpush1.msra.mxu0 %v232
    %288 = vmatprep.subr.mxu0 0.0
    %289 = vmatpush2.msra.mxu0 0.0
    %290 = vmatprep.subr.mxu0 0.0
    %291 = vmatpush2.msra.mxu0 0.0
    %292 = vmatprep.subr.mxu0 0.0
    %293 = vmatpush2.msra.mxu0 0.0
    %294 = vmatprep.subr.mxu0 0.0
    %295 = vmatpush2.msra.mxu0 0.0
    %296 = vmatprep.subr.mxu0 0.0
    %297 = vmatpush2.msra.mxu0 0.0
    %298 = vmatprep.subr.mxu0 0.0
    %299 = vmatpush2.msra.mxu0 0.0
    %300 = vmatprep.subr.mxu0 0.0
    %301 = vmatpush2.msra.mxu0 0.0
    %302 = vmatprep.subr.mxu0 0.0
    %303 = vmatpush2.msra.mxu0 0.0
    %304 = vmatprep.subr.mxu0 0.0
    %305 = vmatpush2.msra.mxu0 0.0
    %306 = vmatprep.subr.mxu0 0.0
    %307 = vmatpush2.msra.mxu0 0.0
    %308 = vmatprep.subr.mxu0 0.0
    %309 = vmatpush2.msra.mxu0 0.0
    %310 = vmatprep.subr.mxu0 0.0
    %311 = vmatpush2.msra.mxu0 0.0
    %312 = vmatprep.subr.mxu0 0.0
    %313 = vmatpush2.msra.mxu0 0.0
    %314 = vmatprep.subr.mxu0 0.0
    %315 = vmatpush2.msra.mxu0 0.0
    %316 = vmatprep.subr.mxu0 0.0
    %317 = vmatpush2.msra.mxu0 0.0
    %318 = vmatprep.subr.mxu0 0.0
    %319 = vmatpush2.msra.mxu0 0.0
    %320 = vmatprep.mubr.f32.mxu0 0.0
    %321 = vmatmul.mubr.f32.gmra.mxu0 %v254
    %v322 = vpop.f32.mrf.mxu0
    %v323 = vadd.f32 0.0, %v322
    %v324 = vpop.f32.mrf.mxu0
    %v325 = vadd.f32 0.0, %v324
    %326 = vdwg.mxu0
    %v327 = vadd.f32 %v249, %v323
    %v328 = vadd.f32 %v251, %v325
    %v329 = vxor.u32 %v327, 2147483648
    %v330 = vmul.f32 %v329, 1.442695
    %v331 = vpow.pop %v330
    %v332 = vadd.f32 %v331, 1.0
    %v333 = vrcp.pop %v332
    %v334 = vmul.f32 1.0, %v333
    %v335 = vtanh.pop %v327
    %v336 = vmul.f32 %v334, 0.0
    %338 = vrot.lane.b32.xlu0 %v335, 64
    %v339 = vpop.permute.xlu0 %338
    %v341 = vmul.f32 %v334, %v339
    %343 = vrot.lane.b32.xlu0 %v341, 32
    %v344 = vpop.permute.xlu0 %343
    %v346 = vadd.f32 %v336, %v344
    %v347 = vtanh.pop %v346
    %349 = vrot.lane.b32.xlu0 %v347, 64
    %v350 = vpop.permute.xlu0 %349
    %v352 = vmul.f32 %v334, %v350
    %v353 = vxor.u32 %v328, 2147483648
    %v354 = vmul.f32 %v353, 1.442695
    %v355 = vpow.pop %v354
    %v356 = vadd.f32 %v355, 1.0
    %v357 = vrcp.pop %v356
    %v358 = vmul.f32 1.0, %v357
    %v359 = vtanh.pop %v328
    %v360 = vmul.f32 %v358, 0.0
    %362 = vrot.lane.b32.xlu0 %v359, 64
    %v363 = vpop.permute.xlu0 %362
    %v365 = vmul.f32 %v358, %v363
    %367 = vrot.lane.b32.xlu0 %v365, 32
    %v368 = vpop.permute.xlu0 %367
    %v370 = vadd.f32 %v360, %v368
    %v371 = vtanh.pop %v370
    %373 = vrot.lane.b32.xlu0 %v371, 64
    %v374 = vpop.permute.xlu0 %373
    %v376 = vmul.f32 %v358, %v374
    %vm377 = vcmp.gt.s32.totalorder %v248, 0
    %v378 = vsel %vm377, 1, 0
    %v379 = vcvt.s32.f32 %v378
    %vm380 = vcmp.gt.s32.totalorder %v248, 9
    %v381 = vsel %vm380, 1, 0
    %v382 = vcvt.s32.f32 %v381
    %384 = vset.pattern.permute.xlu0 0
    %385 = vperm.xlu0 %384, %v379
    %v386 = vpop.permute.xlu0 %385
    %v388 = vmul.f32 %v386, %v352
    %v389 = vadd.f32 %v388, 0.0
    %v390 = vmul.f32 %v386, %v346
    %v391 = vadd.f32 %v390, 0.0
    %393 = vset.pattern.permute.xlu0 0
    %394 = vperm.xlu0 %393, %v382
    %v395 = vpop.permute.xlu0 %394
    %v397 = vmul.f32 %v395, %v376
    %v398 = vadd.f32 %v397, 0.0
    %v399 = vmul.f32 %v395, %v370
    %v400 = vadd.f32 %v399, 0.0
    %v401 = vmul.f32 %v386, %v389
    %403 = vrot.lane.b32.xlu0 %v401, 32
    %v404 = vpop.permute.xlu0 %403
    %406 = vst.msk [vmem:[#allocation7] sm:$0xff] %vm113, %v404
    %v407 = vmul.f32 %v395, %v398
    %409 = vrot.lane.b32.xlu0 %v407, 32
    %v410 = vpop.permute.xlu0 %409
    %s412 = scalar_lea.vmem [#allocation8], 72
    %413 = vst.msk [vmem:[%s412] sm:$0xff] %vm113, %v410
    %s414 = scalar_lea.vmem [#allocation2], 8
    %v415 = vld [vmem:[%s414] sm:$0xff]
    %s416 = scalar_lea.vmem [#allocation3], 64
    %v417 = vld [vmem:[%s416] sm:$0xff]
    %419 = vrot.lane.b32.xlu0 %v389, 32
    %v420 = vpop.permute.xlu0 %419
    %423 = vrot.lane.b32.xlu0 %v398, 64
    %v424 = vpop.permute.xlu0 %423
    %v426 = vsel %vm113, %v420, %v424
    %v428 = vsel %vm252, %v426, 0
    %430 = vmatprep.subr.mxu0 0.0
    %431 = vmatpush1.msra.mxu0 0.0
    %432 = vmatprep.subr.mxu0 0.0
    %433 = vmatpush1.msra.mxu0 0.0
    %434 = vmatprep.subr.mxu0 0.0
    %435 = vmatpush1.msra.mxu0 0.0
    %436 = vmatprep.subr.mxu0 0.0
    %437 = vmatpush1.msra.mxu0 0.0
    %438 = vmatprep.subr.mxu0 0.0
    %439 = vmatpush1.msra.mxu0 0.0
    %440 = vmatprep.subr.mxu0 0.0
    %441 = vmatpush1.msra.mxu0 0.0
    %442 = vmatprep.subr.mxu0 0.0
    %443 = vmatpush1.msra.mxu0 0.0
    %444 = vmatprep.subr.mxu0 0.0
    %445 = vmatpush1.msra.mxu0 0.0
    %446 = vmatprep.subr.mxu0 %v247
    %447 = vmatpush1.msra.mxu0 %v246
    %448 = vmatprep.subr.mxu0 %v245
    %449 = vmatpush1.msra.mxu0 %v244
    %450 = vmatprep.subr.mxu0 %v243
    %451 = vmatpush1.msra.mxu0 %v242
    %452 = vmatprep.subr.mxu0 %v241
    %453 = vmatpush1.msra.mxu0 %v240
    %454 = vmatprep.subr.mxu0 %v239
    %455 = vmatpush1.msra.mxu0 %v238
    %456 = vmatprep.subr.mxu0 %v237
    %457 = vmatpush1.msra.mxu0 %v236
    %458 = vmatprep.subr.mxu0 %v235
    %459 = vmatpush1.msra.mxu0 %v234
    %460 = vmatprep.subr.mxu0 %v233
    %461 = vmatpush1.msra.mxu0 %v232
    %462 = vmatprep.subr.mxu0 0.0
    %463 = vmatpush2.msra.mxu0 0.0
    %464 = vmatprep.subr.mxu0 0.0
    %465 = vmatpush2.msra.mxu0 0.0
    %466 = vmatprep.subr.mxu0 0.0
    %467 = vmatpush2.msra.mxu0 0.0
    %468 = vmatprep.subr.mxu0 0.0
    %469 = vmatpush2.msra.mxu0 0.0
    %470 = vmatprep.subr.mxu0 0.0
    %471 = vmatpush2.msra.mxu0 0.0
    %472 = vmatprep.subr.mxu0 0.0
    %473 = vmatpush2.msra.mxu0 0.0
    %474 = vmatprep.subr.mxu0 0.0
    %475 = vmatpush2.msra.mxu0 0.0
    %476 = vmatprep.subr.mxu0 0.0
    %477 = vmatpush2.msra.mxu0 0.0
    %478 = vmatprep.subr.mxu0 0.0
    %479 = vmatpush2.msra.mxu0 0.0
    %480 = vmatprep.subr.mxu0 0.0
    %481 = vmatpush2.msra.mxu0 0.0
    %482 = vmatprep.subr.mxu0 0.0
    %483 = vmatpush2.msra.mxu0 0.0
    %484 = vmatprep.subr.mxu0 0.0
    %485 = vmatpush2.msra.mxu0 0.0
    %486 = vmatprep.subr.mxu0 0.0
    %487 = vmatpush2.msra.mxu0 0.0
    %488 = vmatprep.subr.mxu0 0.0
    %489 = vmatpush2.msra.mxu0 0.0
    %490 = vmatprep.subr.mxu0 0.0
    %491 = vmatpush2.msra.mxu0 0.0
    %492 = vmatprep.subr.mxu0 0.0
    %493 = vmatpush2.msra.mxu0 0.0
    %494 = vmatprep.mubr.f32.mxu0 0.0
    %495 = vmatmul.mubr.f32.gmra.mxu0 %v428
    %v496 = vpop.f32.mrf.mxu0
    %v497 = vadd.f32 0.0, %v496
    %v498 = vpop.f32.mrf.mxu0
    %v499 = vadd.f32 0.0, %v498
    %500 = vdwg.mxu0
    %v501 = vadd.f32 %v415, %v497
    %v502 = vadd.f32 %v417, %v499
    %v503 = vxor.u32 %v501, 2147483648
    %v504 = vmul.f32 %v503, 1.442695
    %v505 = vpow.pop %v504
    %v506 = vadd.f32 %v505, 1.0
    %v507 = vrcp.pop %v506
    %v508 = vmul.f32 1.0, %v507
    %v509 = vtanh.pop %v501
    %v510 = vmul.f32 %v508, %v391
    %512 = vrot.lane.b32.xlu0 %v509, 64
    %v513 = vpop.permute.xlu0 %512
    %v515 = vmul.f32 %v508, %v513
    %517 = vrot.lane.b32.xlu0 %v515, 32
    %v518 = vpop.permute.xlu0 %517
    %v520 = vadd.f32 %v510, %v518
    %v521 = vtanh.pop %v520
    %523 = vrot.lane.b32.xlu0 %v521, 64
    %v524 = vpop.permute.xlu0 %523
    %v526 = vmul.f32 %v508, %v524
    %v527 = vxor.u32 %v502, 2147483648
    %v528 = vmul.f32 %v527, 1.442695
    %v529 = vpow.pop %v528
    %v530 = vadd.f32 %v529, 1.0
    %v531 = vrcp.pop %v530
    %v532 = vmul.f32 1.0, %v531
    %v533 = vtanh.pop %v502
    %v534 = vmul.f32 %v532, %v400
    %536 = vrot.lane.b32.xlu0 %v533, 64
    %v537 = vpop.permute.xlu0 %536
    %v539 = vmul.f32 %v532, %v537
    %541 = vrot.lane.b32.xlu0 %v539, 32
    %v542 = vpop.permute.xlu0 %541
    %v544 = vadd.f32 %v534, %v542
    %v545 = vtanh.pop %v544
    %547 = vrot.lane.b32.xlu0 %v545, 64
    %v548 = vpop.permute.xlu0 %547
    %v550 = vmul.f32 %v532, %v548
    %vm551 = vcmp.gt.s32.totalorder %v248, 1
    %v552 = vsel %vm551, 1, 0
    %v553 = vcvt.s32.f32 %v552
    %vm554 = vcmp.gt.s32.totalorder %v248, 8
    %v555 = vsel %vm554, 1, 0
    %v556 = vcvt.s32.f32 %v555
    %v557 = vsub.f32 %v526, %v389
    %559 = vset.pattern.permute.xlu0 0
    %560 = vperm.xlu0 %559, %v553
    %v561 = vpop.permute.xlu0 %560
    %v563 = vmul.f32 %v561, %v557
    %v564 = vadd.f32 %v389, %v563
    %v565 = vsub.f32 %v520, %v391
    %v566 = vmul.f32 %v561, %v565
    %v567 = vadd.f32 %v391, %v566
    %v568 = vsub.f32 %v550, %v398
    %570 = vset.pattern.permute.xlu0 0
    %571 = vperm.xlu0 %570, %v556
    %v572 = vpop.permute.xlu0 %571
    %v574 = vmul.f32 %v572, %v568
    %v575 = vadd.f32 %v398, %v574
    %v576 = vsub.f32 %v544, %v400
    %v577 = vmul.f32 %v572, %v576
    %v578 = vadd.f32 %v400, %v577
    %v579 = vmul.f32 %v561, %v564
    %581 = vrot.lane.b32.xlu0 %v579, 32
    %v582 = vpop.permute.xlu0 %581
    %s584 = scalar_lea.vmem [#allocation7], 8
    %585 = vst.msk [vmem:[%s584] sm:$0xff] %vm113, %v582
    %v586 = vmul.f32 %v572, %v575
    %588 = vrot.lane.b32.xlu0 %v586, 32
    %v589 = vpop.permute.xlu0 %588
    %s591 = scalar_lea.vmem [#allocation8], 64
    %592 = vst.msk [vmem:[%s591] sm:$0xff] %vm113, %v589
    %s593 = scalar_lea.vmem [#allocation2], 16
    %v594 = vld [vmem:[%s593] sm:$0xff]
    %s595 = scalar_lea.vmem [#allocation3], 56
    %v596 = vld [vmem:[%s595] sm:$0xff]
    %598 = vrot.lane.b32.xlu0 %v564, 32
    %v599 = vpop.permute.xlu0 %598
    %602 = vrot.lane.b32.xlu0 %v575, 64
    %v603 = vpop.permute.xlu0 %602
    %v605 = vsel %vm113, %v599, %v603
    %v607 = vsel %vm252, %v605, 0
    %609 = vmatprep.subr.mxu0 0.0
    %610 = vmatpush1.msra.mxu0 0.0
    %611 = vmatprep.subr.mxu0 0.0
    %612 = vmatpush1.msra.mxu0 0.0
    %613 = vmatprep.subr.mxu0 0.0
    %614 = vmatpush1.msra.mxu0 0.0
    %615 = vmatprep.subr.mxu0 0.0
    %616 = vmatpush1.msra.mxu0 0.0
    %617 = vmatprep.subr.mxu0 0.0
    %618 = vmatpush1.msra.mxu0 0.0
    %619 = vmatprep.subr.mxu0 0.0
    %620 = vmatpush1.msra.mxu0 0.0
    %621 = vmatprep.subr.mxu0 0.0
    %622 = vmatpush1.msra.mxu0 0.0
    %623 = vmatprep.subr.mxu0 0.0
    %624 = vmatpush1.msra.mxu0 0.0
    %625 = vmatprep.subr.mxu0 %v247
    %626 = vmatpush1.msra.mxu0 %v246
    %627 = vmatprep.subr.mxu0 %v245
    %628 = vmatpush1.msra.mxu0 %v244
    %629 = vmatprep.subr.mxu0 %v243
    %630 = vmatpush1.msra.mxu0 %v242
    %631 = vmatprep.subr.mxu0 %v241
    %632 = vmatpush1.msra.mxu0 %v240
    %633 = vmatprep.subr.mxu0 %v239
    %634 = vmatpush1.msra.mxu0 %v238
    %635 = vmatprep.subr.mxu0 %v237
    %636 = vmatpush1.msra.mxu0 %v236
    %637 = vmatprep.subr.mxu0 %v235
    %638 = vmatpush1.msra.mxu0 %v234
    %639 = vmatprep.subr.mxu0 %v233
    %640 = vmatpush1.msra.mxu0 %v232
    %641 = vmatprep.subr.mxu0 0.0
    %642 = vmatpush2.msra.mxu0 0.0
    %643 = vmatprep.subr.mxu0 0.0
    %644 = vmatpush2.msra.mxu0 0.0
    %645 = vmatprep.subr.mxu0 0.0
    %646 = vmatpush2.msra.mxu0 0.0
    %647 = vmatprep.subr.mxu0 0.0
    %648 = vmatpush2.msra.mxu0 0.0
    %649 = vmatprep.subr.mxu0 0.0
    %650 = vmatpush2.msra.mxu0 0.0
    %651 = vmatprep.subr.mxu0 0.0
    %652 = vmatpush2.msra.mxu0 0.0
    %653 = vmatprep.subr.mxu0 0.0
    %654 = vmatpush2.msra.mxu0 0.0
    %655 = vmatprep.subr.mxu0 0.0
    %656 = vmatpush2.msra.mxu0 0.0
    %657 = vmatprep.subr.mxu0 0.0
    %658 = vmatpush2.msra.mxu0 0.0
    %659 = vmatprep.subr.mxu0 0.0
    %660 = vmatpush2.msra.mxu0 0.0
    %661 = vmatprep.subr.mxu0 0.0
    %662 = vmatpush2.msra.mxu0 0.0
    %663 = vmatprep.subr.mxu0 0.0
    %664 = vmatpush2.msra.mxu0 0.0
    %665 = vmatprep.subr.mxu0 0.0
    %666 = vmatpush2.msra.mxu0 0.0
    %667 = vmatprep.subr.mxu0 0.0
    %668 = vmatpush2.msra.mxu0 0.0
    %669 = vmatprep.subr.mxu0 0.0
    %670 = vmatpush2.msra.mxu0 0.0
    %671 = vmatprep.subr.mxu0 0.0
    %672 = vmatpush2.msra.mxu0 0.0
    %673 = vmatprep.mubr.f32.mxu0 0.0
    %674 = vmatmul.mubr.f32.gmra.mxu0 %v607
    %v675 = vpop.f32.mrf.mxu0
    %v676 = vadd.f32 0.0, %v675
    %v677 = vpop.f32.mrf.mxu0
    %v678 = vadd.f32 0.0, %v677
    %679 = vdwg.mxu0
    %v680 = vadd.f32 %v594, %v676
    %v681 = vadd.f32 %v596, %v678
    %v682 = vxor.u32 %v680, 2147483648
    %v683 = vmul.f32 %v682, 1.442695
    %v684 = vpow.pop %v683
    %v685 = vadd.f32 %v684, 1.0
    %v686 = vrcp.pop %v685
    %v687 = vmul.f32 1.0, %v686
    %v688 = vtanh.pop %v680
    %v689 = vmul.f32 %v687, %v567
    %691 = vrot.lane.b32.xlu0 %v688, 64
    %v692 = vpop.permute.xlu0 %691
    %v694 = vmul.f32 %v687, %v692
    %696 = vrot.lane.b32.xlu0 %v694, 32
    %v697 = vpop.permute.xlu0 %696
    %v699 = vadd.f32 %v689, %v697
    %v700 = vtanh.pop %v699
    %702 = vrot.lane.b32.xlu0 %v700, 64
    %v703 = vpop.permute.xlu0 %702
    %v705 = vmul.f32 %v687, %v703
    %v706 = vxor.u32 %v681, 2147483648
    %v707 = vmul.f32 %v706, 1.442695
    %v708 = vpow.pop %v707
    %v709 = vadd.f32 %v708, 1.0
    %v710 = vrcp.pop %v709
    %v711 = vmul.f32 1.0, %v710
    %v712 = vtanh.pop %v681
    %v713 = vmul.f32 %v711, %v578
    %715 = vrot.lane.b32.xlu0 %v712, 64
    %v716 = vpop.permute.xlu0 %715
    %v718 = vmul.f32 %v711, %v716
    %720 = vrot.lane.b32.xlu0 %v718, 32
    %v721 = vpop.permute.xlu0 %720
    %v723 = vadd.f32 %v713, %v721
    %v724 = vtanh.pop %v723
    %726 = vrot.lane.b32.xlu0 %v724, 64
    %v727 = vpop.permute.xlu0 %726
    %v729 = vmul.f32 %v711, %v727
    %vm730 = vcmp.gt.s32.totalorder %v248, 2
    %v731 = vsel %vm730, 1, 0
    %v732 = vcvt.s32.f32 %v731
    %vm733 = vcmp.gt.s32.totalorder %v248, 7
    %v734 = vsel %vm733, 1, 0
    %v735 = vcvt.s32.f32 %v734
    %v736 = vsub.f32 %v705, %v564
    %738 = vset.pattern.permute.xlu0 0
    %739 = vperm.xlu0 %738, %v732
    %v740 = vpop.permute.xlu0 %739
    %v742 = vmul.f32 %v740, %v736
    %v743 = vadd.f32 %v564, %v742
    %v744 = vsub.f32 %v699, %v567
    %v745 = vmul.f32 %v740, %v744
    %v746 = vadd.f32 %v567, %v745
    %v747 = vsub.f32 %v729, %v575
    %749 = vset.pattern.permute.xlu0 0
    %750 = vperm.xlu0 %749, %v735
    %v751 = vpop.permute.xlu0 %750
    %v753 = vmul.f32 %v751, %v747
    %v754 = vadd.f32 %v575, %v753
    %v755 = vsub.f32 %v723, %v578
    %v756 = vmul.f32 %v751, %v755
    %v757 = vadd.f32 %v578, %v756
    %v758 = vmul.f32 %v740, %v743
    %760 = vrot.lane.b32.xlu0 %v758, 32
    %v761 = vpop.permute.xlu0 %760
    %s763 = scalar_lea.vmem [#allocation7], 16
    %764 = vst.msk [vmem:[%s763] sm:$0xff] %vm113, %v761
    %v765 = vmul.f32 %v751, %v754
    %767 = vrot.lane.b32.xlu0 %v765, 32
    %v768 = vpop.permute.xlu0 %767
    %s770 = scalar_lea.vmem [#allocation8], 56
    %771 = vst.msk [vmem:[%s770] sm:$0xff] %vm113, %v768
    %s772 = scalar_lea.vmem [#allocation2], 24
    %v773 = vld [vmem:[%s772] sm:$0xff]
    %s774 = scalar_lea.vmem [#allocation3], 48
    %v775 = vld [vmem:[%s774] sm:$0xff]
    %777 = vrot.lane.b32.xlu0 %v743, 32
    %v778 = vpop.permute.xlu0 %777
    %781 = vrot.lane.b32.xlu0 %v754, 64
    %v782 = vpop.permute.xlu0 %781
    %v784 = vsel %vm113, %v778, %v782
    %v786 = vsel %vm252, %v784, 0
    %788 = vmatprep.subr.mxu0 0.0
    %789 = vmatpush1.msra.mxu0 0.0
    %790 = vmatprep.subr.mxu0 0.0
    %791 = vmatpush1.msra.mxu0 0.0
    %792 = vmatprep.subr.mxu0 0.0
    %793 = vmatpush1.msra.mxu0 0.0
    %794 = vmatprep.subr.mxu0 0.0
    %795 = vmatpush1.msra.mxu0 0.0
    %796 = vmatprep.subr.mxu0 0.0
    %797 = vmatpush1.msra.mxu0 0.0
    %798 = vmatprep.subr.mxu0 0.0
    %799 = vmatpush1.msra.mxu0 0.0
    %800 = vmatprep.subr.mxu0 0.0
    %801 = vmatpush1.msra.mxu0 0.0
    %802 = vmatprep.subr.mxu0 0.0
    %803 = vmatpush1.msra.mxu0 0.0
    %804 = vmatprep.subr.mxu0 %v247
    %805 = vmatpush1.msra.mxu0 %v246
    %806 = vmatprep.subr.mxu0 %v245
    %807 = vmatpush1.msra.mxu0 %v244
    %808 = vmatprep.subr.mxu0 %v243
    %809 = vmatpush1.msra.mxu0 %v242
    %810 = vmatprep.subr.mxu0 %v241
    %811 = vmatpush1.msra.mxu0 %v240
    %812 = vmatprep.subr.mxu0 %v239
    %813 = vmatpush1.msra.mxu0 %v238
    %814 = vmatprep.subr.mxu0 %v237
    %815 = vmatpush1.msra.mxu0 %v236
    %816 = vmatprep.subr.mxu0 %v235
    %817 = vmatpush1.msra.mxu0 %v234
    %818 = vmatprep.subr.mxu0 %v233
    %819 = vmatpush1.msra.mxu0 %v232
    %820 = vmatprep.subr.mxu0 0.0
    %821 = vmatpush2.msra.mxu0 0.0
    %822 = vmatprep.subr.mxu0 0.0
    %823 = vmatpush2.msra.mxu0 0.0
    %824 = vmatprep.subr.mxu0 0.0
    %825 = vmatpush2.msra.mxu0 0.0
    %826 = vmatprep.subr.mxu0 0.0
    %827 = vmatpush2.msra.mxu0 0.0
    %828 = vmatprep.subr.mxu0 0.0
    %829 = vmatpush2.msra.mxu0 0.0
    %830 = vmatprep.subr.mxu0 0.0
    %831 = vmatpush2.msra.mxu0 0.0
    %832 = vmatprep.subr.mxu0 0.0
    %833 = vmatpush2.msra.mxu0 0.0
    %834 = vmatprep.subr.mxu0 0.0
    %835 = vmatpush2.msra.mxu0 0.0
    %836 = vmatprep.subr.mxu0 0.0
    %837 = vmatpush2.msra.mxu0 0.0
    %838 = vmatprep.subr.mxu0 0.0
    %839 = vmatpush2.msra.mxu0 0.0
    %840 = vmatprep.subr.mxu0 0.0
    %841 = vmatpush2.msra.mxu0 0.0
    %842 = vmatprep.subr.mxu0 0.0
    %843 = vmatpush2.msra.mxu0 0.0
    %844 = vmatprep.subr.mxu0 0.0
    %845 = vmatpush2.msra.mxu0 0.0
    %846 = vmatprep.subr.mxu0 0.0
    %847 = vmatpush2.msra.mxu0 0.0
    %848 = vmatprep.subr.mxu0 0.0
    %849 = vmatpush2.msra.mxu0 0.0
    %850 = vmatprep.subr.mxu0 0.0
    %851 = vmatpush2.msra.mxu0 0.0
    %852 = vmatprep.mubr.f32.mxu0 0.0
    %853 = vmatmul.mubr.f32.gmra.mxu0 %v786
    %v854 = vpop.f32.mrf.mxu0
    %v855 = vadd.f32 0.0, %v854
    %v856 = vpop.f32.mrf.mxu0
    %v857 = vadd.f32 0.0, %v856
    %858 = vdwg.mxu0
    %v859 = vadd.f32 %v773, %v855
    %v860 = vadd.f32 %v775, %v857
    %v861 = vxor.u32 %v859, 2147483648
    %v862 = vmul.f32 %v861, 1.442695
    %v863 = vpow.pop %v862
    %v864 = vadd.f32 %v863, 1.0
    %v865 = vrcp.pop %v864
    %v866 = vmul.f32 1.0, %v865
    %v867 = vtanh.pop %v859
    %v868 = vmul.f32 %v866, %v746
    %870 = vrot.lane.b32.xlu0 %v867, 64
    %v871 = vpop.permute.xlu0 %870
    %v873 = vmul.f32 %v866, %v871
    %875 = vrot.lane.b32.xlu0 %v873, 32
    %v876 = vpop.permute.xlu0 %875
    %v878 = vadd.f32 %v868, %v876
    %v879 = vtanh.pop %v878
    %881 = vrot.lane.b32.xlu0 %v879, 64
    %v882 = vpop.permute.xlu0 %881
    %v884 = vmul.f32 %v866, %v882
    %v885 = vxor.u32 %v860, 2147483648
    %v886 = vmul.f32 %v885, 1.442695
    %v887 = vpow.pop %v886
    %v888 = vadd.f32 %v887, 1.0
    %v889 = vrcp.pop %v888
    %v890 = vmul.f32 1.0, %v889
    %v891 = vtanh.pop %v860
    %v892 = vmul.f32 %v890, %v757
    %894 = vrot.lane.b32.xlu0 %v891, 64
    %v895 = vpop.permute.xlu0 %894
    %v897 = vmul.f32 %v890, %v895
    %899 = vrot.lane.b32.xlu0 %v897, 32
    %v900 = vpop.permute.xlu0 %899
    %v902 = vadd.f32 %v892, %v900
    %v903 = vtanh.pop %v902
    %905 = vrot.lane.b32.xlu0 %v903, 64
    %v906 = vpop.permute.xlu0 %905
    %v908 = vmul.f32 %v890, %v906
    %vm909 = vcmp.gt.s32.totalorder %v248, 3
    %v910 = vsel %vm909, 1, 0
    %v911 = vcvt.s32.f32 %v910
    %vm912 = vcmp.gt.s32.totalorder %v248, 6
    %v913 = vsel %vm912, 1, 0
    %v914 = vcvt.s32.f32 %v913
    %v915 = vsub.f32 %v884, %v743
    %917 = vset.pattern.permute.xlu0 0
    %918 = vperm.xlu0 %917, %v911
    %v919 = vpop.permute.xlu0 %918
    %v921 = vmul.f32 %v919, %v915
    %v922 = vadd.f32 %v743, %v921
    %v923 = vsub.f32 %v878, %v746
    %v924 = vmul.f32 %v919, %v923
    %v925 = vadd.f32 %v746, %v924
    %v926 = vsub.f32 %v908, %v754
    %928 = vset.pattern.permute.xlu0 0
    %929 = vperm.xlu0 %928, %v914
    %v930 = vpop.permute.xlu0 %929
    %v932 = vmul.f32 %v930, %v926
    %v933 = vadd.f32 %v754, %v932
    %v934 = vsub.f32 %v902, %v757
    %v935 = vmul.f32 %v930, %v934
    %v936 = vadd.f32 %v757, %v935
    %v937 = vmul.f32 %v919, %v922
    %939 = vrot.lane.b32.xlu0 %v937, 32
    %v940 = vpop.permute.xlu0 %939
    %s942 = scalar_lea.vmem [#allocation7], 24
    %943 = vst.msk [vmem:[%s942] sm:$0xff] %vm113, %v940
    %v944 = vmul.f32 %v930, %v933
    %946 = vrot.lane.b32.xlu0 %v944, 32
    %v947 = vpop.permute.xlu0 %946
    %s949 = scalar_lea.vmem [#allocation8], 48
    %950 = vst.msk [vmem:[%s949] sm:$0xff] %vm113, %v947
    %s951 = scalar_lea.vmem [#allocation2], 32
    %v952 = vld [vmem:[%s951] sm:$0xff]
    %s953 = scalar_lea.vmem [#allocation3], 40
    %v954 = vld [vmem:[%s953] sm:$0xff]
    %956 = vrot.lane.b32.xlu0 %v922, 32
    %v957 = vpop.permute.xlu0 %956
    %960 = vrot.lane.b32.xlu0 %v933, 64
    %v961 = vpop.permute.xlu0 %960
    %v963 = vsel %vm113, %v957, %v961
    %v965 = vsel %vm252, %v963, 0
    %967 = vmatprep.subr.mxu0 0.0
    %968 = vmatpush1.msra.mxu0 0.0
    %969 = vmatprep.subr.mxu0 0.0
    %970 = vmatpush1.msra.mxu0 0.0
    %971 = vmatprep.subr.mxu0 0.0
    %972 = vmatpush1.msra.mxu0 0.0
    %973 = vmatprep.subr.mxu0 0.0
    %974 = vmatpush1.msra.mxu0 0.0
    %975 = vmatprep.subr.mxu0 0.0
    %976 = vmatpush1.msra.mxu0 0.0
    %977 = vmatprep.subr.mxu0 0.0
    %978 = vmatpush1.msra.mxu0 0.0
    %979 = vmatprep.subr.mxu0 0.0
    %980 = vmatpush1.msra.mxu0 0.0
    %981 = vmatprep.subr.mxu0 0.0
    %982 = vmatpush1.msra.mxu0 0.0
    %983 = vmatprep.subr.mxu0 %v247
    %984 = vmatpush1.msra.mxu0 %v246
    %985 = vmatprep.subr.mxu0 %v245
    %986 = vmatpush1.msra.mxu0 %v244
    %987 = vmatprep.subr.mxu0 %v243
    %988 = vmatpush1.msra.mxu0 %v242
    %989 = vmatprep.subr.mxu0 %v241
    %990 = vmatpush1.msra.mxu0 %v240
    %991 = vmatprep.subr.mxu0 %v239
    %992 = vmatpush1.msra.mxu0 %v238
    %993 = vmatprep.subr.mxu0 %v237
    %994 = vmatpush1.msra.mxu0 %v236
    %995 = vmatprep.subr.mxu0 %v235
    %996 = vmatpush1.msra.mxu0 %v234
    %997 = vmatprep.subr.mxu0 %v233
    %998 = vmatpush1.msra.mxu0 %v232
    %999 = vmatprep.subr.mxu0 0.0
    %1000 = vmatpush2.msra.mxu0 0.0
    %1001 = vmatprep.subr.mxu0 0.0
    %1002 = vmatpush2.msra.mxu0 0.0
    %1003 = vmatprep.subr.mxu0 0.0
    %1004 = vmatpush2.msra.mxu0 0.0
    %1005 = vmatprep.subr.mxu0 0.0
    %1006 = vmatpush2.msra.mxu0 0.0
    %1007 = vmatprep.subr.mxu0 0.0
    %1008 = vmatpush2.msra.mxu0 0.0
    %1009 = vmatprep.subr.mxu0 0.0
    %1010 = vmatpush2.msra.mxu0 0.0
    %1011 = vmatprep.subr.mxu0 0.0
    %1012 = vmatpush2.msra.mxu0 0.0
    %1013 = vmatprep.subr.mxu0 0.0
    %1014 = vmatpush2.msra.mxu0 0.0
    %1015 = vmatprep.subr.mxu0 0.0
    %1016 = vmatpush2.msra.mxu0 0.0
    %1017 = vmatprep.subr.mxu0 0.0
    %1018 = vmatpush2.msra.mxu0 0.0
    %1019 = vmatprep.subr.mxu0 0.0
    %1020 = vmatpush2.msra.mxu0 0.0
    %1021 = vmatprep.subr.mxu0 0.0
    %1022 = vmatpush2.msra.mxu0 0.0
    %1023 = vmatprep.subr.mxu0 0.0
    %1024 = vmatpush2.msra.mxu0 0.0
    %1025 = vmatprep.subr.mxu0 0.0
    %1026 = vmatpush2.msra.mxu0 0.0
    %1027 = vmatprep.subr.mxu0 0.0
    %1028 = vmatpush2.msra.mxu0 0.0
    %1029 = vmatprep.subr.mxu0 0.0
    %1030 = vmatpush2.msra.mxu0 0.0
    %1031 = vmatprep.mubr.f32.mxu0 0.0
    %1032 = vmatmul.mubr.f32.gmra.mxu0 %v965
    %v1033 = vpop.f32.mrf.mxu0
    %v1034 = vadd.f32 0.0, %v1033
    %v1035 = vpop.f32.mrf.mxu0
    %v1036 = vadd.f32 0.0, %v1035
    %1037 = vdwg.mxu0
    %v1038 = vadd.f32 %v952, %v1034
    %v1039 = vadd.f32 %v954, %v1036
    %v1040 = vxor.u32 %v1038, 2147483648
    %v1041 = vmul.f32 %v1040, 1.442695
    %v1042 = vpow.pop %v1041
    %v1043 = vadd.f32 %v1042, 1.0
    %v1044 = vrcp.pop %v1043
    %v1045 = vmul.f32 1.0, %v1044
    %v1046 = vtanh.pop %v1038
    %v1047 = vmul.f32 %v1045, %v925
    %1049 = vrot.lane.b32.xlu0 %v1046, 64
    %v1050 = vpop.permute.xlu0 %1049
    %v1052 = vmul.f32 %v1045, %v1050
    %1054 = vrot.lane.b32.xlu0 %v1052, 32
    %v1055 = vpop.permute.xlu0 %1054
    %v1057 = vadd.f32 %v1047, %v1055
    %v1058 = vtanh.pop %v1057
    %1060 = vrot.lane.b32.xlu0 %v1058, 64
    %v1061 = vpop.permute.xlu0 %1060
    %v1063 = vmul.f32 %v1045, %v1061
    %v1064 = vxor.u32 %v1039, 2147483648
    %v1065 = vmul.f32 %v1064, 1.442695
    %v1066 = vpow.pop %v1065
    %v1067 = vadd.f32 %v1066, 1.0
    %v1068 = vrcp.pop %v1067
    %v1069 = vmul.f32 1.0, %v1068
    %v1070 = vtanh.pop %v1039
    %v1071 = vmul.f32 %v1069, %v936
    %1073 = vrot.lane.b32.xlu0 %v1070, 64
    %v1074 = vpop.permute.xlu0 %1073
    %v1076 = vmul.f32 %v1069, %v1074
    %1078 = vrot.lane.b32.xlu0 %v1076, 32
    %v1079 = vpop.permute.xlu0 %1078
    %v1081 = vadd.f32 %v1071, %v1079
    %v1082 = vtanh.pop %v1081
    %1084 = vrot.lane.b32.xlu0 %v1082, 64
    %v1085 = vpop.permute.xlu0 %1084
    %v1087 = vmul.f32 %v1069, %v1085
    %vm1088 = vcmp.gt.s32.totalorder %v248, 4
    %v1089 = vsel %vm1088, 1, 0
    %v1090 = vcvt.s32.f32 %v1089
    %vm1091 = vcmp.gt.s32.totalorder %v248, 5
    %v1092 = vsel %vm1091, 1, 0
    %v1093 = vcvt.s32.f32 %v1092
    %v1094 = vsub.f32 %v1063, %v922
    %1096 = vset.pattern.permute.xlu0 0
    %1097 = vperm.xlu0 %1096, %v1090
    %v1098 = vpop.permute.xlu0 %1097
    %v1100 = vmul.f32 %v1098, %v1094
    %v1101 = vadd.f32 %v922, %v1100
    %v1102 = vsub.f32 %v1057, %v925
    %v1103 = vmul.f32 %v1098, %v1102
    %v1104 = vadd.f32 %v925, %v1103
    %v1105 = vsub.f32 %v1087, %v933
    %1107 = vset.pattern.permute.xlu0 0
    %1108 = vperm.xlu0 %1107, %v1093
    %v1109 = vpop.permute.xlu0 %1108
    %v1111 = vmul.f32 %v1109, %v1105
    %v1112 = vadd.f32 %v933, %v1111
    %v1113 = vsub.f32 %v1081, %v936
    %v1114 = vmul.f32 %v1109, %v1113
    %v1115 = vadd.f32 %v936, %v1114
    %v1116 = vmul.f32 %v1098, %v1101
    %1118 = vrot.lane.b32.xlu0 %v1116, 32
    %v1119 = vpop.permute.xlu0 %1118
    %s1121 = scalar_lea.vmem [#allocation7], 32
    %1122 = vst.msk [vmem:[%s1121] sm:$0xff] %vm113, %v1119
    %v1123 = vmul.f32 %v1109, %v1112
    %1125 = vrot.lane.b32.xlu0 %v1123, 32
    %v1126 = vpop.permute.xlu0 %1125
    %s1128 = scalar_lea.vmem [#allocation8], 40
    %1129 = vst.msk [vmem:[%s1128] sm:$0xff] %vm113, %v1126
    %s1130 = scalar_lea.vmem [#allocation2], 40
    %v1131 = vld [vmem:[%s1130] sm:$0xff]
    %s1132 = scalar_lea.vmem [#allocation3], 32
    %v1133 = vld [vmem:[%s1132] sm:$0xff]
    %1135 = vrot.lane.b32.xlu0 %v1101, 32
    %v1136 = vpop.permute.xlu0 %1135
    %1139 = vrot.lane.b32.xlu0 %v1112, 64
    %v1140 = vpop.permute.xlu0 %1139
    %v1142 = vsel %vm113, %v1136, %v1140
    %v1144 = vsel %vm252, %v1142, 0
    %1146 = vmatprep.subr.mxu0 0.0
    %1147 = vmatpush1.msra.mxu0 0.0
    %1148 = vmatprep.subr.mxu0 0.0
    %1149 = vmatpush1.msra.mxu0 0.0
    %1150 = vmatprep.subr.mxu0 0.0
    %1151 = vmatpush1.msra.mxu0 0.0
    %1152 = vmatprep.subr.mxu0 0.0
    %1153 = vmatpush1.msra.mxu0 0.0
    %1154 = vmatprep.subr.mxu0 0.0
    %1155 = vmatpush1.msra.mxu0 0.0
    %1156 = vmatprep.subr.mxu0 0.0
    %1157 = vmatpush1.msra.mxu0 0.0
    %1158 = vmatprep.subr.mxu0 0.0
    %1159 = vmatpush1.msra.mxu0 0.0
    %1160 = vmatprep.subr.mxu0 0.0
    %1161 = vmatpush1.msra.mxu0 0.0
    %1162 = vmatprep.subr.mxu0 %v247
    %1163 = vmatpush1.msra.mxu0 %v246
    %1164 = vmatprep.subr.mxu0 %v245
    %1165 = vmatpush1.msra.mxu0 %v244
    %1166 = vmatprep.subr.mxu0 %v243
    %1167 = vmatpush1.msra.mxu0 %v242
    %1168 = vmatprep.subr.mxu0 %v241
    %1169 = vmatpush1.msra.mxu0 %v240
    %1170 = vmatprep.subr.mxu0 %v239
    %1171 = vmatpush1.msra.mxu0 %v238
    %1172 = vmatprep.subr.mxu0 %v237
    %1173 = vmatpush1.msra.mxu0 %v236
    %1174 = vmatprep.subr.mxu0 %v235
    %1175 = vmatpush1.msra.mxu0 %v234
    %1176 = vmatprep.subr.mxu0 %v233
    %1177 = vmatpush1.msra.mxu0 %v232
    %1178 = vmatprep.subr.mxu0 0.0
    %1179 = vmatpush2.msra.mxu0 0.0
    %1180 = vmatprep.subr.mxu0 0.0
    %1181 = vmatpush2.msra.mxu0 0.0
    %1182 = vmatprep.subr.mxu0 0.0
    %1183 = vmatpush2.msra.mxu0 0.0
    %1184 = vmatprep.subr.mxu0 0.0
    %1185 = vmatpush2.msra.mxu0 0.0
    %1186 = vmatprep.subr.mxu0 0.0
    %1187 = vmatpush2.msra.mxu0 0.0
    %1188 = vmatprep.subr.mxu0 0.0
    %1189 = vmatpush2.msra.mxu0 0.0
    %1190 = vmatprep.subr.mxu0 0.0
    %1191 = vmatpush2.msra.mxu0 0.0
    %1192 = vmatprep.subr.mxu0 0.0
    %1193 = vmatpush2.msra.mxu0 0.0
    %1194 = vmatprep.subr.mxu0 0.0
    %1195 = vmatpush2.msra.mxu0 0.0
    %1196 = vmatprep.subr.mxu0 0.0
    %1197 = vmatpush2.msra.mxu0 0.0
    %1198 = vmatprep.subr.mxu0 0.0
    %1199 = vmatpush2.msra.mxu0 0.0
    %1200 = vmatprep.subr.mxu0 0.0
    %1201 = vmatpush2.msra.mxu0 0.0
    %1202 = vmatprep.subr.mxu0 0.0
    %1203 = vmatpush2.msra.mxu0 0.0
    %1204 = vmatprep.subr.mxu0 0.0
    %1205 = vmatpush2.msra.mxu0 0.0
    %1206 = vmatprep.subr.mxu0 0.0
    %1207 = vmatpush2.msra.mxu0 0.0
    %1208 = vmatprep.subr.mxu0 0.0
    %1209 = vmatpush2.msra.mxu0 0.0
    %1210 = vmatprep.mubr.f32.mxu0 0.0
    %1211 = vmatmul.mubr.f32.gmra.mxu0 %v1144
    %v1212 = vpop.f32.mrf.mxu0
    %v1213 = vadd.f32 0.0, %v1212
    %v1214 = vpop.f32.mrf.mxu0
    %v1215 = vadd.f32 0.0, %v1214
    %1216 = vdwg.mxu0
    %v1217 = vadd.f32 %v1131, %v1213
    %v1218 = vadd.f32 %v1133, %v1215
    %v1219 = vxor.u32 %v1217, 2147483648
    %v1220 = vmul.f32 %v1219, 1.442695
    %v1221 = vpow.pop %v1220
    %v1222 = vadd.f32 %v1221, 1.0
    %v1223 = vrcp.pop %v1222
    %v1224 = vmul.f32 1.0, %v1223
    %v1225 = vtanh.pop %v1217
    %v1226 = vmul.f32 %v1224, %v1104
    %1228 = vrot.lane.b32.xlu0 %v1225, 64
    %v1229 = vpop.permute.xlu0 %1228
    %v1231 = vmul.f32 %v1224, %v1229
    %1233 = vrot.lane.b32.xlu0 %v1231, 32
    %v1234 = vpop.permute.xlu0 %1233
    %v1236 = vadd.f32 %v1226, %v1234
    %v1237 = vtanh.pop %v1236
    %1239 = vrot.lane.b32.xlu0 %v1237, 64
    %v1240 = vpop.permute.xlu0 %1239
    %v1242 = vmul.f32 %v1224, %v1240
    %v1243 = vxor.u32 %v1218, 2147483648
    %v1244 = vmul.f32 %v1243, 1.442695
    %v1245 = vpow.pop %v1244
    %v1246 = vadd.f32 %v1245, 1.0
    %v1247 = vrcp.pop %v1246
    %v1248 = vmul.f32 1.0, %v1247
    %v1249 = vtanh.pop %v1218
    %v1250 = vmul.f32 %v1248, %v1115
    %1252 = vrot.lane.b32.xlu0 %v1249, 64
    %v1253 = vpop.permute.xlu0 %1252
    %v1255 = vmul.f32 %v1248, %v1253
    %1257 = vrot.lane.b32.xlu0 %v1255, 32
    %v1258 = vpop.permute.xlu0 %1257
    %v1260 = vadd.f32 %v1250, %v1258
    %v1261 = vtanh.pop %v1260
    %1263 = vrot.lane.b32.xlu0 %v1261, 64
    %v1264 = vpop.permute.xlu0 %1263
    %v1266 = vmul.f32 %v1248, %v1264
    %v1267 = vsub.f32 %v1242, %v1101
    %v1268 = vmul.f32 %v1109, %v1267
    %v1269 = vadd.f32 %v1101, %v1268
    %v1270 = vsub.f32 %v1236, %v1104
    %v1271 = vmul.f32 %v1109, %v1270
    %v1272 = vadd.f32 %v1104, %v1271
    %v1273 = vsub.f32 %v1266, %v1112
    %v1274 = vmul.f32 %v1098, %v1273
    %v1275 = vadd.f32 %v1112, %v1274
    %v1276 = vsub.f32 %v1260, %v1115
    %v1277 = vmul.f32 %v1098, %v1276
    %v1278 = vadd.f32 %v1115, %v1277
    %v1279 = vmul.f32 %v1109, %v1269
    %1281 = vrot.lane.b32.xlu0 %v1279, 32
    %v1282 = vpop.permute.xlu0 %1281
    %s1284 = scalar_lea.vmem [#allocation7], 40
    %1285 = vst.msk [vmem:[%s1284] sm:$0xff] %vm113, %v1282
    %v1286 = vmul.f32 %v1098, %v1275
    %1288 = vrot.lane.b32.xlu0 %v1286, 32
    %v1289 = vpop.permute.xlu0 %1288
    %s1291 = scalar_lea.vmem [#allocation8], 32
    %1292 = vst.msk [vmem:[%s1291] sm:$0xff] %vm113, %v1289
    %s1293 = scalar_lea.vmem [#allocation2], 48
    %v1294 = vld [vmem:[%s1293] sm:$0xff]
    %s1295 = scalar_lea.vmem [#allocation3], 24
    %v1296 = vld [vmem:[%s1295] sm:$0xff]
    %1298 = vrot.lane.b32.xlu0 %v1269, 32
    %v1299 = vpop.permute.xlu0 %1298
    %1302 = vrot.lane.b32.xlu0 %v1275, 64
    %v1303 = vpop.permute.xlu0 %1302
    %v1305 = vsel %vm113, %v1299, %v1303
    %v1307 = vsel %vm252, %v1305, 0
    %1309 = vmatprep.subr.mxu0 0.0
    %1310 = vmatpush1.msra.mxu0 0.0
    %1311 = vmatprep.subr.mxu0 0.0
    %1312 = vmatpush1.msra.mxu0 0.0
    %1313 = vmatprep.subr.mxu0 0.0
    %1314 = vmatpush1.msra.mxu0 0.0
    %1315 = vmatprep.subr.mxu0 0.0
    %1316 = vmatpush1.msra.mxu0 0.0
    %1317 = vmatprep.subr.mxu0 0.0
    %1318 = vmatpush1.msra.mxu0 0.0
    %1319 = vmatprep.subr.mxu0 0.0
    %1320 = vmatpush1.msra.mxu0 0.0
    %1321 = vmatprep.subr.mxu0 0.0
    %1322 = vmatpush1.msra.mxu0 0.0
    %1323 = vmatprep.subr.mxu0 0.0
    %1324 = vmatpush1.msra.mxu0 0.0
    %1325 = vmatprep.subr.mxu0 %v247
    %1326 = vmatpush1.msra.mxu0 %v246
    %1327 = vmatprep.subr.mxu0 %v245
    %1328 = vmatpush1.msra.mxu0 %v244
    %1329 = vmatprep.subr.mxu0 %v243
    %1330 = vmatpush1.msra.mxu0 %v242
    %1331 = vmatprep.subr.mxu0 %v241
    %1332 = vmatpush1.msra.mxu0 %v240
    %1333 = vmatprep.subr.mxu0 %v239
    %1334 = vmatpush1.msra.mxu0 %v238
    %1335 = vmatprep.subr.mxu0 %v237
    %1336 = vmatpush1.msra.mxu0 %v236
    %1337 = vmatprep.subr.mxu0 %v235
    %1338 = vmatpush1.msra.mxu0 %v234
    %1339 = vmatprep.subr.mxu0 %v233
    %1340 = vmatpush1.msra.mxu0 %v232
    %1341 = vmatprep.subr.mxu0 0.0
    %1342 = vmatpush2.msra.mxu0 0.0
    %1343 = vmatprep.subr.mxu0 0.0
    %1344 = vmatpush2.msra.mxu0 0.0
    %1345 = vmatprep.subr.mxu0 0.0
    %1346 = vmatpush2.msra.mxu0 0.0
    %1347 = vmatprep.subr.mxu0 0.0
    %1348 = vmatpush2.msra.mxu0 0.0
    %1349 = vmatprep.subr.mxu0 0.0
    %1350 = vmatpush2.msra.mxu0 0.0
    %1351 = vmatprep.subr.mxu0 0.0
    %1352 = vmatpush2.msra.mxu0 0.0
    %1353 = vmatprep.subr.mxu0 0.0
    %1354 = vmatpush2.msra.mxu0 0.0
    %1355 = vmatprep.subr.mxu0 0.0
    %1356 = vmatpush2.msra.mxu0 0.0
    %1357 = vmatprep.subr.mxu0 0.0
    %1358 = vmatpush2.msra.mxu0 0.0
    %1359 = vmatprep.subr.mxu0 0.0
    %1360 = vmatpush2.msra.mxu0 0.0
    %1361 = vmatprep.subr.mxu0 0.0
    %1362 = vmatpush2.msra.mxu0 0.0
    %1363 = vmatprep.subr.mxu0 0.0
    %1364 = vmatpush2.msra.mxu0 0.0
    %1365 = vmatprep.subr.mxu0 0.0
    %1366 = vmatpush2.msra.mxu0 0.0
    %1367 = vmatprep.subr.mxu0 0.0
    %1368 = vmatpush2.msra.mxu0 0.0
    %1369 = vmatprep.subr.mxu0 0.0
    %1370 = vmatpush2.msra.mxu0 0.0
    %1371 = vmatprep.subr.mxu0 0.0
    %1372 = vmatpush2.msra.mxu0 0.0
    %1373 = vmatprep.mubr.f32.mxu0 0.0
    %1374 = vmatmul.mubr.f32.gmra.mxu0 %v1307
    %v1375 = vpop.f32.mrf.mxu0
    %v1376 = vadd.f32 0.0, %v1375
    %v1377 = vpop.f32.mrf.mxu0
    %v1378 = vadd.f32 0.0, %v1377
    %1379 = vdwg.mxu0
    %v1380 = vadd.f32 %v1294, %v1376
    %v1381 = vadd.f32 %v1296, %v1378
    %v1382 = vxor.u32 %v1380, 2147483648
    %v1383 = vmul.f32 %v1382, 1.442695
    %v1384 = vpow.pop %v1383
    %v1385 = vadd.f32 %v1384, 1.0
    %v1386 = vrcp.pop %v1385
    %v1387 = vmul.f32 1.0, %v1386
    %v1388 = vtanh.pop %v1380
    %v1389 = vmul.f32 %v1387, %v1272
    %1391 = vrot.lane.b32.xlu0 %v1388, 64
    %v1392 = vpop.permute.xlu0 %1391
    %v1394 = vmul.f32 %v1387, %v1392
    %1396 = vrot.lane.b32.xlu0 %v1394, 32
    %v1397 = vpop.permute.xlu0 %1396
    %v1399 = vadd.f32 %v1389, %v1397
    %v1400 = vtanh.pop %v1399
    %1402 = vrot.lane.b32.xlu0 %v1400, 64
    %v1403 = vpop.permute.xlu0 %1402
    %v1405 = vmul.f32 %v1387, %v1403
    %v1406 = vxor.u32 %v1381, 2147483648
    %v1407 = vmul.f32 %v1406, 1.442695
    %v1408 = vpow.pop %v1407
    %v1409 = vadd.f32 %v1408, 1.0
    %v1410 = vrcp.pop %v1409
    %v1411 = vmul.f32 1.0, %v1410
    %v1412 = vtanh.pop %v1381
    %v1413 = vmul.f32 %v1411, %v1278
    %1415 = vrot.lane.b32.xlu0 %v1412, 64
    %v1416 = vpop.permute.xlu0 %1415
    %v1418 = vmul.f32 %v1411, %v1416
    %1420 = vrot.lane.b32.xlu0 %v1418, 32
    %v1421 = vpop.permute.xlu0 %1420
    %v1423 = vadd.f32 %v1413, %v1421
    %v1424 = vtanh.pop %v1423
    %1426 = vrot.lane.b32.xlu0 %v1424, 64
    %v1427 = vpop.permute.xlu0 %1426
    %v1429 = vmul.f32 %v1411, %v1427
    %v1430 = vsub.f32 %v1405, %v1269
    %v1431 = vmul.f32 %v930, %v1430
    %v1432 = vadd.f32 %v1269, %v1431
    %v1433 = vsub.f32 %v1399, %v1272
    %v1434 = vmul.f32 %v930, %v1433
    %v1435 = vadd.f32 %v1272, %v1434
    %v1436 = vsub.f32 %v1429, %v1275
    %v1437 = vmul.f32 %v919, %v1436
    %v1438 = vadd.f32 %v1275, %v1437
    %v1439 = vsub.f32 %v1423, %v1278
    %v1440 = vmul.f32 %v919, %v1439
    %v1441 = vadd.f32 %v1278, %v1440
    %v1442 = vmul.f32 %v930, %v1432
    %1444 = vrot.lane.b32.xlu0 %v1442, 32
    %v1445 = vpop.permute.xlu0 %1444
    %s1447 = scalar_lea.vmem [#allocation7], 48
    %1448 = vst.msk [vmem:[%s1447] sm:$0xff] %vm113, %v1445
    %v1449 = vmul.f32 %v919, %v1438
    %1451 = vrot.lane.b32.xlu0 %v1449, 32
    %v1452 = vpop.permute.xlu0 %1451
    %s1454 = scalar_lea.vmem [#allocation8], 24
    %1455 = vst.msk [vmem:[%s1454] sm:$0xff] %vm113, %v1452
    %s1456 = scalar_lea.vmem [#allocation2], 56
    %v1457 = vld [vmem:[%s1456] sm:$0xff]
    %s1458 = scalar_lea.vmem [#allocation3], 16
    %v1459 = vld [vmem:[%s1458] sm:$0xff]
    %1461 = vrot.lane.b32.xlu0 %v1432, 32
    %v1462 = vpop.permute.xlu0 %1461
    %1465 = vrot.lane.b32.xlu0 %v1438, 64
    %v1466 = vpop.permute.xlu0 %1465
    %v1468 = vsel %vm113, %v1462, %v1466
    %v1470 = vsel %vm252, %v1468, 0
    %1472 = vmatprep.subr.mxu0 0.0
    %1473 = vmatpush1.msra.mxu0 0.0
    %1474 = vmatprep.subr.mxu0 0.0
    %1475 = vmatpush1.msra.mxu0 0.0
    %1476 = vmatprep.subr.mxu0 0.0
    %1477 = vmatpush1.msra.mxu0 0.0
    %1478 = vmatprep.subr.mxu0 0.0
    %1479 = vmatpush1.msra.mxu0 0.0
    %1480 = vmatprep.subr.mxu0 0.0
    %1481 = vmatpush1.msra.mxu0 0.0
    %1482 = vmatprep.subr.mxu0 0.0
    %1483 = vmatpush1.msra.mxu0 0.0
    %1484 = vmatprep.subr.mxu0 0.0
    %1485 = vmatpush1.msra.mxu0 0.0
    %1486 = vmatprep.subr.mxu0 0.0
    %1487 = vmatpush1.msra.mxu0 0.0
    %1488 = vmatprep.subr.mxu0 %v247
    %1489 = vmatpush1.msra.mxu0 %v246
    %1490 = vmatprep.subr.mxu0 %v245
    %1491 = vmatpush1.msra.mxu0 %v244
    %1492 = vmatprep.subr.mxu0 %v243
    %1493 = vmatpush1.msra.mxu0 %v242
    %1494 = vmatprep.subr.mxu0 %v241
    %1495 = vmatpush1.msra.mxu0 %v240
    %1496 = vmatprep.subr.mxu0 %v239
    %1497 = vmatpush1.msra.mxu0 %v238
    %1498 = vmatprep.subr.mxu0 %v237
    %1499 = vmatpush1.msra.mxu0 %v236
    %1500 = vmatprep.subr.mxu0 %v235
    %1501 = vmatpush1.msra.mxu0 %v234
    %1502 = vmatprep.subr.mxu0 %v233
    %1503 = vmatpush1.msra.mxu0 %v232
    %1504 = vmatprep.subr.mxu0 0.0
    %1505 = vmatpush2.msra.mxu0 0.0
    %1506 = vmatprep.subr.mxu0 0.0
    %1507 = vmatpush2.msra.mxu0 0.0
    %1508 = vmatprep.subr.mxu0 0.0
    %1509 = vmatpush2.msra.mxu0 0.0
    %1510 = vmatprep.subr.mxu0 0.0
    %1511 = vmatpush2.msra.mxu0 0.0
    %1512 = vmatprep.subr.mxu0 0.0
    %1513 = vmatpush2.msra.mxu0 0.0
    %1514 = vmatprep.subr.mxu0 0.0
    %1515 = vmatpush2.msra.mxu0 0.0
    %1516 = vmatprep.subr.mxu0 0.0
    %1517 = vmatpush2.msra.mxu0 0.0
    %1518 = vmatprep.subr.mxu0 0.0
    %1519 = vmatpush2.msra.mxu0 0.0
    %1520 = vmatprep.subr.mxu0 0.0
    %1521 = vmatpush2.msra.mxu0 0.0
    %1522 = vmatprep.subr.mxu0 0.0
    %1523 = vmatpush2.msra.mxu0 0.0
    %1524 = vmatprep.subr.mxu0 0.0
    %1525 = vmatpush2.msra.mxu0 0.0
    %1526 = vmatprep.subr.mxu0 0.0
    %1527 = vmatpush2.msra.mxu0 0.0
    %1528 = vmatprep.subr.mxu0 0.0
    %1529 = vmatpush2.msra.mxu0 0.0
    %1530 = vmatprep.subr.mxu0 0.0
    %1531 = vmatpush2.msra.mxu0 0.0
    %1532 = vmatprep.subr.mxu0 0.0
    %1533 = vmatpush2.msra.mxu0 0.0
    %1534 = vmatprep.subr.mxu0 0.0
    %1535 = vmatpush2.msra.mxu0 0.0
    %1536 = vmatprep.mubr.f32.mxu0 0.0
    %1537 = vmatmul.mubr.f32.gmra.mxu0 %v1470
    %v1538 = vpop.f32.mrf.mxu0
    %v1539 = vadd.f32 0.0, %v1538
    %v1540 = vpop.f32.mrf.mxu0
    %v1541 = vadd.f32 0.0, %v1540
    %1542 = vdwg.mxu0
    %v1543 = vadd.f32 %v1457, %v1539
    %v1544 = vadd.f32 %v1459, %v1541
    %v1545 = vxor.u32 %v1543, 2147483648
    %v1546 = vmul.f32 %v1545, 1.442695
    %v1547 = vpow.pop %v1546
    %v1548 = vadd.f32 %v1547, 1.0
    %v1549 = vrcp.pop %v1548
    %v1550 = vmul.f32 1.0, %v1549
    %v1551 = vtanh.pop %v1543
    %v1552 = vmul.f32 %v1550, %v1435
    %1554 = vrot.lane.b32.xlu0 %v1551, 64
    %v1555 = vpop.permute.xlu0 %1554
    %v1557 = vmul.f32 %v1550, %v1555
    %1559 = vrot.lane.b32.xlu0 %v1557, 32
    %v1560 = vpop.permute.xlu0 %1559
    %v1562 = vadd.f32 %v1552, %v1560
    %v1563 = vtanh.pop %v1562
    %1565 = vrot.lane.b32.xlu0 %v1563, 64
    %v1566 = vpop.permute.xlu0 %1565
    %v1568 = vmul.f32 %v1550, %v1566
    %v1569 = vxor.u32 %v1544, 2147483648
    %v1570 = vmul.f32 %v1569, 1.442695
    %v1571 = vpow.pop %v1570
    %v1572 = vadd.f32 %v1571, 1.0
    %v1573 = vrcp.pop %v1572
    %v1574 = vmul.f32 1.0, %v1573
    %v1575 = vtanh.pop %v1544
    %v1576 = vmul.f32 %v1574, %v1441
    %1578 = vrot.lane.b32.xlu0 %v1575, 64
    %v1579 = vpop.permute.xlu0 %1578
    %v1581 = vmul.f32 %v1574, %v1579
    %1583 = vrot.lane.b32.xlu0 %v1581, 32
    %v1584 = vpop.permute.xlu0 %1583
    %v1586 = vadd.f32 %v1576, %v1584
    %v1587 = vtanh.pop %v1586
    %1589 = vrot.lane.b32.xlu0 %v1587, 64
    %v1590 = vpop.permute.xlu0 %1589
    %v1592 = vmul.f32 %v1574, %v1590
    %v1593 = vsub.f32 %v1568, %v1432
    %v1594 = vmul.f32 %v751, %v1593
    %v1595 = vadd.f32 %v1432, %v1594
    %v1596 = vsub.f32 %v1562, %v1435
    %v1597 = vmul.f32 %v751, %v1596
    %v1598 = vadd.f32 %v1435, %v1597
    %v1599 = vsub.f32 %v1592, %v1438
    %v1600 = vmul.f32 %v740, %v1599
    %v1601 = vadd.f32 %v1438, %v1600
    %v1602 = vsub.f32 %v1586, %v1441
    %v1603 = vmul.f32 %v740, %v1602
    %v1604 = vadd.f32 %v1441, %v1603
    %v1605 = vmul.f32 %v751, %v1595
    %1607 = vrot.lane.b32.xlu0 %v1605, 32
    %v1608 = vpop.permute.xlu0 %1607
    %s1610 = scalar_lea.vmem [#allocation7], 56
    %1611 = vst.msk [vmem:[%s1610] sm:$0xff] %vm113, %v1608
    %v1612 = vmul.f32 %v740, %v1601
    %1614 = vrot.lane.b32.xlu0 %v1612, 32
    %v1615 = vpop.permute.xlu0 %1614
    %s1617 = scalar_lea.vmem [#allocation8], 16
    %1618 = vst.msk [vmem:[%s1617] sm:$0xff] %vm113, %v1615
    %s1619 = scalar_lea.vmem [#allocation2], 64
    %v1620 = vld [vmem:[%s1619] sm:$0xff]
    %s1621 = scalar_lea.vmem [#allocation3], 8
    %v1622 = vld [vmem:[%s1621] sm:$0xff]
    %1624 = vrot.lane.b32.xlu0 %v1595, 32
    %v1625 = vpop.permute.xlu0 %1624
    %1628 = vrot.lane.b32.xlu0 %v1601, 64
    %v1629 = vpop.permute.xlu0 %1628
    %v1631 = vsel %vm113, %v1625, %v1629
    %v1633 = vsel %vm252, %v1631, 0
    %1635 = vmatprep.subr.mxu0 0.0
    %1636 = vmatpush1.msra.mxu0 0.0
    %1637 = vmatprep.subr.mxu0 0.0
    %1638 = vmatpush1.msra.mxu0 0.0
    %1639 = vmatprep.subr.mxu0 0.0
    %1640 = vmatpush1.msra.mxu0 0.0
    %1641 = vmatprep.subr.mxu0 0.0
    %1642 = vmatpush1.msra.mxu0 0.0
    %1643 = vmatprep.subr.mxu0 0.0
    %1644 = vmatpush1.msra.mxu0 0.0
    %1645 = vmatprep.subr.mxu0 0.0
    %1646 = vmatpush1.msra.mxu0 0.0
    %1647 = vmatprep.subr.mxu0 0.0
    %1648 = vmatpush1.msra.mxu0 0.0
    %1649 = vmatprep.subr.mxu0 0.0
    %1650 = vmatpush1.msra.mxu0 0.0
    %1651 = vmatprep.subr.mxu0 %v247
    %1652 = vmatpush1.msra.mxu0 %v246
    %1653 = vmatprep.subr.mxu0 %v245
    %1654 = vmatpush1.msra.mxu0 %v244
    %1655 = vmatprep.subr.mxu0 %v243
    %1656 = vmatpush1.msra.mxu0 %v242
    %1657 = vmatprep.subr.mxu0 %v241
    %1658 = vmatpush1.msra.mxu0 %v240
    %1659 = vmatprep.subr.mxu0 %v239
    %1660 = vmatpush1.msra.mxu0 %v238
    %1661 = vmatprep.subr.mxu0 %v237
    %1662 = vmatpush1.msra.mxu0 %v236
    %1663 = vmatprep.subr.mxu0 %v235
    %1664 = vmatpush1.msra.mxu0 %v234
    %1665 = vmatprep.subr.mxu0 %v233
    %1666 = vmatpush1.msra.mxu0 %v232
    %1667 = vmatprep.subr.mxu0 0.0
    %1668 = vmatpush2.msra.mxu0 0.0
    %1669 = vmatprep.subr.mxu0 0.0
    %1670 = vmatpush2.msra.mxu0 0.0
    %1671 = vmatprep.subr.mxu0 0.0
    %1672 = vmatpush2.msra.mxu0 0.0
    %1673 = vmatprep.subr.mxu0 0.0
    %1674 = vmatpush2.msra.mxu0 0.0
    %1675 = vmatprep.subr.mxu0 0.0
    %1676 = vmatpush2.msra.mxu0 0.0
    %1677 = vmatprep.subr.mxu0 0.0
    %1678 = vmatpush2.msra.mxu0 0.0
    %1679 = vmatprep.subr.mxu0 0.0
    %1680 = vmatpush2.msra.mxu0 0.0
    %1681 = vmatprep.subr.mxu0 0.0
    %1682 = vmatpush2.msra.mxu0 0.0
    %1683 = vmatprep.subr.mxu0 0.0
    %1684 = vmatpush2.msra.mxu0 0.0
    %1685 = vmatprep.subr.mxu0 0.0
    %1686 = vmatpush2.msra.mxu0 0.0
    %1687 = vmatprep.subr.mxu0 0.0
    %1688 = vmatpush2.msra.mxu0 0.0
    %1689 = vmatprep.subr.mxu0 0.0
    %1690 = vmatpush2.msra.mxu0 0.0
    %1691 = vmatprep.subr.mxu0 0.0
    %1692 = vmatpush2.msra.mxu0 0.0
    %1693 = vmatprep.subr.mxu0 0.0
    %1694 = vmatpush2.msra.mxu0 0.0
    %1695 = vmatprep.subr.mxu0 0.0
    %1696 = vmatpush2.msra.mxu0 0.0
    %1697 = vmatprep.subr.mxu0 0.0
    %1698 = vmatpush2.msra.mxu0 0.0
    %1699 = vmatprep.mubr.f32.mxu0 0.0
    %1700 = vmatmul.mubr.f32.gmra.mxu0 %v1633
    %v1701 = vpop.f32.mrf.mxu0
    %v1702 = vadd.f32 0.0, %v1701
    %v1703 = vpop.f32.mrf.mxu0
    %v1704 = vadd.f32 0.0, %v1703
    %1705 = vdwg.mxu0
    %v1706 = vadd.f32 %v1620, %v1702
    %v1707 = vadd.f32 %v1622, %v1704
    %v1708 = vxor.u32 %v1706, 2147483648
    %v1709 = vmul.f32 %v1708, 1.442695
    %v1710 = vpow.pop %v1709
    %v1711 = vadd.f32 %v1710, 1.0
    %v1712 = vrcp.pop %v1711
    %v1713 = vmul.f32 1.0, %v1712
    %v1714 = vtanh.pop %v1706
    %v1715 = vmul.f32 %v1713, %v1598
    %1717 = vrot.lane.b32.xlu0 %v1714, 64
    %v1718 = vpop.permute.xlu0 %1717
    %v1720 = vmul.f32 %v1713, %v1718
    %1722 = vrot.lane.b32.xlu0 %v1720, 32
    %v1723 = vpop.permute.xlu0 %1722
    %v1725 = vadd.f32 %v1715, %v1723
    %v1726 = vtanh.pop %v1725
    %1728 = vrot.lane.b32.xlu0 %v1726, 64
    %v1729 = vpop.permute.xlu0 %1728
    %v1731 = vmul.f32 %v1713, %v1729
    %v1732 = vxor.u32 %v1707, 2147483648
    %v1733 = vmul.f32 %v1732, 1.442695
    %v1734 = vpow.pop %v1733
    %v1735 = vadd.f32 %v1734, 1.0
    %v1736 = vrcp.pop %v1735
    %v1737 = vmul.f32 1.0, %v1736
    %v1738 = vtanh.pop %v1707
    %v1739 = vmul.f32 %v1737, %v1604
    %1741 = vrot.lane.b32.xlu0 %v1738, 64
    %v1742 = vpop.permute.xlu0 %1741
    %v1744 = vmul.f32 %v1737, %v1742
    %1746 = vrot.lane.b32.xlu0 %v1744, 32
    %v1747 = vpop.permute.xlu0 %1746
    %v1749 = vadd.f32 %v1739, %v1747
    %v1750 = vtanh.pop %v1749
    %1752 = vrot.lane.b32.xlu0 %v1750, 64
    %v1753 = vpop.permute.xlu0 %1752
    %v1755 = vmul.f32 %v1737, %v1753
    %v1756 = vsub.f32 %v1731, %v1595
    %v1757 = vmul.f32 %v572, %v1756
    %v1758 = vadd.f32 %v1595, %v1757
    %v1759 = vsub.f32 %v1725, %v1598
    %v1760 = vmul.f32 %v572, %v1759
    %v1761 = vadd.f32 %v1598, %v1760
    %v1762 = vsub.f32 %v1755, %v1601
    %v1763 = vmul.f32 %v561, %v1762
    %v1764 = vadd.f32 %v1601, %v1763
    %v1765 = vsub.f32 %v1749, %v1604
    %v1766 = vmul.f32 %v561, %v1765
    %v1767 = vadd.f32 %v1604, %v1766
    %v1768 = vmul.f32 %v572, %v1758
    %1770 = vrot.lane.b32.xlu0 %v1768, 32
    %v1771 = vpop.permute.xlu0 %1770
    %s1773 = scalar_lea.vmem [#allocation7], 64
    %1774 = vst.msk [vmem:[%s1773] sm:$0xff] %vm113, %v1771
    %v1775 = vmul.f32 %v561, %v1764
    %1777 = vrot.lane.b32.xlu0 %v1775, 32
    %v1778 = vpop.permute.xlu0 %1777
    %s1780 = scalar_lea.vmem [#allocation8], 8
    %1781 = vst.msk [vmem:[%s1780] sm:$0xff] %vm113, %v1778
    %s1782 = scalar_lea.vmem [#allocation2], 72
    %v1783 = vld [vmem:[%s1782] sm:$0xff]
    %v1784 = vld [vmem:[#allocation3] sm:$0xff]
    %1786 = vrot.lane.b32.xlu0 %v1758, 32
    %v1787 = vpop.permute.xlu0 %1786
    %1790 = vrot.lane.b32.xlu0 %v1764, 64
    %v1791 = vpop.permute.xlu0 %1790
    %v1793 = vsel %vm113, %v1787, %v1791
    %v1795 = vsel %vm252, %v1793, 0
    %1797 = vmatprep.subr.mxu0 0.0
    %1798 = vmatpush1.msra.mxu0 0.0
    %1799 = vmatprep.subr.mxu0 0.0
    %1800 = vmatpush1.msra.mxu0 0.0
    %1801 = vmatprep.subr.mxu0 0.0
    %1802 = vmatpush1.msra.mxu0 0.0
    %1803 = vmatprep.subr.mxu0 0.0
    %1804 = vmatpush1.msra.mxu0 0.0
    %1805 = vmatprep.subr.mxu0 0.0
    %1806 = vmatpush1.msra.mxu0 0.0
    %1807 = vmatprep.subr.mxu0 0.0
    %1808 = vmatpush1.msra.mxu0 0.0
    %1809 = vmatprep.subr.mxu0 0.0
    %1810 = vmatpush1.msra.mxu0 0.0
    %1811 = vmatprep.subr.mxu0 0.0
    %1812 = vmatpush1.msra.mxu0 0.0
    %1813 = vmatprep.subr.mxu0 %v247
    %1814 = vmatpush1.msra.mxu0 %v246
    %1815 = vmatprep.subr.mxu0 %v245
    %1816 = vmatpush1.msra.mxu0 %v244
    %1817 = vmatprep.subr.mxu0 %v243
    %1818 = vmatpush1.msra.mxu0 %v242
    %1819 = vmatprep.subr.mxu0 %v241
    %1820 = vmatpush1.msra.mxu0 %v240
    %1821 = vmatprep.subr.mxu0 %v239
    %1822 = vmatpush1.msra.mxu0 %v238
    %1823 = vmatprep.subr.mxu0 %v237
    %1824 = vmatpush1.msra.mxu0 %v236
    %1825 = vmatprep.subr.mxu0 %v235
    %1826 = vmatpush1.msra.mxu0 %v234
    %1827 = vmatprep.subr.mxu0 %v233
    %1828 = vmatpush1.msra.mxu0 %v232
    %1829 = vmatprep.subr.mxu0 0.0
    %1830 = vmatpush2.msra.mxu0 0.0
    %1831 = vmatprep.subr.mxu0 0.0
    %1832 = vmatpush2.msra.mxu0 0.0
    %1833 = vmatprep.subr.mxu0 0.0
    %1834 = vmatpush2.msra.mxu0 0.0
    %1835 = vmatprep.subr.mxu0 0.0
    %1836 = vmatpush2.msra.mxu0 0.0
    %1837 = vmatprep.subr.mxu0 0.0
    %1838 = vmatpush2.msra.mxu0 0.0
    %1839 = vmatprep.subr.mxu0 0.0
    %1840 = vmatpush2.msra.mxu0 0.0
    %1841 = vmatprep.subr.mxu0 0.0
    %1842 = vmatpush2.msra.mxu0 0.0
    %1843 = vmatprep.subr.mxu0 0.0
    %1844 = vmatpush2.msra.mxu0 0.0
    %1845 = vmatprep.subr.mxu0 0.0
    %1846 = vmatpush2.msra.mxu0 0.0
    %1847 = vmatprep.subr.mxu0 0.0
    %1848 = vmatpush2.msra.mxu0 0.0
    %1849 = vmatprep.subr.mxu0 0.0
    %1850 = vmatpush2.msra.mxu0 0.0
    %1851 = vmatprep.subr.mxu0 0.0
    %1852 = vmatpush2.msra.mxu0 0.0
    %1853 = vmatprep.subr.mxu0 0.0
    %1854 = vmatpush2.msra.mxu0 0.0
    %1855 = vmatprep.subr.mxu0 0.0
    %1856 = vmatpush2.msra.mxu0 0.0
    %1857 = vmatprep.subr.mxu0 0.0
    %1858 = vmatpush2.msra.mxu0 0.0
    %1859 = vmatprep.subr.mxu0 0.0
    %1860 = vmatpush2.msra.mxu0 0.0
    %1861 = vmatprep.mubr.f32.mxu0 0.0
    %1862 = vmatmul.mubr.f32.gmra.mxu0 %v1795
    %v1863 = vpop.f32.mrf.mxu0
    %v1864 = vadd.f32 0.0, %v1863
    %v1865 = vpop.f32.mrf.mxu0
    %v1866 = vadd.f32 0.0, %v1865
    %1867 = vdwg.mxu0
    %v1868 = vadd.f32 %v1783, %v1864
    %v1869 = vadd.f32 %v1784, %v1866
    %v1870 = vxor.u32 %v1868, 2147483648
    %v1871 = vmul.f32 %v1870, 1.442695
    %v1872 = vpow.pop %v1871
    %v1873 = vadd.f32 %v1872, 1.0
    %v1874 = vrcp.pop %v1873
    %v1875 = vmul.f32 1.0, %v1874
    %v1876 = vtanh.pop %v1868
    %v1877 = vmul.f32 %v1875, %v1761
    %1879 = vrot.lane.b32.xlu0 %v1876, 64
    %v1880 = vpop.permute.xlu0 %1879
    %v1882 = vmul.f32 %v1875, %v1880
    %1884 = vrot.lane.b32.xlu0 %v1882, 32
    %v1885 = vpop.permute.xlu0 %1884
    %v1887 = vadd.f32 %v1877, %v1885
    %v1888 = vtanh.pop %v1887
    %1890 = vrot.lane.b32.xlu0 %v1888, 64
    %v1891 = vpop.permute.xlu0 %1890
    %v1893 = vmul.f32 %v1875, %v1891
    %v1894 = vxor.u32 %v1869, 2147483648
    %v1895 = vmul.f32 %v1894, 1.442695
    %v1896 = vpow.pop %v1895
    %v1897 = vadd.f32 %v1896, 1.0
    %v1898 = vrcp.pop %v1897
    %v1899 = vmul.f32 1.0, %v1898
    %v1900 = vtanh.pop %v1869
    %v1901 = vmul.f32 %v1899, %v1767
    %1903 = vrot.lane.b32.xlu0 %v1900, 64
    %v1904 = vpop.permute.xlu0 %1903
    %v1906 = vmul.f32 %v1899, %v1904
    %1908 = vrot.lane.b32.xlu0 %v1906, 32
    %v1909 = vpop.permute.xlu0 %1908
    %v1911 = vadd.f32 %v1901, %v1909
    %v1912 = vtanh.pop %v1911
    %1914 = vrot.lane.b32.xlu0 %v1912, 64
    %v1915 = vpop.permute.xlu0 %1914
    %v1917 = vmul.f32 %v1899, %v1915
    %v1918 = vsub.f32 %v1893, %v1758
    %v1919 = vmul.f32 %v395, %v1918
    %v1920 = vadd.f32 %v1758, %v1919
    %v1921 = vsub.f32 %v1887, %v1761
    %v1922 = vmul.f32 %v395, %v1921
    %v1923 = vadd.f32 %v1761, %v1922
    %v1924 = vsub.f32 %v1917, %v1764
    %v1925 = vmul.f32 %v386, %v1924
    %v1926 = vadd.f32 %v1764, %v1925
    %v1927 = vsub.f32 %v1911, %v1767
    %v1928 = vmul.f32 %v386, %v1927
    %v1929 = vadd.f32 %v1767, %v1928
    %v1930 = vmul.f32 %v395, %v1920
    %1932 = vrot.lane.b32.xlu0 %v1930, 32
    %v1933 = vpop.permute.xlu0 %1932
    %s1935 = scalar_lea.vmem [#allocation7], 72
    %1936 = vst.msk [vmem:[%s1935] sm:$0xff] %vm113, %v1933
    %v1937 = vmul.f32 %v386, %v1926
    %1939 = vrot.lane.b32.xlu0 %v1937, 32
    %v1940 = vpop.permute.xlu0 %1939
    %1942 = vst.msk [vmem:[#allocation8] sm:$0xff] %vm113, %v1940
    %1944 = vrot.lane.b32.xlu0 %v1920, 32
    %v1945 = vpop.permute.xlu0 %1944
    %1947 = vst.msk [vmem:[#allocation10] sm:$0xff] %vm113, %v1945
    %1949 = vrot.lane.b32.xlu0 %v1926, 32
    %v1950 = vpop.permute.xlu0 %1949
    %s1952 = scalar_lea.vmem [#allocation10], 8
    %1953 = vst.msk [vmem:[%s1952] sm:$0xff] %vm113, %v1950
    %1955 = vrot.lane.b32.xlu0 %v1923, 96
    %v1956 = vpop.permute.xlu0 %1955
    %1958 = vst.msk [vmem:[#allocation11] sm:$0xff] %vm113, %v1956
    %1960 = vrot.lane.b32.xlu0 %v1929, 96
    %v1961 = vpop.permute.xlu0 %1960
    %s1963 = scalar_lea.vmem [#allocation11], 8
    %1964 = vst.msk [vmem:[%s1963] sm:$0xff] %vm113, %v1961
    // Predicated region
    $region26: #{tpu_custom_call.1} parent=1 // pred_check
      _
    $region27: #{tpu_custom_call.1} parent=1 // pred_check_branch
      %1966 = sbr.rel (0) target = $region29
    $region28: #{tpu_custom_call.1} parent=1 // pred_region
      %s1968 = ssub.s32 1280, 1280
      %1969 = vsyncadd [#allocation6], %s1968
      %s1970 = sshll.u32 [#allocation7], 4
      %s1971 = int_to_ptr.vmem [resolvable:$true] %s1970
      %1976 = dma.vmem_to_hbm [thread:$0]  %s1971, 1280, %s5, [#allocation6], 128, 128, 8
    $region29: #{tpu_custom_call.1} parent=1 // pred_fallthru
      _
    // Predicated region
    $region30: #{tpu_custom_call.1} parent=1 // pred_check
      _
    $region31: #{tpu_custom_call.1} parent=1 // pred_check_branch
      %1978 = sbr.rel (0) target = $region33
    $region32: #{tpu_custom_call.1} parent=1 // pred_region
      %s1980 = ssub.s32 1280, 1280
      %1981 = vsyncadd [#allocation9], %s1980
      %s1982 = sshll.u32 [#allocation8], 4
      %s1983 = int_to_ptr.vmem [resolvable:$true] %s1982
      %1988 = dma.vmem_to_hbm [thread:$0]  %s1983, 1280, %s6, [#allocation9], 128, 128, 8
    $region33: #{tpu_custom_call.1} parent=1 // pred_fallthru
      _
    // Predicated region
    $region34: #{tpu_custom_call.1} parent=1 // pred_check
      _
    $region35: #{tpu_custom_call.1} parent=1 // pred_check_branch
      %1990 = sbr.rel (0) target = $region37
    $region36: #{tpu_custom_call.1} parent=1 // pred_region
      %s1992 = ssub.s32 256, 256
      %1993 = vsyncadd [#allocation9], %s1992
      %s1994 = sshll.u32 [#allocation10], 4
      %s1995 = int_to_ptr.vmem [resolvable:$true] %s1994
      %2000 = dma.vmem_to_hbm [thread:$0]  %s1995, 256, %s7, [#allocation9], 128, 128, 8
    $region37: #{tpu_custom_call.1} parent=1 // pred_fallthru
      _
    // Predicated region
    $region38: #{tpu_custom_call.1} parent=1 // pred_check
      _
    $region39: #{tpu_custom_call.1} parent=1 // pred_check_branch
      %2002 = sbr.rel (0) target = $region41
    $region40: #{tpu_custom_call.1} parent=1 // pred_region
      %s2004 = ssub.s32 256, 256
      %2005 = vsyncadd [#allocation12], %s2004
      %s2006 = sshll.u32 [#allocation11], 4
      %s2007 = int_to_ptr.vmem [resolvable:$true] %s2006
      %2012 = dma.vmem_to_hbm [thread:$0]  %s2007, 256, %s8, [#allocation12], 128, 128, 8
    $region41: #{tpu_custom_call.1} parent=1 // pred_fallthru
      _
    // Predicated region
    $region42: #{tpu_custom_call.1} parent=1 // pred_check
      _
    $region43: #{tpu_custom_call.1} parent=1 // pred_check_branch
      %2014 = sbr.rel (0) target = $region45
    $region44: #{tpu_custom_call.1} parent=1 // pred_region
      %2015 = dma.done [#allocation6], 1280
    $region45: #{tpu_custom_call.1} parent=1 // pred_fallthru
      _
    // Predicated region
    $region46: #{tpu_custom_call.1} parent=1 // pred_check
      _
    $region47: #{tpu_custom_call.1} parent=1 // pred_check_branch
      %2017 = sbr.rel (0) target = $region49
    $region48: #{tpu_custom_call.1} parent=1 // pred_region
      %2018 = dma.done [#allocation9], 1280
    $region49: #{tpu_custom_call.1} parent=1 // pred_fallthru
      _
    // Predicated region
    $region50: #{tpu_custom_call.1} parent=1 // pred_check
      _
    $region51: #{tpu_custom_call.1} parent=1 // pred_check_branch
      %2020 = sbr.rel (0) target = $region53
    $region52: #{tpu_custom_call.1} parent=1 // pred_region
      %2021 = dma.done [#allocation9], 256
    $region53: #{tpu_custom_call.1} parent=1 // pred_fallthru
      _
    // Predicated region
    $region54: #{tpu_custom_call.1} parent=1 // pred_check
      _
    $region55: #{tpu_custom_call.1} parent=1 // pred_check_branch
      %2023 = sbr.rel (0) target = $region57
    $region56: #{tpu_custom_call.1} parent=1 // pred_region
      %2024 = dma.done [#allocation12], 256
    $region57: #{tpu_custom_call.1} parent=1 // pred_fallthru
      _
    %2025 = vsyncpa [#allocation5], 1
    %2026 = vsyncpa [#allocation6], 1
    %2027 = vsyncpa [#allocation9], 1
    %2028 = vsyncpa [#allocation12], 1

</llo_original>
